<compile_context>
chip_gen: v7x
topology: tpu7x:2x2x1
jax: 0.10.0
libtpu: 0.0.40
codegen_flags: <defaults>
</compile_context>

<pallas_src>
import functools

import jax
import jax.numpy as jnp
from jax.experimental import pallas as pl
from jax.experimental.pallas import tpu as pltpu

# ----------------------------- model hyper-params ---------------------------
IMG_SIZE = 16          # preprocessed image spatial size
PATCH = 8              # patch size  -> 2x2 = 4 patches
N_PATCH = (IMG_SIZE // PATCH) ** 2
WIDTH = 64             # transformer width (both towers)
HEADS = 2
HEAD_DIM = WIDTH // HEADS
MLP_DIM = 4 * WIDTH
N_LAYERS = 2
EMBED_DIM = 32         # joint embedding dim
VOCAB = 100
CTX_LEN = 8            # text context length
LN_EPS = 1e-5

CLIP_MEAN = (0.48145466, 0.4578275, 0.40821073)
CLIP_STD = (0.26862954, 0.26130258, 0.27577711)

assert HEADS * HEAD_DIM == WIDTH

_BLOCK_ORDER = ("ln1_g", "ln1_b", "w_qkv", "b_qkv", "w_o", "b_o",
                "ln2_g", "ln2_b", "w_fc", "b_fc", "w_proj", "b_proj")
_MATMUL_W = ("w_qkv", "w_o", "w_fc", "w_proj")

_COMPILER_PARAMS = pltpu.CompilerParams(vmem_limit_bytes=32 * 1024 * 1024)


# ------------------------------ small helpers -------------------------------
def _ln(x, g, b, eps=LN_EPS):
    """Row-wise LayerNorm in f32 (values, not refs)."""
    x = x.astype(jnp.float32)
    mu = jnp.mean(x, axis=-1, keepdims=True)
    var = jnp.mean((x - mu) ** 2, axis=-1, keepdims=True)
    y = (x - mu) * jax.lax.rsqrt(var + eps)
    return y * g.astype(jnp.float32) + b.astype(jnp.float32)


def _mm(a, w_bf16):
    """f32 activation x resident bf16 weight; f32 accumulation on the MXU."""
    return jnp.dot(a.astype(jnp.bfloat16), w_bf16,
                   preferred_element_type=jnp.float32)


# --------------------------- fused tower (traced body) -----------------------
def _run_tower(x, sel, blk, lnf_g, lnf_b, proj, *, T, causal):
    """Unrolled transformer blocks + fused (row-gather + LN + proj + L2) head.

    x    : (R, D) f32 value, R = B*T (batch folded into the rows).
    sel  : (B, R) f32 one-hot row selection (class-token / EOT rows).
    blk  : 12 stacked per-layer param refs (leading layer axis); matmul weights
           are bf16, vectors are (L, 1, dim) f32.  All resident in VMEM.
    """
    (ln1_g, ln1_b, w_qkv, b_qkv, w_o, b_o,
     ln2_g, ln2_b, w_fc, b_fc, w_proj, b_proj) = blk
    R = x.shape[0]
    L = w_qkv.shape[0]

    # Block-diagonal (per-sequence) additive mask, built once in-kernel from
    # iota (no mask DMA); causal inside each sequence for the text tower.
    r = jax.lax.broadcasted_iota(jnp.int32, (R, R), 0)
    c = jax.lax.broadcasted_iota(jnp.int32, (R, R), 1)
    same = None
    for b in range(R // T):
        lo, hi = b * T, (b + 1) * T
        m = (r >= lo) & (r < hi) & (c >= lo) & (c < hi)
        same = m if same is None else (same | m)
    valid = (same & (c <= r)) if causal else same
    neg = jnp.where(valid, jnp.float32(0.0), jnp.float32(-1e9))

    for l in range(L):            # layers unrolled; weights never leave VMEM
        # ---------------- multi-head self-attention ----------------
        y = _ln(x, ln1_g[l], ln1_b[l])
        qkv = _mm(y, w_qkv[l]) + b_qkv[l]                 # (R, 3D); scale folded into Q
        w_o_l = w_o[l]                                    # (D, D) bf16
        attn = jnp.zeros((R, WIDTH), jnp.float32)
        for h in range(HEADS):                            # heads stay in vregs
            q_h = qkv[:, h * HEAD_DIM:(h + 1) * HEAD_DIM]
            k_h = qkv[:, WIDTH + h * HEAD_DIM:WIDTH + (h + 1) * HEAD_DIM]
            v_h = qkv[:, 2 * WIDTH + h * HEAD_DIM:2 * WIDTH + (h + 1) * HEAD_DIM]
            s = jax.lax.dot_general(
                q_h.astype(jnp.bfloat16), k_h.astype(jnp.bfloat16),
                (((1,), (1,)), ((), ())),
                preferred_element_type=jnp.float32) + neg           # (R, R)
            s = s - jnp.max(s, axis=-1, keepdims=True)
            p = jnp.exp(s)
            p = p * pl.reciprocal(jnp.sum(p, axis=-1, keepdims=True), approx=True)
            head = jnp.dot(p.astype(jnp.bfloat16), v_h.astype(jnp.bfloat16),
                           preferred_element_type=jnp.float32)       # (R, hd)
            attn = attn + _mm(head, w_o_l[h * HEAD_DIM:(h + 1) * HEAD_DIM, :])
        x = x + attn + b_o[l]

        # ------------------------ MLP (QuickGELU) -------------------
        y = _ln(x, ln2_g[l], ln2_b[l])
        h1 = _mm(y, w_fc[l]) + b_fc[l]                                # (R, 4D)
        h1 = h1 * jax.nn.sigmoid(1.702 * h1)                          # f32 VPU/EUP
        x = x + _mm(h1, w_proj[l]) + b_proj[l]

    # ---- head: one-hot row gather (MXU) + LN + projection + L2 normalize ----
    feats = jnp.dot(sel, x, preferred_element_type=jnp.float32)       # (B, D)
    feats = _ln(feats, lnf_g, lnf_b)
    f = _mm(feats, proj)                                              # (B, E)
    inv_n = jax.lax.rsqrt(jnp.sum(f * f, axis=-1, keepdims=True) + 1e-12)
    return f * inv_n


# ------------------------------ Pallas kernels ------------------------------
def _image_kernel(patch_ref, w_eff_ref, stem_bias_ref,
                  lnpre_g_ref, lnpre_b_ref, sel_ref, *rest, T):
    """Image tower: stem matmul + ln_pre + N blocks + ln_post/proj/L2 head."""
    *blk, lnpost_g_ref, lnpost_b_ref, vproj_ref, out_ref = rest
    # Patch embedding for the whole batch in one aligned matmul; class-token
    # rows are zero rows of patch_ref and their content (class_emb + pos) comes
    # in via stem_bias.  CLIP pixel norm is pre-folded into w_eff / stem_bias.
    x0 = _mm(patch_ref[...], w_eff_ref[...]) + stem_bias_ref[...]      # (B*T, D)
    x = _ln(x0, lnpre_g_ref[...], lnpre_b_ref[...])
    out = _run_tower(x, sel_ref[...], blk,
                     lnpost_g_ref[...], lnpost_b_ref[...], vproj_ref[...],
                     T=T, causal=False)
    out_ref[...] = out.astype(out_ref.dtype)


def _text_kernel(x0_ref, sel_ref, *rest, T):
    """Text tower: N causal blocks + EOT gather + ln_final/proj/L2 head."""
    *blk, lnf_g_ref, lnf_b_ref, proj_ref, out_ref = rest
    x = x0_ref[...].astype(jnp.float32)
    out = _run_tower(x, sel_ref[...], blk,
                     lnf_g_ref[...], lnf_b_ref[...], proj_ref[...],
                     T=T, causal=True)
    out_ref[...] = out.astype(out_ref.dtype)


# --------------------------- wrappers / glue ---------------------------------
def _prep_blocks(blocks):
    """Stack per-layer params along a leading layer axis, fold the attention
    scale into the Q columns, and pre-cast matmul weights to bf16."""
    scale = HEAD_DIM ** -0.5
    stacked = {name: jnp.stack([blk[name] for blk in blocks], axis=0)
               for name in _BLOCK_ORDER}
    stacked["w_qkv"] = stacked["w_qkv"].at[:, :, :WIDTH].multiply(scale)
    stacked["b_qkv"] = stacked["b_qkv"].at[:, :WIDTH].multiply(scale)
    out = []
    for name in _BLOCK_ORDER:
        arr = stacked[name]
        if name in _MATMUL_W:
            out.append(arr.astype(jnp.bfloat16))                # (L, in, out)
        else:
            out.append(arr[:, None, :].astype(jnp.float32))     # (L, 1, dim)
    return out


def preprocess_images(images):
    """CLIP per-channel normalization (resize/crop omitted).  Plain jnp: XLA
    fuses this; a dedicated pallas_call would cost more than the work."""
    mean = jnp.asarray(CLIP_MEAN, jnp.float32).reshape(1, 3, 1, 1)
    inv_std = (1.0 / jnp.asarray(CLIP_STD, jnp.float32)).reshape(1, 3, 1, 1)
    return (images - mean) * inv_std


def encode_image(params, images):
    """images: raw NCHW in [0,1); CLIP normalization folded into patch weights."""
    B, C, H, W = images.shape
    g = H // PATCH
    Np = g * g
    T = Np + 1
    CPP = C * PATCH * PATCH

    # patchify (== stride-PATCH conv1 im2col) and insert a zero row at each
    # sequence's class-token position so the whole stem is one aligned matmul.
    patches = images.reshape(B, C, g, PATCH, g, PATCH)
    patches = patches.transpose(0, 2, 4, 1, 3, 5).reshape(B, Np, CPP)
    patches_aug = jnp.pad(patches, ((0, 0), (1, 0), (0, 0))).reshape(B * T, CPP)

    # fold (x - mean) * inv_std into the patch-embedding weights (trace time):
    #   (x - m)*s @ W  ==  x @ (s*W) + (-(m*s) @ W)
    mean_col = jnp.repeat(jnp.asarray(CLIP_MEAN, jnp.float32), PATCH * PATCH)
    inv_std_col = jnp.repeat(1.0 / jnp.asarray(CLIP_STD, jnp.float32), PATCH * PATCH)
    w_eff = (params["patch_w"] * inv_std_col[:, None]).astype(jnp.bfloat16)
    b_eff = -(mean_col * inv_std_col) @ params["patch_w"]              # (D,)

    # Per-row additive stem term: class_emb + pos[0] on class rows, pos + b_eff
    # on patch rows.  Built once in XLA (tiny) -> the kernel does one add.
    cls_row = (params["class_emb"] + params["pos_emb_v"][0])[None, :]  # (1, D)
    patch_rows = params["pos_emb_v"][1:] + b_eff[None, :]              # (Np, D)
    stem_bias = jnp.tile(jnp.concatenate([cls_row, patch_rows], axis=0), (B, 1))

    sel = jax.nn.one_hot(jnp.arange(B) * T, B * T, dtype=jnp.float32)  # class rows
    blk = _prep_blocks(params["v_blocks"])

    return pl.pallas_call(
        functools.partial(_image_kernel, T=T),
        out_shape=jax.ShapeDtypeStruct((B, EMBED_DIM), jnp.float32),
        compiler_params=_COMPILER_PARAMS,
    )(patches_aug, w_eff, stem_bias,
      params["ln_pre_g"].reshape(1, WIDTH), params["ln_pre_b"].reshape(1, WIDTH),
      sel, *blk,
      params["ln_post_g"].reshape(1, WIDTH), params["ln_post_b"].reshape(1, WIDTH),
      params["visual_proj"].astype(jnp.bfloat16))


def encode_text(params, tokens):
    B, T = tokens.shape
    # TODO(synk): clip.tokenize (BPE) has no Pallas equivalent; ids are inputs.
    x0 = jnp.take(params["token_emb"], tokens, axis=0) + params["pos_emb_t"][None]
    x0 = x0.reshape(B * T, WIDTH).astype(jnp.float32)

    eot = jnp.argmax(tokens, axis=-1)                                  # EOT = highest id
    sel = jax.nn.one_hot(jnp.arange(B) * T + eot, B * T, dtype=jnp.float32)
    blk = _prep_blocks(params["t_blocks"])

    return pl.pallas_call(
        functools.partial(_text_kernel, T=T),
        out_shape=jax.ShapeDtypeStruct((B, EMBED_DIM), jnp.float32),
        compiler_params=_COMPILER_PARAMS,
    )(x0, sel, *blk,
      params["ln_final_g"].reshape(1, WIDTH), params["ln_final_b"].reshape(1, WIDTH),
      params["text_proj"].astype(jnp.bfloat16))


def clip_extractor_forward(params, tokens, images):
    """Mirrors CLIPExtractor.forward -> (image_features, text_features, processed)."""
    processed = preprocess_images(images)
    # encode_image consumes raw pixels with the normalization folded into the
    # patch-embed weights, mathematically identical to encode_image(processed).
    image_features = encode_image(params, images)
    text_features = encode_text(params, tokens)
    return image_features, text_features, processed


# ----------------------------- parameter init -------------------------------
def _w(key, shape, scale=0.02):
    return scale * jax.random.normal(key, shape, jnp.float32)


def _init_block(key):
    ks = jax.random.split(key, 4)
    return dict(
        ln1_g=jnp.ones((WIDTH,), jnp.float32), ln1_b=jnp.zeros((WIDTH,), jnp.float32),
        w_qkv=_w(ks[0], (WIDTH, 3 * WIDTH)), b_qkv=jnp.zeros((3 * WIDTH,), jnp.float32),
        w_o=_w(ks[1], (WIDTH, WIDTH)), b_o=jnp.zeros((WIDTH,), jnp.float32),
        ln2_g=jnp.ones((WIDTH,), jnp.float32), ln2_b=jnp.zeros((WIDTH,), jnp.float32),
        w_fc=_w(ks[2], (WIDTH, MLP_DIM)), b_fc=jnp.zeros((MLP_DIM,), jnp.float32),
        w_proj=_w(ks[3], (MLP_DIM, WIDTH)), b_proj=jnp.zeros((WIDTH,), jnp.float32),
    )


def init_params(key):
    keys = jax.random.split(key, 8 + 2 * N_LAYERS)
    return dict(
        patch_w=_w(keys[0], (3 * PATCH * PATCH, WIDTH)),
        class_emb=_w(keys[1], (WIDTH,)),
        pos_emb_v=_w(keys[2], (1 + N_PATCH, WIDTH)),
        ln_pre_g=jnp.ones((WIDTH,), jnp.float32), ln_pre_b=jnp.zeros((WIDTH,), jnp.float32),
        ln_post_g=jnp.ones((WIDTH,), jnp.float32), ln_post_b=jnp.zeros((WIDTH,), jnp.float32),
        visual_proj=_w(keys[3], (WIDTH, EMBED_DIM)),
        token_emb=_w(keys[4], (VOCAB, WIDTH)),
        pos_emb_t=_w(keys[5], (CTX_LEN, WIDTH)),
        ln_final_g=jnp.ones((WIDTH,), jnp.float32), ln_final_b=jnp.zeros((WIDTH,), jnp.float32),
        text_proj=_w(keys[6], (WIDTH, EMBED_DIM)),
        v_blocks=[_init_block(keys[8 + i]) for i in range(N_LAYERS)],
        t_blocks=[_init_block(keys[8 + N_LAYERS + i]) for i in range(N_LAYERS)],
    )


# ----------------------------------- main ------------------------------------
if __name__ == "__main__":
    key = jax.random.PRNGKey(0)
    k_img, k_tok = jax.random.split(key)

    # "images": already sized to IMG_SIZE (resize/crop handled outside), NCHW, [0,1)
    images = jax.random.uniform(k_img, (2, 3, IMG_SIZE, IMG_SIZE), jnp.float32)
    # "prompt": pre-tokenized ids; last position holds EOT (highest id) like CLIP
    tokens = jax.random.randint(k_tok, (2, CTX_LEN), 1, VOCAB - 2)
    tokens = tokens.at[:, -1].set(VOCAB - 1)

    params = init_params(jax.random.PRNGKey(42))

    forward = jax.jit(clip_extractor_forward)
    img_feat, txt_feat, processed = forward(params, tokens, images)
    jax.block_until_ready((img_feat, txt_feat, processed))

    assert img_feat.shape == (2, EMBED_DIM)
    assert txt_feat.shape == (2, EMBED_DIM)
    assert processed.shape == (2, 3, IMG_SIZE, IMG_SIZE)
    assert bool(jnp.all(jnp.isfinite(img_feat))) and bool(jnp.all(jnp.isfinite(txt_feat)))
    assert bool(jnp.allclose(jnp.sum(img_feat * img_feat, axis=-1), 1.0, atol=1e-3))
    assert bool(jnp.allclose(jnp.sum(txt_feat * txt_feat, axis=-1), 1.0, atol=1e-3))
    print("KERNEL_OK")
</pallas_src>

<mosaic_0001>
module attributes {stable_mosaic.version = 11 : i64} {
  func.func @_image_kernel(%arg0: memref<10x192xf32, #tpu.memory_space<vmem>>, %arg1: memref<192x64xbf16, #tpu.memory_space<vmem>>, %arg2: memref<10x64xf32, #tpu.memory_space<vmem>>, %arg3: memref<1x64xf32, #tpu.memory_space<vmem>>, %arg4: memref<1x64xf32, #tpu.memory_space<vmem>>, %arg5: memref<2x10xf32, #tpu.memory_space<vmem>>, %arg6: memref<2x1x64xf32, #tpu.memory_space<vmem>>, %arg7: memref<2x1x64xf32, #tpu.memory_space<vmem>>, %arg8: memref<2x64x192xbf16, #tpu.memory_space<vmem>>, %arg9: memref<2x1x192xf32, #tpu.memory_space<vmem>>, %arg10: memref<2x64x64xbf16, #tpu.memory_space<vmem>>, %arg11: memref<2x1x64xf32, #tpu.memory_space<vmem>>, %arg12: memref<2x1x64xf32, #tpu.memory_space<vmem>>, %arg13: memref<2x1x64xf32, #tpu.memory_space<vmem>>, %arg14: memref<2x64x256xbf16, #tpu.memory_space<vmem>>, %arg15: memref<2x1x256xf32, #tpu.memory_space<vmem>>, %arg16: memref<2x256x64xbf16, #tpu.memory_space<vmem>>, %arg17: memref<2x1x64xf32, #tpu.memory_space<vmem>>, %arg18: memref<1x64xf32, #tpu.memory_space<vmem>>, %arg19: memref<1x64xf32, #tpu.memory_space<vmem>>, %arg20: memref<64x32xbf16, #tpu.memory_space<vmem>>, %arg21: memref<2x32xf32, #tpu.memory_space<vmem>>) attributes {dimension_semantics = [], scalar_prefetch = 0 : i64, scratch_operands = 0 : i64, tpu.core_type = #tpu.core_type<tc>} {
    %c0 = arith.constant 0 : index
    %c0_0 = arith.constant 0 : index
    %0 = vector.load %arg0[%c0, %c0_0] : memref<10x192xf32, #tpu.memory_space<vmem>>, vector<10x192xf32>
    %c0_1 = arith.constant 0 : index
    %c0_2 = arith.constant 0 : index
    %1 = vector.load %arg1[%c0_1, %c0_2] : memref<192x64xbf16, #tpu.memory_space<vmem>>, vector<192x64xbf16>
    %2 = arith.truncf %0 : vector<10x192xf32> to vector<10x192xbf16>
    %cst = arith.constant dense<0.000000e+00> : vector<10x64xf32>
    %3 = tpu.matmul %2, %1, %cst {dimension_numbers = #tpu.dot_dimension_numbers<[1], [0], [0], [1], [0, 0, 1, 1], [], []>} : vector<10x192xbf16>, vector<192x64xbf16>, vector<10x64xf32> -> vector<10x64xf32>
    %c0_3 = arith.constant 0 : index
    %c0_4 = arith.constant 0 : index
    %4 = vector.load %arg2[%c0_3, %c0_4] : memref<10x64xf32, #tpu.memory_space<vmem>>, vector<10x64xf32>
    %5 = arith.addf %3, %4 : vector<10x64xf32>
    %c0_5 = arith.constant 0 : index
    %c0_6 = arith.constant 0 : index
    %6 = vector.load %arg3[%c0_5, %c0_6] : memref<1x64xf32, #tpu.memory_space<vmem>>, vector<1x64xf32>
    %c0_7 = arith.constant 0 : index
    %c0_8 = arith.constant 0 : index
    %7 = vector.load %arg4[%c0_7, %c0_8] : memref<1x64xf32, #tpu.memory_space<vmem>>, vector<1x64xf32>
    %cst_9 = arith.constant dense<0.000000e+00> : vector<10xf32>
    %8 = vector.multi_reduction <add>, %5, %cst_9 [1] : vector<10x64xf32> to vector<10xf32>
    %9 = vector.shape_cast %8 : vector<10xf32> to vector<10x1xf32>
    %cst_10 = arith.constant 6.400000e+01 : f32
    %10 = vector.broadcast %cst_10 : f32 to vector<10x1xf32>
    %11 = arith.divf %9, %10 : vector<10x1xf32>
    %12 = vector.broadcast %11 : vector<10x1xf32> to vector<10x64xf32>
    %13 = arith.subf %5, %12 : vector<10x64xf32>
    %14 = arith.mulf %13, %13 : vector<10x64xf32>
    %cst_11 = arith.constant dense<0.000000e+00> : vector<10xf32>
    %15 = vector.multi_reduction <add>, %14, %cst_11 [1] : vector<10x64xf32> to vector<10xf32>
    %16 = vector.shape_cast %15 : vector<10xf32> to vector<10x1xf32>
    %cst_12 = arith.constant 6.400000e+01 : f32
    %17 = vector.broadcast %cst_12 : f32 to vector<10x1xf32>
    %18 = arith.divf %16, %17 : vector<10x1xf32>
    %19 = vector.broadcast %11 : vector<10x1xf32> to vector<10x64xf32>
    %20 = arith.subf %5, %19 : vector<10x64xf32>
    %cst_13 = arith.constant 9.99999974E-6 : f32
    %21 = vector.broadcast %cst_13 : f32 to vector<10x1xf32>
    %22 = arith.addf %18, %21 : vector<10x1xf32>
    %23 = math.rsqrt %22 : vector<10x1xf32>
    %24 = vector.broadcast %23 : vector<10x1xf32> to vector<10x64xf32>
    %25 = arith.mulf %20, %24 : vector<10x64xf32>
    %26 = vector.broadcast %6 : vector<1x64xf32> to vector<10x64xf32>
    %27 = arith.mulf %25, %26 : vector<10x64xf32>
    %28 = vector.broadcast %7 : vector<1x64xf32> to vector<10x64xf32>
    %29 = arith.addf %27, %28 : vector<10x64xf32>
    %c0_14 = arith.constant 0 : index
    %c0_15 = arith.constant 0 : index
    %30 = vector.load %arg5[%c0_14, %c0_15] : memref<2x10xf32, #tpu.memory_space<vmem>>, vector<2x10xf32>
    %c0_16 = arith.constant 0 : index
    %c0_17 = arith.constant 0 : index
    %31 = vector.load %arg18[%c0_16, %c0_17] : memref<1x64xf32, #tpu.memory_space<vmem>>, vector<1x64xf32>
    %c0_18 = arith.constant 0 : index
    %c0_19 = arith.constant 0 : index
    %32 = vector.load %arg19[%c0_18, %c0_19] : memref<1x64xf32, #tpu.memory_space<vmem>>, vector<1x64xf32>
    %c0_20 = arith.constant 0 : index
    %c0_21 = arith.constant 0 : index
    %33 = vector.load %arg20[%c0_20, %c0_21] : memref<64x32xbf16, #tpu.memory_space<vmem>>, vector<64x32xbf16>
    %34 = tpu.iota {dimensions = array<i32: 0>} : vector<10x10xi32>
    %35 = tpu.iota {dimensions = array<i32: 1>} : vector<10x10xi32>
    %c0_i32 = arith.constant 0 : i32
    %36 = vector.broadcast %c0_i32 : i32 to vector<10x10xi32>
    %37 = arith.cmpi sge, %34, %36 : vector<10x10xi32>
    %c5_i32 = arith.constant 5 : i32
    %38 = vector.broadcast %c5_i32 : i32 to vector<10x10xi32>
    %39 = arith.cmpi slt, %34, %38 : vector<10x10xi32>
    %40 = arith.andi %37, %39 : vector<10x10xi1>
    %c0_i32_22 = arith.constant 0 : i32
    %41 = vector.broadcast %c0_i32_22 : i32 to vector<10x10xi32>
    %42 = arith.cmpi sge, %35, %41 : vector<10x10xi32>
    %43 = arith.andi %40, %42 : vector<10x10xi1>
    %c5_i32_23 = arith.constant 5 : i32
    %44 = vector.broadcast %c5_i32_23 : i32 to vector<10x10xi32>
    %45 = arith.cmpi slt, %35, %44 : vector<10x10xi32>
    %46 = arith.andi %43, %45 : vector<10x10xi1>
    %c5_i32_24 = arith.constant 5 : i32
    %47 = vector.broadcast %c5_i32_24 : i32 to vector<10x10xi32>
    %48 = arith.cmpi sge, %34, %47 : vector<10x10xi32>
    %c10_i32 = arith.constant 10 : i32
    %49 = vector.broadcast %c10_i32 : i32 to vector<10x10xi32>
    %50 = arith.cmpi slt, %34, %49 : vector<10x10xi32>
    %51 = arith.andi %48, %50 : vector<10x10xi1>
    %c5_i32_25 = arith.constant 5 : i32
    %52 = vector.broadcast %c5_i32_25 : i32 to vector<10x10xi32>
    %53 = arith.cmpi sge, %35, %52 : vector<10x10xi32>
    %54 = arith.andi %51, %53 : vector<10x10xi1>
    %c10_i32_26 = arith.constant 10 : i32
    %55 = vector.broadcast %c10_i32_26 : i32 to vector<10x10xi32>
    %56 = arith.cmpi slt, %35, %55 : vector<10x10xi32>
    %57 = arith.andi %54, %56 : vector<10x10xi1>
    %58 = arith.ori %46, %57 : vector<10x10xi1>
    %cst_27 = arith.constant 0.000000e+00 : f32
    %cst_28 = arith.constant -1.000000e+09 : f32
    %59 = vector.broadcast %cst_27 : f32 to vector<10x10xf32>
    %60 = vector.broadcast %cst_28 : f32 to vector<10x10xf32>
    %61 = arith.select %58, %59, %60 : vector<10x10xi1>, vector<10x10xf32>
    %c0_29 = arith.constant 0 : index
    %c0_30 = arith.constant 0 : index
    %c0_31 = arith.constant 0 : index
    %62 = vector.load %arg6[%c0_29, %c0_30, %c0_31] : memref<2x1x64xf32, #tpu.memory_space<vmem>>, vector<1x1x64xf32>
    %63 = vector.shape_cast %62 : vector<1x1x64xf32> to vector<1x64xf32>
    %c0_32 = arith.constant 0 : index
    %c0_33 = arith.constant 0 : index
    %c0_34 = arith.constant 0 : index
    %64 = vector.load %arg7[%c0_32, %c0_33, %c0_34] : memref<2x1x64xf32, #tpu.memory_space<vmem>>, vector<1x1x64xf32>
    %65 = vector.shape_cast %64 : vector<1x1x64xf32> to vector<1x64xf32>
    %cst_35 = arith.constant dense<0.000000e+00> : vector<10xf32>
    %66 = vector.multi_reduction <add>, %29, %cst_35 [1] : vector<10x64xf32> to vector<10xf32>
    %67 = vector.shape_cast %66 : vector<10xf32> to vector<10x1xf32>
    %cst_36 = arith.constant 6.400000e+01 : f32
    %68 = vector.broadcast %cst_36 : f32 to vector<10x1xf32>
    %69 = arith.divf %67, %68 : vector<10x1xf32>
    %70 = vector.broadcast %69 : vector<10x1xf32> to vector<10x64xf32>
    %71 = arith.subf %29, %70 : vector<10x64xf32>
    %72 = arith.mulf %71, %71 : vector<10x64xf32>
    %cst_37 = arith.constant dense<0.000000e+00> : vector<10xf32>
    %73 = vector.multi_reduction <add>, %72, %cst_37 [1] : vector<10x64xf32> to vector<10xf32>
    %74 = vector.shape_cast %73 : vector<10xf32> to vector<10x1xf32>
    %cst_38 = arith.constant 6.400000e+01 : f32
    %75 = vector.broadcast %cst_38 : f32 to vector<10x1xf32>
    %76 = arith.divf %74, %75 : vector<10x1xf32>
    %77 = vector.broadcast %69 : vector<10x1xf32> to vector<10x64xf32>
    %78 = arith.subf %29, %77 : vector<10x64xf32>
    %cst_39 = arith.constant 9.99999974E-6 : f32
    %79 = vector.broadcast %cst_39 : f32 to vector<10x1xf32>
    %80 = arith.addf %76, %79 : vector<10x1xf32>
    %81 = math.rsqrt %80 : vector<10x1xf32>
    %82 = vector.broadcast %81 : vector<10x1xf32> to vector<10x64xf32>
    %83 = arith.mulf %78, %82 : vector<10x64xf32>
    %84 = vector.broadcast %63 : vector<1x64xf32> to vector<10x64xf32>
    %85 = arith.mulf %83, %84 : vector<10x64xf32>
    %86 = vector.broadcast %65 : vector<1x64xf32> to vector<10x64xf32>
    %87 = arith.addf %85, %86 : vector<10x64xf32>
    %c0_40 = arith.constant 0 : index
    %c0_41 = arith.constant 0 : index
    %c0_42 = arith.constant 0 : index
    %88 = vector.load %arg8[%c0_40, %c0_41, %c0_42] : memref<2x64x192xbf16, #tpu.memory_space<vmem>>, vector<1x64x192xbf16>
    %89 = vector.shape_cast %88 : vector<1x64x192xbf16> to vector<64x192xbf16>
    %90 = arith.truncf %87 : vector<10x64xf32> to vector<10x64xbf16>
    %cst_43 = arith.constant dense<0.000000e+00> : vector<10x192xf32>
    %91 = tpu.matmul %90, %89, %cst_43 {dimension_numbers = #tpu.dot_dimension_numbers<[1], [0], [0], [1], [0, 0, 1, 1], [], []>} : vector<10x64xbf16>, vector<64x192xbf16>, vector<10x192xf32> -> vector<10x192xf32>
    %c0_44 = arith.constant 0 : index
    %c0_45 = arith.constant 0 : index
    %c0_46 = arith.constant 0 : index
    %92 = vector.load %arg9[%c0_44, %c0_45, %c0_46] : memref<2x1x192xf32, #tpu.memory_space<vmem>>, vector<1x1x192xf32>
    %93 = vector.shape_cast %92 : vector<1x1x192xf32> to vector<1x192xf32>
    %94 = vector.broadcast %93 : vector<1x192xf32> to vector<10x192xf32>
    %95 = arith.addf %91, %94 : vector<10x192xf32>
    %c0_47 = arith.constant 0 : index
    %c0_48 = arith.constant 0 : index
    %c0_49 = arith.constant 0 : index
    %96 = vector.load %arg10[%c0_47, %c0_48, %c0_49] : memref<2x64x64xbf16, #tpu.memory_space<vmem>>, vector<1x64x64xbf16>
    %97 = vector.shape_cast %96 : vector<1x64x64xbf16> to vector<64x64xbf16>
    %cst_50 = arith.constant 0.000000e+00 : f32
    %98 = vector.broadcast %cst_50 : f32 to vector<10x64xf32>
    %99 = vector.extract_strided_slice %95 {offsets = [0, 0], sizes = [10, 32], strides = [1, 1]} : vector<10x192xf32> to vector<10x32xf32>
    %100 = vector.extract_strided_slice %95 {offsets = [0, 64], sizes = [10, 32], strides = [1, 1]} : vector<10x192xf32> to vector<10x32xf32>
    %101 = vector.extract_strided_slice %95 {offsets = [0, 128], sizes = [10, 32], strides = [1, 1]} : vector<10x192xf32> to vector<10x32xf32>
    %102 = arith.truncf %99 : vector<10x32xf32> to vector<10x32xbf16>
    %103 = arith.truncf %100 : vector<10x32xf32> to vector<10x32xbf16>
    %cst_51 = arith.constant dense<0.000000e+00> : vector<10x10xf32>
    %104 = tpu.matmul %102, %103, %cst_51 {dimension_numbers = #tpu.dot_dimension_numbers<[1], [1], [0], [0], [0, 0, 1, 0], [], []>} : vector<10x32xbf16>, vector<10x32xbf16>, vector<10x10xf32> -> vector<10x10xf32>
    %105 = arith.addf %104, %61 : vector<10x10xf32>
    %cst_52 = arith.constant dense<0xFF800000> : vector<10xf32>
    %106 = vector.multi_reduction <maximumf>, %105, %cst_52 [1] : vector<10x10xf32> to vector<10xf32>
    %107 = vector.shape_cast %106 : vector<10xf32> to vector<10x1xf32>
    %108 = vector.broadcast %107 : vector<10x1xf32> to vector<10x10xf32>
    %109 = arith.subf %105, %108 : vector<10x10xf32>
    %110 = math.exp %109 : vector<10x10xf32>
    %cst_53 = arith.constant dense<0.000000e+00> : vector<10xf32>
    %111 = vector.multi_reduction <add>, %110, %cst_53 [1] : vector<10x10xf32> to vector<10xf32>
    %112 = vector.shape_cast %111 : vector<10xf32> to vector<10x1xf32>
    %113 = tpu.reciprocal %112 {approx = true} : vector<10x1xf32> -> vector<10x1xf32>
    %114 = vector.broadcast %113 : vector<10x1xf32> to vector<10x10xf32>
    %115 = arith.mulf %110, %114 : vector<10x10xf32>
    %116 = arith.truncf %115 : vector<10x10xf32> to vector<10x10xbf16>
    %117 = arith.truncf %101 : vector<10x32xf32> to vector<10x32xbf16>
    %cst_54 = arith.constant dense<0.000000e+00> : vector<10x32xf32>
    %118 = tpu.matmul %116, %117, %cst_54 {dimension_numbers = #tpu.dot_dimension_numbers<[1], [0], [0], [1], [0, 0, 1, 1], [], []>} : vector<10x10xbf16>, vector<10x32xbf16>, vector<10x32xf32> -> vector<10x32xf32>
    %119 = vector.extract_strided_slice %97 {offsets = [0, 0], sizes = [32, 64], strides = [1, 1]} : vector<64x64xbf16> to vector<32x64xbf16>
    %120 = arith.truncf %118 : vector<10x32xf32> to vector<10x32xbf16>
    %cst_55 = arith.constant dense<0.000000e+00> : vector<10x64xf32>
    %121 = tpu.matmul %120, %119, %cst_55 {dimension_numbers = #tpu.dot_dimension_numbers<[1], [0], [0], [1], [0, 0, 1, 1], [], []>} : vector<10x32xbf16>, vector<32x64xbf16>, vector<10x64xf32> -> vector<10x64xf32>
    %122 = arith.addf %98, %121 : vector<10x64xf32>
    %123 = vector.extract_strided_slice %95 {offsets = [0, 32], sizes = [10, 32], strides = [1, 1]} : vector<10x192xf32> to vector<10x32xf32>
    %124 = vector.extract_strided_slice %95 {offsets = [0, 96], sizes = [10, 32], strides = [1, 1]} : vector<10x192xf32> to vector<10x32xf32>
    %125 = vector.extract_strided_slice %95 {offsets = [0, 160], sizes = [10, 32], strides = [1, 1]} : vector<10x192xf32> to vector<10x32xf32>
    %126 = arith.truncf %123 : vector<10x32xf32> to vector<10x32xbf16>
    %127 = arith.truncf %124 : vector<10x32xf32> to vector<10x32xbf16>
    %cst_56 = arith.constant dense<0.000000e+00> : vector<10x10xf32>
    %128 = tpu.matmul %126, %127, %cst_56 {dimension_numbers = #tpu.dot_dimension_numbers<[1], [1], [0], [0], [0, 0, 1, 0], [], []>} : vector<10x32xbf16>, vector<10x32xbf16>, vector<10x10xf32> -> vector<10x10xf32>
    %129 = arith.addf %128, %61 : vector<10x10xf32>
    %cst_57 = arith.constant dense<0xFF800000> : vector<10xf32>
    %130 = vector.multi_reduction <maximumf>, %129, %cst_57 [1] : vector<10x10xf32> to vector<10xf32>
    %131 = vector.shape_cast %130 : vector<10xf32> to vector<10x1xf32>
    %132 = vector.broadcast %131 : vector<10x1xf32> to vector<10x10xf32>
    %133 = arith.subf %129, %132 : vector<10x10xf32>
    %134 = math.exp %133 : vector<10x10xf32>
    %cst_58 = arith.constant dense<0.000000e+00> : vector<10xf32>
    %135 = vector.multi_reduction <add>, %134, %cst_58 [1] : vector<10x10xf32> to vector<10xf32>
    %136 = vector.shape_cast %135 : vector<10xf32> to vector<10x1xf32>
    %137 = tpu.reciprocal %136 {approx = true} : vector<10x1xf32> -> vector<10x1xf32>
    %138 = vector.broadcast %137 : vector<10x1xf32> to vector<10x10xf32>
    %139 = arith.mulf %134, %138 : vector<10x10xf32>
    %140 = arith.truncf %139 : vector<10x10xf32> to vector<10x10xbf16>
    %141 = arith.truncf %125 : vector<10x32xf32> to vector<10x32xbf16>
    %cst_59 = arith.constant dense<0.000000e+00> : vector<10x32xf32>
    %142 = tpu.matmul %140, %141, %cst_59 {dimension_numbers = #tpu.dot_dimension_numbers<[1], [0], [0], [1], [0, 0, 1, 1], [], []>} : vector<10x10xbf16>, vector<10x32xbf16>, vector<10x32xf32> -> vector<10x32xf32>
    %143 = vector.extract_strided_slice %97 {offsets = [32, 0], sizes = [32, 64], strides = [1, 1]} : vector<64x64xbf16> to vector<32x64xbf16>
    %144 = arith.truncf %142 : vector<10x32xf32> to vector<10x32xbf16>
    %cst_60 = arith.constant dense<0.000000e+00> : vector<10x64xf32>
    %145 = tpu.matmul %144, %143, %cst_60 {dimension_numbers = #tpu.dot_dimension_numbers<[1], [0], [0], [1], [0, 0, 1, 1], [], []>} : vector<10x32xbf16>, vector<32x64xbf16>, vector<10x64xf32> -> vector<10x64xf32>
    %146 = arith.addf %122, %145 : vector<10x64xf32>
    %147 = arith.addf %29, %146 : vector<10x64xf32>
    %c0_61 = arith.constant 0 : index
    %c0_62 = arith.constant 0 : index
    %c0_63 = arith.constant 0 : index
    %148 = vector.load %arg11[%c0_61, %c0_62, %c0_63] : memref<2x1x64xf32, #tpu.memory_space<vmem>>, vector<1x1x64xf32>
    %149 = vector.shape_cast %148 : vector<1x1x64xf32> to vector<1x64xf32>
    %150 = vector.broadcast %149 : vector<1x64xf32> to vector<10x64xf32>
    %151 = arith.addf %147, %150 : vector<10x64xf32>
    %c0_64 = arith.constant 0 : index
    %c0_65 = arith.constant 0 : index
    %c0_66 = arith.constant 0 : index
    %152 = vector.load %arg12[%c0_64, %c0_65, %c0_66] : memref<2x1x64xf32, #tpu.memory_space<vmem>>, vector<1x1x64xf32>
    %153 = vector.shape_cast %152 : vector<1x1x64xf32> to vector<1x64xf32>
    %c0_67 = arith.constant 0 : index
    %c0_68 = arith.constant 0 : index
    %c0_69 = arith.constant 0 : index
    %154 = vector.load %arg13[%c0_67, %c0_68, %c0_69] : memref<2x1x64xf32, #tpu.memory_space<vmem>>, vector<1x1x64xf32>
    %155 = vector.shape_cast %154 : vector<1x1x64xf32> to vector<1x64xf32>
    %cst_70 = arith.constant dense<0.000000e+00> : vector<10xf32>
    %156 = vector.multi_reduction <add>, %151, %cst_70 [1] : vector<10x64xf32> to vector<10xf32>
    %157 = vector.shape_cast %156 : vector<10xf32> to vector<10x1xf32>
    %cst_71 = arith.constant 6.400000e+01 : f32
    %158 = vector.broadcast %cst_71 : f32 to vector<10x1xf32>
    %159 = arith.divf %157, %158 : vector<10x1xf32>
    %160 = vector.broadcast %159 : vector<10x1xf32> to vector<10x64xf32>
    %161 = arith.subf %151, %160 : vector<10x64xf32>
    %162 = arith.mulf %161, %161 : vector<10x64xf32>
    %cst_72 = arith.constant dense<0.000000e+00> : vector<10xf32>
    %163 = vector.multi_reduction <add>, %162, %cst_72 [1] : vector<10x64xf32> to vector<10xf32>
    %164 = vector.shape_cast %163 : vector<10xf32> to vector<10x1xf32>
    %cst_73 = arith.constant 6.400000e+01 : f32
    %165 = vector.broadcast %cst_73 : f32 to vector<10x1xf32>
    %166 = arith.divf %164, %165 : vector<10x1xf32>
    %167 = vector.broadcast %159 : vector<10x1xf32> to vector<10x64xf32>
    %168 = arith.subf %151, %167 : vector<10x64xf32>
    %cst_74 = arith.constant 9.99999974E-6 : f32
    %169 = vector.broadcast %cst_74 : f32 to vector<10x1xf32>
    %170 = arith.addf %166, %169 : vector<10x1xf32>
    %171 = math.rsqrt %170 : vector<10x1xf32>
    %172 = vector.broadcast %171 : vector<10x1xf32> to vector<10x64xf32>
    %173 = arith.mulf %168, %172 : vector<10x64xf32>
    %174 = vector.broadcast %153 : vector<1x64xf32> to vector<10x64xf32>
    %175 = arith.mulf %173, %174 : vector<10x64xf32>
    %176 = vector.broadcast %155 : vector<1x64xf32> to vector<10x64xf32>
    %177 = arith.addf %175, %176 : vector<10x64xf32>
    %c0_75 = arith.constant 0 : index
    %c0_76 = arith.constant 0 : index
    %c0_77 = arith.constant 0 : index
    %178 = vector.load %arg14[%c0_75, %c0_76, %c0_77] : memref<2x64x256xbf16, #tpu.memory_space<vmem>>, vector<1x64x256xbf16>
    %179 = vector.shape_cast %178 : vector<1x64x256xbf16> to vector<64x256xbf16>
    %180 = arith.truncf %177 : vector<10x64xf32> to vector<10x64xbf16>
    %cst_78 = arith.constant dense<0.000000e+00> : vector<10x256xf32>
    %181 = tpu.matmul %180, %179, %cst_78 {dimension_numbers = #tpu.dot_dimension_numbers<[1], [0], [0], [1], [0, 0, 1, 1], [], []>} : vector<10x64xbf16>, vector<64x256xbf16>, vector<10x256xf32> -> vector<10x256xf32>
    %c0_79 = arith.constant 0 : index
    %c0_80 = arith.constant 0 : index
    %c0_81 = arith.constant 0 : index
    %182 = vector.load %arg15[%c0_79, %c0_80, %c0_81] : memref<2x1x256xf32, #tpu.memory_space<vmem>>, vector<1x1x256xf32>
    %183 = vector.shape_cast %182 : vector<1x1x256xf32> to vector<1x256xf32>
    %184 = vector.broadcast %183 : vector<1x256xf32> to vector<10x256xf32>
    %185 = arith.addf %181, %184 : vector<10x256xf32>
    %cst_82 = arith.constant 1.702000e+00 : f32
    %186 = vector.broadcast %cst_82 : f32 to vector<10x256xf32>
    %187 = arith.mulf %186, %185 : vector<10x256xf32>
    %188 = arith.negf %187 : vector<10x256xf32>
    %189 = math.exp %188 : vector<10x256xf32>
    %cst_83 = arith.constant 1.000000e+00 : f32
    %190 = vector.broadcast %cst_83 : f32 to vector<10x256xf32>
    %191 = arith.addf %190, %189 : vector<10x256xf32>
    %192 = arith.divf %190, %191 : vector<10x256xf32>
    %193 = arith.mulf %185, %192 : vector<10x256xf32>
    %c0_84 = arith.constant 0 : index
    %c0_85 = arith.constant 0 : index
    %c0_86 = arith.constant 0 : index
    %194 = vector.load %arg16[%c0_84, %c0_85, %c0_86] : memref<2x256x64xbf16, #tpu.memory_space<vmem>>, vector<1x256x64xbf16>
    %195 = vector.shape_cast %194 : vector<1x256x64xbf16> to vector<256x64xbf16>
    %196 = arith.truncf %193 : vector<10x256xf32> to vector<10x256xbf16>
    %cst_87 = arith.constant dense<0.000000e+00> : vector<10x64xf32>
    %197 = tpu.matmul %196, %195, %cst_87 {dimension_numbers = #tpu.dot_dimension_numbers<[1], [0], [0], [1], [0, 0, 1, 1], [], []>} : vector<10x256xbf16>, vector<256x64xbf16>, vector<10x64xf32> -> vector<10x64xf32>
    %198 = arith.addf %151, %197 : vector<10x64xf32>
    %c0_88 = arith.constant 0 : index
    %c0_89 = arith.constant 0 : index
    %c0_90 = arith.constant 0 : index
    %199 = vector.load %arg17[%c0_88, %c0_89, %c0_90] : memref<2x1x64xf32, #tpu.memory_space<vmem>>, vector<1x1x64xf32>
    %200 = vector.shape_cast %199 : vector<1x1x64xf32> to vector<1x64xf32>
    %201 = vector.broadcast %200 : vector<1x64xf32> to vector<10x64xf32>
    %202 = arith.addf %198, %201 : vector<10x64xf32>
    %c1 = arith.constant 1 : index
    %c0_91 = arith.constant 0 : index
    %c0_92 = arith.constant 0 : index
    %203 = vector.load %arg6[%c1, %c0_91, %c0_92] : memref<2x1x64xf32, #tpu.memory_space<vmem>>, vector<1x1x64xf32>
    %204 = vector.shape_cast %203 : vector<1x1x64xf32> to vector<1x64xf32>
    %c1_93 = arith.constant 1 : index
    %c0_94 = arith.constant 0 : index
    %c0_95 = arith.constant 0 : index
    %205 = vector.load %arg7[%c1_93, %c0_94, %c0_95] : memref<2x1x64xf32, #tpu.memory_space<vmem>>, vector<1x1x64xf32>
    %206 = vector.shape_cast %205 : vector<1x1x64xf32> to vector<1x64xf32>
    %cst_96 = arith.constant dense<0.000000e+00> : vector<10xf32>
    %207 = vector.multi_reduction <add>, %202, %cst_96 [1] : vector<10x64xf32> to vector<10xf32>
    %208 = vector.shape_cast %207 : vector<10xf32> to vector<10x1xf32>
    %cst_97 = arith.constant 6.400000e+01 : f32
    %209 = vector.broadcast %cst_97 : f32 to vector<10x1xf32>
    %210 = arith.divf %208, %209 : vector<10x1xf32>
    %211 = vector.broadcast %210 : vector<10x1xf32> to vector<10x64xf32>
    %212 = arith.subf %202, %211 : vector<10x64xf32>
    %213 = arith.mulf %212, %212 : vector<10x64xf32>
    %cst_98 = arith.constant dense<0.000000e+00> : vector<10xf32>
    %214 = vector.multi_reduction <add>, %213, %cst_98 [1] : vector<10x64xf32> to vector<10xf32>
    %215 = vector.shape_cast %214 : vector<10xf32> to vector<10x1xf32>
    %cst_99 = arith.constant 6.400000e+01 : f32
    %216 = vector.broadcast %cst_99 : f32 to vector<10x1xf32>
    %217 = arith.divf %215, %216 : vector<10x1xf32>
    %218 = vector.broadcast %210 : vector<10x1xf32> to vector<10x64xf32>
    %219 = arith.subf %202, %218 : vector<10x64xf32>
    %cst_100 = arith.constant 9.99999974E-6 : f32
    %220 = vector.broadcast %cst_100 : f32 to vector<10x1xf32>
    %221 = arith.addf %217, %220 : vector<10x1xf32>
    %222 = math.rsqrt %221 : vector<10x1xf32>
    %223 = vector.broadcast %222 : vector<10x1xf32> to vector<10x64xf32>
    %224 = arith.mulf %219, %223 : vector<10x64xf32>
    %225 = vector.broadcast %204 : vector<1x64xf32> to vector<10x64xf32>
    %226 = arith.mulf %224, %225 : vector<10x64xf32>
    %227 = vector.broadcast %206 : vector<1x64xf32> to vector<10x64xf32>
    %228 = arith.addf %226, %227 : vector<10x64xf32>
    %c1_101 = arith.constant 1 : index
    %c0_102 = arith.constant 0 : index
    %c0_103 = arith.constant 0 : index
    %229 = vector.load %arg8[%c1_101, %c0_102, %c0_103] : memref<2x64x192xbf16, #tpu.memory_space<vmem>>, vector<1x64x192xbf16>
    %230 = vector.shape_cast %229 : vector<1x64x192xbf16> to vector<64x192xbf16>
    %231 = arith.truncf %228 : vector<10x64xf32> to vector<10x64xbf16>
    %cst_104 = arith.constant dense<0.000000e+00> : vector<10x192xf32>
    %232 = tpu.matmul %231, %230, %cst_104 {dimension_numbers = #tpu.dot_dimension_numbers<[1], [0], [0], [1], [0, 0, 1, 1], [], []>} : vector<10x64xbf16>, vector<64x192xbf16>, vector<10x192xf32> -> vector<10x192xf32>
    %c1_105 = arith.constant 1 : index
    %c0_106 = arith.constant 0 : index
    %c0_107 = arith.constant 0 : index
    %233 = vector.load %arg9[%c1_105, %c0_106, %c0_107] : memref<2x1x192xf32, #tpu.memory_space<vmem>>, vector<1x1x192xf32>
    %234 = vector.shape_cast %233 : vector<1x1x192xf32> to vector<1x192xf32>
    %235 = vector.broadcast %234 : vector<1x192xf32> to vector<10x192xf32>
    %236 = arith.addf %232, %235 : vector<10x192xf32>
    %c1_108 = arith.constant 1 : index
    %c0_109 = arith.constant 0 : index
    %c0_110 = arith.constant 0 : index
    %237 = vector.load %arg10[%c1_108, %c0_109, %c0_110] : memref<2x64x64xbf16, #tpu.memory_space<vmem>>, vector<1x64x64xbf16>
    %238 = vector.shape_cast %237 : vector<1x64x64xbf16> to vector<64x64xbf16>
    %cst_111 = arith.constant 0.000000e+00 : f32
    %239 = vector.broadcast %cst_111 : f32 to vector<10x64xf32>
    %240 = vector.extract_strided_slice %236 {offsets = [0, 0], sizes = [10, 32], strides = [1, 1]} : vector<10x192xf32> to vector<10x32xf32>
    %241 = vector.extract_strided_slice %236 {offsets = [0, 64], sizes = [10, 32], strides = [1, 1]} : vector<10x192xf32> to vector<10x32xf32>
    %242 = vector.extract_strided_slice %236 {offsets = [0, 128], sizes = [10, 32], strides = [1, 1]} : vector<10x192xf32> to vector<10x32xf32>
    %243 = arith.truncf %240 : vector<10x32xf32> to vector<10x32xbf16>
    %244 = arith.truncf %241 : vector<10x32xf32> to vector<10x32xbf16>
    %cst_112 = arith.constant dense<0.000000e+00> : vector<10x10xf32>
    %245 = tpu.matmul %243, %244, %cst_112 {dimension_numbers = #tpu.dot_dimension_numbers<[1], [1], [0], [0], [0, 0, 1, 0], [], []>} : vector<10x32xbf16>, vector<10x32xbf16>, vector<10x10xf32> -> vector<10x10xf32>
    %246 = arith.addf %245, %61 : vector<10x10xf32>
    %cst_113 = arith.constant dense<0xFF800000> : vector<10xf32>
    %247 = vector.multi_reduction <maximumf>, %246, %cst_113 [1] : vector<10x10xf32> to vector<10xf32>
    %248 = vector.shape_cast %247 : vector<10xf32> to vector<10x1xf32>
    %249 = vector.broadcast %248 : vector<10x1xf32> to vector<10x10xf32>
    %250 = arith.subf %246, %249 : vector<10x10xf32>
    %251 = math.exp %250 : vector<10x10xf32>
    %cst_114 = arith.constant dense<0.000000e+00> : vector<10xf32>
    %252 = vector.multi_reduction <add>, %251, %cst_114 [1] : vector<10x10xf32> to vector<10xf32>
    %253 = vector.shape_cast %252 : vector<10xf32> to vector<10x1xf32>
    %254 = tpu.reciprocal %253 {approx = true} : vector<10x1xf32> -> vector<10x1xf32>
    %255 = vector.broadcast %254 : vector<10x1xf32> to vector<10x10xf32>
    %256 = arith.mulf %251, %255 : vector<10x10xf32>
    %257 = arith.truncf %256 : vector<10x10xf32> to vector<10x10xbf16>
    %258 = arith.truncf %242 : vector<10x32xf32> to vector<10x32xbf16>
    %cst_115 = arith.constant dense<0.000000e+00> : vector<10x32xf32>
    %259 = tpu.matmul %257, %258, %cst_115 {dimension_numbers = #tpu.dot_dimension_numbers<[1], [0], [0], [1], [0, 0, 1, 1], [], []>} : vector<10x10xbf16>, vector<10x32xbf16>, vector<10x32xf32> -> vector<10x32xf32>
    %260 = vector.extract_strided_slice %238 {offsets = [0, 0], sizes = [32, 64], strides = [1, 1]} : vector<64x64xbf16> to vector<32x64xbf16>
    %261 = arith.truncf %259 : vector<10x32xf32> to vector<10x32xbf16>
    %cst_116 = arith.constant dense<0.000000e+00> : vector<10x64xf32>
    %262 = tpu.matmul %261, %260, %cst_116 {dimension_numbers = #tpu.dot_dimension_numbers<[1], [0], [0], [1], [0, 0, 1, 1], [], []>} : vector<10x32xbf16>, vector<32x64xbf16>, vector<10x64xf32> -> vector<10x64xf32>
    %263 = arith.addf %239, %262 : vector<10x64xf32>
    %264 = vector.extract_strided_slice %236 {offsets = [0, 32], sizes = [10, 32], strides = [1, 1]} : vector<10x192xf32> to vector<10x32xf32>
    %265 = vector.extract_strided_slice %236 {offsets = [0, 96], sizes = [10, 32], strides = [1, 1]} : vector<10x192xf32> to vector<10x32xf32>
    %266 = vector.extract_strided_slice %236 {offsets = [0, 160], sizes = [10, 32], strides = [1, 1]} : vector<10x192xf32> to vector<10x32xf32>
    %267 = arith.truncf %264 : vector<10x32xf32> to vector<10x32xbf16>
    %268 = arith.truncf %265 : vector<10x32xf32> to vector<10x32xbf16>
    %cst_117 = arith.constant dense<0.000000e+00> : vector<10x10xf32>
    %269 = tpu.matmul %267, %268, %cst_117 {dimension_numbers = #tpu.dot_dimension_numbers<[1], [1], [0], [0], [0, 0, 1, 0], [], []>} : vector<10x32xbf16>, vector<10x32xbf16>, vector<10x10xf32> -> vector<10x10xf32>
    %270 = arith.addf %269, %61 : vector<10x10xf32>
    %cst_118 = arith.constant dense<0xFF800000> : vector<10xf32>
    %271 = vector.multi_reduction <maximumf>, %270, %cst_118 [1] : vector<10x10xf32> to vector<10xf32>
    %272 = vector.shape_cast %271 : vector<10xf32> to vector<10x1xf32>
    %273 = vector.broadcast %272 : vector<10x1xf32> to vector<10x10xf32>
    %274 = arith.subf %270, %273 : vector<10x10xf32>
    %275 = math.exp %274 : vector<10x10xf32>
    %cst_119 = arith.constant dense<0.000000e+00> : vector<10xf32>
    %276 = vector.multi_reduction <add>, %275, %cst_119 [1] : vector<10x10xf32> to vector<10xf32>
    %277 = vector.shape_cast %276 : vector<10xf32> to vector<10x1xf32>
    %278 = tpu.reciprocal %277 {approx = true} : vector<10x1xf32> -> vector<10x1xf32>
    %279 = vector.broadcast %278 : vector<10x1xf32> to vector<10x10xf32>
    %280 = arith.mulf %275, %279 : vector<10x10xf32>
    %281 = arith.truncf %280 : vector<10x10xf32> to vector<10x10xbf16>
    %282 = arith.truncf %266 : vector<10x32xf32> to vector<10x32xbf16>
    %cst_120 = arith.constant dense<0.000000e+00> : vector<10x32xf32>
    %283 = tpu.matmul %281, %282, %cst_120 {dimension_numbers = #tpu.dot_dimension_numbers<[1], [0], [0], [1], [0, 0, 1, 1], [], []>} : vector<10x10xbf16>, vector<10x32xbf16>, vector<10x32xf32> -> vector<10x32xf32>
    %284 = vector.extract_strided_slice %238 {offsets = [32, 0], sizes = [32, 64], strides = [1, 1]} : vector<64x64xbf16> to vector<32x64xbf16>
    %285 = arith.truncf %283 : vector<10x32xf32> to vector<10x32xbf16>
    %cst_121 = arith.constant dense<0.000000e+00> : vector<10x64xf32>
    %286 = tpu.matmul %285, %284, %cst_121 {dimension_numbers = #tpu.dot_dimension_numbers<[1], [0], [0], [1], [0, 0, 1, 1], [], []>} : vector<10x32xbf16>, vector<32x64xbf16>, vector<10x64xf32> -> vector<10x64xf32>
    %287 = arith.addf %263, %286 : vector<10x64xf32>
    %288 = arith.addf %202, %287 : vector<10x64xf32>
    %c1_122 = arith.constant 1 : index
    %c0_123 = arith.constant 0 : index
    %c0_124 = arith.constant 0 : index
    %289 = vector.load %arg11[%c1_122, %c0_123, %c0_124] : memref<2x1x64xf32, #tpu.memory_space<vmem>>, vector<1x1x64xf32>
    %290 = vector.shape_cast %289 : vector<1x1x64xf32> to vector<1x64xf32>
    %291 = vector.broadcast %290 : vector<1x64xf32> to vector<10x64xf32>
    %292 = arith.addf %288, %291 : vector<10x64xf32>
    %c1_125 = arith.constant 1 : index
    %c0_126 = arith.constant 0 : index
    %c0_127 = arith.constant 0 : index
    %293 = vector.load %arg12[%c1_125, %c0_126, %c0_127] : memref<2x1x64xf32, #tpu.memory_space<vmem>>, vector<1x1x64xf32>
    %294 = vector.shape_cast %293 : vector<1x1x64xf32> to vector<1x64xf32>
    %c1_128 = arith.constant 1 : index
    %c0_129 = arith.constant 0 : index
    %c0_130 = arith.constant 0 : index
    %295 = vector.load %arg13[%c1_128, %c0_129, %c0_130] : memref<2x1x64xf32, #tpu.memory_space<vmem>>, vector<1x1x64xf32>
    %296 = vector.shape_cast %295 : vector<1x1x64xf32> to vector<1x64xf32>
    %cst_131 = arith.constant dense<0.000000e+00> : vector<10xf32>
    %297 = vector.multi_reduction <add>, %292, %cst_131 [1] : vector<10x64xf32> to vector<10xf32>
    %298 = vector.shape_cast %297 : vector<10xf32> to vector<10x1xf32>
    %cst_132 = arith.constant 6.400000e+01 : f32
    %299 = vector.broadcast %cst_132 : f32 to vector<10x1xf32>
    %300 = arith.divf %298, %299 : vector<10x1xf32>
    %301 = vector.broadcast %300 : vector<10x1xf32> to vector<10x64xf32>
    %302 = arith.subf %292, %301 : vector<10x64xf32>
    %303 = arith.mulf %302, %302 : vector<10x64xf32>
    %cst_133 = arith.constant dense<0.000000e+00> : vector<10xf32>
    %304 = vector.multi_reduction <add>, %303, %cst_133 [1] : vector<10x64xf32> to vector<10xf32>
    %305 = vector.shape_cast %304 : vector<10xf32> to vector<10x1xf32>
    %cst_134 = arith.constant 6.400000e+01 : f32
    %306 = vector.broadcast %cst_134 : f32 to vector<10x1xf32>
    %307 = arith.divf %305, %306 : vector<10x1xf32>
    %308 = vector.broadcast %300 : vector<10x1xf32> to vector<10x64xf32>
    %309 = arith.subf %292, %308 : vector<10x64xf32>
    %cst_135 = arith.constant 9.99999974E-6 : f32
    %310 = vector.broadcast %cst_135 : f32 to vector<10x1xf32>
    %311 = arith.addf %307, %310 : vector<10x1xf32>
    %312 = math.rsqrt %311 : vector<10x1xf32>
    %313 = vector.broadcast %312 : vector<10x1xf32> to vector<10x64xf32>
    %314 = arith.mulf %309, %313 : vector<10x64xf32>
    %315 = vector.broadcast %294 : vector<1x64xf32> to vector<10x64xf32>
    %316 = arith.mulf %314, %315 : vector<10x64xf32>
    %317 = vector.broadcast %296 : vector<1x64xf32> to vector<10x64xf32>
    %318 = arith.addf %316, %317 : vector<10x64xf32>
    %c1_136 = arith.constant 1 : index
    %c0_137 = arith.constant 0 : index
    %c0_138 = arith.constant 0 : index
    %319 = vector.load %arg14[%c1_136, %c0_137, %c0_138] : memref<2x64x256xbf16, #tpu.memory_space<vmem>>, vector<1x64x256xbf16>
    %320 = vector.shape_cast %319 : vector<1x64x256xbf16> to vector<64x256xbf16>
    %321 = arith.truncf %318 : vector<10x64xf32> to vector<10x64xbf16>
    %cst_139 = arith.constant dense<0.000000e+00> : vector<10x256xf32>
    %322 = tpu.matmul %321, %320, %cst_139 {dimension_numbers = #tpu.dot_dimension_numbers<[1], [0], [0], [1], [0, 0, 1, 1], [], []>} : vector<10x64xbf16>, vector<64x256xbf16>, vector<10x256xf32> -> vector<10x256xf32>
    %c1_140 = arith.constant 1 : index
    %c0_141 = arith.constant 0 : index
    %c0_142 = arith.constant 0 : index
    %323 = vector.load %arg15[%c1_140, %c0_141, %c0_142] : memref<2x1x256xf32, #tpu.memory_space<vmem>>, vector<1x1x256xf32>
    %324 = vector.shape_cast %323 : vector<1x1x256xf32> to vector<1x256xf32>
    %325 = vector.broadcast %324 : vector<1x256xf32> to vector<10x256xf32>
    %326 = arith.addf %322, %325 : vector<10x256xf32>
    %cst_143 = arith.constant 1.702000e+00 : f32
    %327 = vector.broadcast %cst_143 : f32 to vector<10x256xf32>
    %328 = arith.mulf %327, %326 : vector<10x256xf32>
    %329 = arith.negf %328 : vector<10x256xf32>
    %330 = math.exp %329 : vector<10x256xf32>
    %cst_144 = arith.constant 1.000000e+00 : f32
    %331 = vector.broadcast %cst_144 : f32 to vector<10x256xf32>
    %332 = arith.addf %331, %330 : vector<10x256xf32>
    %333 = arith.divf %331, %332 : vector<10x256xf32>
    %334 = arith.mulf %326, %333 : vector<10x256xf32>
    %c1_145 = arith.constant 1 : index
    %c0_146 = arith.constant 0 : index
    %c0_147 = arith.constant 0 : index
    %335 = vector.load %arg16[%c1_145, %c0_146, %c0_147] : memref<2x256x64xbf16, #tpu.memory_space<vmem>>, vector<1x256x64xbf16>
    %336 = vector.shape_cast %335 : vector<1x256x64xbf16> to vector<256x64xbf16>
    %337 = arith.truncf %334 : vector<10x256xf32> to vector<10x256xbf16>
    %cst_148 = arith.constant dense<0.000000e+00> : vector<10x64xf32>
    %338 = tpu.matmul %337, %336, %cst_148 {dimension_numbers = #tpu.dot_dimension_numbers<[1], [0], [0], [1], [0, 0, 1, 1], [], []>} : vector<10x256xbf16>, vector<256x64xbf16>, vector<10x64xf32> -> vector<10x64xf32>
    %339 = arith.addf %292, %338 : vector<10x64xf32>
    %c1_149 = arith.constant 1 : index
    %c0_150 = arith.constant 0 : index
    %c0_151 = arith.constant 0 : index
    %340 = vector.load %arg17[%c1_149, %c0_150, %c0_151] : memref<2x1x64xf32, #tpu.memory_space<vmem>>, vector<1x1x64xf32>
    %341 = vector.shape_cast %340 : vector<1x1x64xf32> to vector<1x64xf32>
    %342 = vector.broadcast %341 : vector<1x64xf32> to vector<10x64xf32>
    %343 = arith.addf %339, %342 : vector<10x64xf32>
    %cst_152 = arith.constant dense<0.000000e+00> : vector<2x64xf32>
    %344 = tpu.matmul %30, %343, %cst_152 {dimension_numbers = #tpu.dot_dimension_numbers<[1], [0], [0], [1], [0, 0, 1, 1], [], []>} : vector<2x10xf32>, vector<10x64xf32>, vector<2x64xf32> -> vector<2x64xf32>
    %cst_153 = arith.constant dense<0.000000e+00> : vector<2xf32>
    %345 = vector.multi_reduction <add>, %344, %cst_153 [1] : vector<2x64xf32> to vector<2xf32>
    %346 = vector.shape_cast %345 : vector<2xf32> to vector<2x1xf32>
    %cst_154 = arith.constant 6.400000e+01 : f32
    %347 = vector.broadcast %cst_154 : f32 to vector<2x1xf32>
    %348 = arith.divf %346, %347 : vector<2x1xf32>
    %349 = vector.broadcast %348 : vector<2x1xf32> to vector<2x64xf32>
    %350 = arith.subf %344, %349 : vector<2x64xf32>
    %351 = arith.mulf %350, %350 : vector<2x64xf32>
    %cst_155 = arith.constant dense<0.000000e+00> : vector<2xf32>
    %352 = vector.multi_reduction <add>, %351, %cst_155 [1] : vector<2x64xf32> to vector<2xf32>
    %353 = vector.shape_cast %352 : vector<2xf32> to vector<2x1xf32>
    %cst_156 = arith.constant 6.400000e+01 : f32
    %354 = vector.broadcast %cst_156 : f32 to vector<2x1xf32>
    %355 = arith.divf %353, %354 : vector<2x1xf32>
    %356 = vector.broadcast %348 : vector<2x1xf32> to vector<2x64xf32>
    %357 = arith.subf %344, %356 : vector<2x64xf32>
    %cst_157 = arith.constant 9.99999974E-6 : f32
    %358 = vector.broadcast %cst_157 : f32 to vector<2x1xf32>
    %359 = arith.addf %355, %358 : vector<2x1xf32>
    %360 = math.rsqrt %359 : vector<2x1xf32>
    %361 = vector.broadcast %360 : vector<2x1xf32> to vector<2x64xf32>
    %362 = arith.mulf %357, %361 : vector<2x64xf32>
    %363 = vector.broadcast %31 : vector<1x64xf32> to vector<2x64xf32>
    %364 = arith.mulf %362, %363 : vector<2x64xf32>
    %365 = vector.broadcast %32 : vector<1x64xf32> to vector<2x64xf32>
    %366 = arith.addf %364, %365 : vector<2x64xf32>
    %367 = arith.truncf %366 : vector<2x64xf32> to vector<2x64xbf16>
    %cst_158 = arith.constant dense<0.000000e+00> : vector<2x32xf32>
    %368 = tpu.matmul %367, %33, %cst_158 {dimension_numbers = #tpu.dot_dimension_numbers<[1], [0], [0], [1], [0, 0, 1, 1], [], []>} : vector<2x64xbf16>, vector<64x32xbf16>, vector<2x32xf32> -> vector<2x32xf32>
    %369 = arith.mulf %368, %368 : vector<2x32xf32>
    %cst_159 = arith.constant dense<0.000000e+00> : vector<2xf32>
    %370 = vector.multi_reduction <add>, %369, %cst_159 [1] : vector<2x32xf32> to vector<2xf32>
    %371 = vector.shape_cast %370 : vector<2xf32> to vector<2x1xf32>
    %cst_160 = arith.constant 9.99999996E-13 : f32
    %372 = vector.broadcast %cst_160 : f32 to vector<2x1xf32>
    %373 = arith.addf %371, %372 : vector<2x1xf32>
    %374 = math.rsqrt %373 : vector<2x1xf32>
    %375 = vector.broadcast %374 : vector<2x1xf32> to vector<2x32xf32>
    %376 = arith.mulf %368, %375 : vector<2x32xf32>
    %c0_161 = arith.constant 0 : index
    %c0_162 = arith.constant 0 : index
    %377 = vector.load %arg21[%c0_161, %c0_162] : memref<2x32xf32, #tpu.memory_space<vmem>>, vector<2x32xf32>
    tpu.vector_store %arg21[%c0_161, %c0_162], %376 {strides = array<i32>} : memref<2x32xf32, #tpu.memory_space<vmem>>, vector<2x32xf32>,
    return
  }
}

module attributes {stable_mosaic.version = 11 : i64} {
  func.func @_text_kernel(%arg0: memref<16x64xf32, #tpu.memory_space<vmem>>, %arg1: memref<2x16xf32, #tpu.memory_space<vmem>>, %arg2: memref<2x1x64xf32, #tpu.memory_space<vmem>>, %arg3: memref<2x1x64xf32, #tpu.memory_space<vmem>>, %arg4: memref<2x64x192xbf16, #tpu.memory_space<vmem>>, %arg5: memref<2x1x192xf32, #tpu.memory_space<vmem>>, %arg6: memref<2x64x64xbf16, #tpu.memory_space<vmem>>, %arg7: memref<2x1x64xf32, #tpu.memory_space<vmem>>, %arg8: memref<2x1x64xf32, #tpu.memory_space<vmem>>, %arg9: memref<2x1x64xf32, #tpu.memory_space<vmem>>, %arg10: memref<2x64x256xbf16, #tpu.memory_space<vmem>>, %arg11: memref<2x1x256xf32, #tpu.memory_space<vmem>>, %arg12: memref<2x256x64xbf16, #tpu.memory_space<vmem>>, %arg13: memref<2x1x64xf32, #tpu.memory_space<vmem>>, %arg14: memref<1x64xf32, #tpu.memory_space<vmem>>, %arg15: memref<1x64xf32, #tpu.memory_space<vmem>>, %arg16: memref<64x32xbf16, #tpu.memory_space<vmem>>, %arg17: memref<2x32xf32, #tpu.memory_space<vmem>>) attributes {dimension_semantics = [], scalar_prefetch = 0 : i64, scratch_operands = 0 : i64, tpu.core_type = #tpu.core_type<tc>} {
    %c0 = arith.constant 0 : index
    %c0_0 = arith.constant 0 : index
    %0 = vector.load %arg0[%c0, %c0_0] : memref<16x64xf32, #tpu.memory_space<vmem>>, vector<16x64xf32>
    %c0_1 = arith.constant 0 : index
    %c0_2 = arith.constant 0 : index
    %1 = vector.load %arg1[%c0_1, %c0_2] : memref<2x16xf32, #tpu.memory_space<vmem>>, vector<2x16xf32>
    %c0_3 = arith.constant 0 : index
    %c0_4 = arith.constant 0 : index
    %2 = vector.load %arg14[%c0_3, %c0_4] : memref<1x64xf32, #tpu.memory_space<vmem>>, vector<1x64xf32>
    %c0_5 = arith.constant 0 : index
    %c0_6 = arith.constant 0 : index
    %3 = vector.load %arg15[%c0_5, %c0_6] : memref<1x64xf32, #tpu.memory_space<vmem>>, vector<1x64xf32>
    %c0_7 = arith.constant 0 : index
    %c0_8 = arith.constant 0 : index
    %4 = vector.load %arg16[%c0_7, %c0_8] : memref<64x32xbf16, #tpu.memory_space<vmem>>, vector<64x32xbf16>
    %5 = tpu.iota {dimensions = array<i32: 0>} : vector<16x16xi32>
    %6 = tpu.iota {dimensions = array<i32: 1>} : vector<16x16xi32>
    %c0_i32 = arith.constant 0 : i32
    %7 = vector.broadcast %c0_i32 : i32 to vector<16x16xi32>
    %8 = arith.cmpi sge, %5, %7 : vector<16x16xi32>
    %c8_i32 = arith.constant 8 : i32
    %9 = vector.broadcast %c8_i32 : i32 to vector<16x16xi32>
    %10 = arith.cmpi slt, %5, %9 : vector<16x16xi32>
    %11 = arith.andi %8, %10 : vector<16x16xi1>
    %c0_i32_9 = arith.constant 0 : i32
    %12 = vector.broadcast %c0_i32_9 : i32 to vector<16x16xi32>
    %13 = arith.cmpi sge, %6, %12 : vector<16x16xi32>
    %14 = arith.andi %11, %13 : vector<16x16xi1>
    %c8_i32_10 = arith.constant 8 : i32
    %15 = vector.broadcast %c8_i32_10 : i32 to vector<16x16xi32>
    %16 = arith.cmpi slt, %6, %15 : vector<16x16xi32>
    %17 = arith.andi %14, %16 : vector<16x16xi1>
    %c8_i32_11 = arith.constant 8 : i32
    %18 = vector.broadcast %c8_i32_11 : i32 to vector<16x16xi32>
    %19 = arith.cmpi sge, %5, %18 : vector<16x16xi32>
    %c16_i32 = arith.constant 16 : i32
    %20 = vector.broadcast %c16_i32 : i32 to vector<16x16xi32>
    %21 = arith.cmpi slt, %5, %20 : vector<16x16xi32>
    %22 = arith.andi %19, %21 : vector<16x16xi1>
    %c8_i32_12 = arith.constant 8 : i32
    %23 = vector.broadcast %c8_i32_12 : i32 to vector<16x16xi32>
    %24 = arith.cmpi sge, %6, %23 : vector<16x16xi32>
    %25 = arith.andi %22, %24 : vector<16x16xi1>
    %c16_i32_13 = arith.constant 16 : i32
    %26 = vector.broadcast %c16_i32_13 : i32 to vector<16x16xi32>
    %27 = arith.cmpi slt, %6, %26 : vector<16x16xi32>
    %28 = arith.andi %25, %27 : vector<16x16xi1>
    %29 = arith.ori %17, %28 : vector<16x16xi1>
    %30 = arith.cmpi sle, %6, %5 : vector<16x16xi32>
    %31 = arith.andi %29, %30 : vector<16x16xi1>
    %cst = arith.constant 0.000000e+00 : f32
    %cst_14 = arith.constant -1.000000e+09 : f32
    %32 = vector.broadcast %cst : f32 to vector<16x16xf32>
    %33 = vector.broadcast %cst_14 : f32 to vector<16x16xf32>
    %34 = arith.select %31, %32, %33 : vector<16x16xi1>, vector<16x16xf32>
    %c0_15 = arith.constant 0 : index
    %c0_16 = arith.constant 0 : index
    %c0_17 = arith.constant 0 : index
    %35 = vector.load %arg2[%c0_15, %c0_16, %c0_17] : memref<2x1x64xf32, #tpu.memory_space<vmem>>, vector<1x1x64xf32>
    %36 = vector.shape_cast %35 : vector<1x1x64xf32> to vector<1x64xf32>
    %c0_18 = arith.constant 0 : index
    %c0_19 = arith.constant 0 : index
    %c0_20 = arith.constant 0 : index
    %37 = vector.load %arg3[%c0_18, %c0_19, %c0_20] : memref<2x1x64xf32, #tpu.memory_space<vmem>>, vector<1x1x64xf32>
    %38 = vector.shape_cast %37 : vector<1x1x64xf32> to vector<1x64xf32>
    %cst_21 = arith.constant dense<0.000000e+00> : vector<16xf32>
    %39 = vector.multi_reduction <add>, %0, %cst_21 [1] : vector<16x64xf32> to vector<16xf32>
    %40 = vector.shape_cast %39 : vector<16xf32> to vector<16x1xf32>
    %cst_22 = arith.constant 6.400000e+01 : f32
    %41 = vector.broadcast %cst_22 : f32 to vector<16x1xf32>
    %42 = arith.divf %40, %41 : vector<16x1xf32>
    %43 = vector.broadcast %42 : vector<16x1xf32> to vector<16x64xf32>
    %44 = arith.subf %0, %43 : vector<16x64xf32>
    %45 = arith.mulf %44, %44 : vector<16x64xf32>
    %cst_23 = arith.constant dense<0.000000e+00> : vector<16xf32>
    %46 = vector.multi_reduction <add>, %45, %cst_23 [1] : vector<16x64xf32> to vector<16xf32>
    %47 = vector.shape_cast %46 : vector<16xf32> to vector<16x1xf32>
    %cst_24 = arith.constant 6.400000e+01 : f32
    %48 = vector.broadcast %cst_24 : f32 to vector<16x1xf32>
    %49 = arith.divf %47, %48 : vector<16x1xf32>
    %50 = vector.broadcast %42 : vector<16x1xf32> to vector<16x64xf32>
    %51 = arith.subf %0, %50 : vector<16x64xf32>
    %cst_25 = arith.constant 9.99999974E-6 : f32
    %52 = vector.broadcast %cst_25 : f32 to vector<16x1xf32>
    %53 = arith.addf %49, %52 : vector<16x1xf32>
    %54 = math.rsqrt %53 : vector<16x1xf32>
    %55 = vector.broadcast %54 : vector<16x1xf32> to vector<16x64xf32>
    %56 = arith.mulf %51, %55 : vector<16x64xf32>
    %57 = vector.broadcast %36 : vector<1x64xf32> to vector<16x64xf32>
    %58 = arith.mulf %56, %57 : vector<16x64xf32>
    %59 = vector.broadcast %38 : vector<1x64xf32> to vector<16x64xf32>
    %60 = arith.addf %58, %59 : vector<16x64xf32>
    %c0_26 = arith.constant 0 : index
    %c0_27 = arith.constant 0 : index
    %c0_28 = arith.constant 0 : index
    %61 = vector.load %arg4[%c0_26, %c0_27, %c0_28] : memref<2x64x192xbf16, #tpu.memory_space<vmem>>, vector<1x64x192xbf16>
    %62 = vector.shape_cast %61 : vector<1x64x192xbf16> to vector<64x192xbf16>
    %63 = arith.truncf %60 : vector<16x64xf32> to vector<16x64xbf16>
    %cst_29 = arith.constant dense<0.000000e+00> : vector<16x192xf32>
    %64 = tpu.matmul %63, %62, %cst_29 {dimension_numbers = #tpu.dot_dimension_numbers<[1], [0], [0], [1], [0, 0, 1, 1], [], []>} : vector<16x64xbf16>, vector<64x192xbf16>, vector<16x192xf32> -> vector<16x192xf32>
    %c0_30 = arith.constant 0 : index
    %c0_31 = arith.constant 0 : index
    %c0_32 = arith.constant 0 : index
    %65 = vector.load %arg5[%c0_30, %c0_31, %c0_32] : memref<2x1x192xf32, #tpu.memory_space<vmem>>, vector<1x1x192xf32>
    %66 = vector.shape_cast %65 : vector<1x1x192xf32> to vector<1x192xf32>
    %67 = vector.broadcast %66 : vector<1x192xf32> to vector<16x192xf32>
    %68 = arith.addf %64, %67 : vector<16x192xf32>
    %c0_33 = arith.constant 0 : index
    %c0_34 = arith.constant 0 : index
    %c0_35 = arith.constant 0 : index
    %69 = vector.load %arg6[%c0_33, %c0_34, %c0_35] : memref<2x64x64xbf16, #tpu.memory_space<vmem>>, vector<1x64x64xbf16>
    %70 = vector.shape_cast %69 : vector<1x64x64xbf16> to vector<64x64xbf16>
    %cst_36 = arith.constant 0.000000e+00 : f32
    %71 = vector.broadcast %cst_36 : f32 to vector<16x64xf32>
    %72 = vector.extract_strided_slice %68 {offsets = [0, 0], sizes = [16, 32], strides = [1, 1]} : vector<16x192xf32> to vector<16x32xf32>
    %73 = vector.extract_strided_slice %68 {offsets = [0, 64], sizes = [16, 32], strides = [1, 1]} : vector<16x192xf32> to vector<16x32xf32>
    %74 = vector.extract_strided_slice %68 {offsets = [0, 128], sizes = [16, 32], strides = [1, 1]} : vector<16x192xf32> to vector<16x32xf32>
    %75 = arith.truncf %72 : vector<16x32xf32> to vector<16x32xbf16>
    %76 = arith.truncf %73 : vector<16x32xf32> to vector<16x32xbf16>
    %cst_37 = arith.constant dense<0.000000e+00> : vector<16x16xf32>
    %77 = tpu.matmul %75, %76, %cst_37 {dimension_numbers = #tpu.dot_dimension_numbers<[1], [1], [0], [0], [0, 0, 1, 0], [], []>} : vector<16x32xbf16>, vector<16x32xbf16>, vector<16x16xf32> -> vector<16x16xf32>
    %78 = arith.addf %77, %34 : vector<16x16xf32>
    %cst_38 = arith.constant dense<0xFF800000> : vector<16xf32>
    %79 = vector.multi_reduction <maximumf>, %78, %cst_38 [1] : vector<16x16xf32> to vector<16xf32>
    %80 = vector.shape_cast %79 : vector<16xf32> to vector<16x1xf32>
    %81 = vector.broadcast %80 : vector<16x1xf32> to vector<16x16xf32>
    %82 = arith.subf %78, %81 : vector<16x16xf32>
    %83 = math.exp %82 : vector<16x16xf32>
    %cst_39 = arith.constant dense<0.000000e+00> : vector<16xf32>
    %84 = vector.multi_reduction <add>, %83, %cst_39 [1] : vector<16x16xf32> to vector<16xf32>
    %85 = vector.shape_cast %84 : vector<16xf32> to vector<16x1xf32>
    %86 = tpu.reciprocal %85 {approx = true} : vector<16x1xf32> -> vector<16x1xf32>
    %87 = vector.broadcast %86 : vector<16x1xf32> to vector<16x16xf32>
    %88 = arith.mulf %83, %87 : vector<16x16xf32>
    %89 = arith.truncf %88 : vector<16x16xf32> to vector<16x16xbf16>
    %90 = arith.truncf %74 : vector<16x32xf32> to vector<16x32xbf16>
    %cst_40 = arith.constant dense<0.000000e+00> : vector<16x32xf32>
    %91 = tpu.matmul %89, %90, %cst_40 {dimension_numbers = #tpu.dot_dimension_numbers<[1], [0], [0], [1], [0, 0, 1, 1], [], []>} : vector<16x16xbf16>, vector<16x32xbf16>, vector<16x32xf32> -> vector<16x32xf32>
    %92 = vector.extract_strided_slice %70 {offsets = [0, 0], sizes = [32, 64], strides = [1, 1]} : vector<64x64xbf16> to vector<32x64xbf16>
    %93 = arith.truncf %91 : vector<16x32xf32> to vector<16x32xbf16>
    %cst_41 = arith.constant dense<0.000000e+00> : vector<16x64xf32>
    %94 = tpu.matmul %93, %92, %cst_41 {dimension_numbers = #tpu.dot_dimension_numbers<[1], [0], [0], [1], [0, 0, 1, 1], [], []>} : vector<16x32xbf16>, vector<32x64xbf16>, vector<16x64xf32> -> vector<16x64xf32>
    %95 = arith.addf %71, %94 : vector<16x64xf32>
    %96 = vector.extract_strided_slice %68 {offsets = [0, 32], sizes = [16, 32], strides = [1, 1]} : vector<16x192xf32> to vector<16x32xf32>
    %97 = vector.extract_strided_slice %68 {offsets = [0, 96], sizes = [16, 32], strides = [1, 1]} : vector<16x192xf32> to vector<16x32xf32>
    %98 = vector.extract_strided_slice %68 {offsets = [0, 160], sizes = [16, 32], strides = [1, 1]} : vector<16x192xf32> to vector<16x32xf32>
    %99 = arith.truncf %96 : vector<16x32xf32> to vector<16x32xbf16>
    %100 = arith.truncf %97 : vector<16x32xf32> to vector<16x32xbf16>
    %cst_42 = arith.constant dense<0.000000e+00> : vector<16x16xf32>
    %101 = tpu.matmul %99, %100, %cst_42 {dimension_numbers = #tpu.dot_dimension_numbers<[1], [1], [0], [0], [0, 0, 1, 0], [], []>} : vector<16x32xbf16>, vector<16x32xbf16>, vector<16x16xf32> -> vector<16x16xf32>
    %102 = arith.addf %101, %34 : vector<16x16xf32>
    %cst_43 = arith.constant dense<0xFF800000> : vector<16xf32>
    %103 = vector.multi_reduction <maximumf>, %102, %cst_43 [1] : vector<16x16xf32> to vector<16xf32>
    %104 = vector.shape_cast %103 : vector<16xf32> to vector<16x1xf32>
    %105 = vector.broadcast %104 : vector<16x1xf32> to vector<16x16xf32>
    %106 = arith.subf %102, %105 : vector<16x16xf32>
    %107 = math.exp %106 : vector<16x16xf32>
    %cst_44 = arith.constant dense<0.000000e+00> : vector<16xf32>
    %108 = vector.multi_reduction <add>, %107, %cst_44 [1] : vector<16x16xf32> to vector<16xf32>
    %109 = vector.shape_cast %108 : vector<16xf32> to vector<16x1xf32>
    %110 = tpu.reciprocal %109 {approx = true} : vector<16x1xf32> -> vector<16x1xf32>
    %111 = vector.broadcast %110 : vector<16x1xf32> to vector<16x16xf32>
    %112 = arith.mulf %107, %111 : vector<16x16xf32>
    %113 = arith.truncf %112 : vector<16x16xf32> to vector<16x16xbf16>
    %114 = arith.truncf %98 : vector<16x32xf32> to vector<16x32xbf16>
    %cst_45 = arith.constant dense<0.000000e+00> : vector<16x32xf32>
    %115 = tpu.matmul %113, %114, %cst_45 {dimension_numbers = #tpu.dot_dimension_numbers<[1], [0], [0], [1], [0, 0, 1, 1], [], []>} : vector<16x16xbf16>, vector<16x32xbf16>, vector<16x32xf32> -> vector<16x32xf32>
    %116 = vector.extract_strided_slice %70 {offsets = [32, 0], sizes = [32, 64], strides = [1, 1]} : vector<64x64xbf16> to vector<32x64xbf16>
    %117 = arith.truncf %115 : vector<16x32xf32> to vector<16x32xbf16>
    %cst_46 = arith.constant dense<0.000000e+00> : vector<16x64xf32>
    %118 = tpu.matmul %117, %116, %cst_46 {dimension_numbers = #tpu.dot_dimension_numbers<[1], [0], [0], [1], [0, 0, 1, 1], [], []>} : vector<16x32xbf16>, vector<32x64xbf16>, vector<16x64xf32> -> vector<16x64xf32>
    %119 = arith.addf %95, %118 : vector<16x64xf32>
    %120 = arith.addf %0, %119 : vector<16x64xf32>
    %c0_47 = arith.constant 0 : index
    %c0_48 = arith.constant 0 : index
    %c0_49 = arith.constant 0 : index
    %121 = vector.load %arg7[%c0_47, %c0_48, %c0_49] : memref<2x1x64xf32, #tpu.memory_space<vmem>>, vector<1x1x64xf32>
    %122 = vector.shape_cast %121 : vector<1x1x64xf32> to vector<1x64xf32>
    %123 = vector.broadcast %122 : vector<1x64xf32> to vector<16x64xf32>
    %124 = arith.addf %120, %123 : vector<16x64xf32>
    %c0_50 = arith.constant 0 : index
    %c0_51 = arith.constant 0 : index
    %c0_52 = arith.constant 0 : index
    %125 = vector.load %arg8[%c0_50, %c0_51, %c0_52] : memref<2x1x64xf32, #tpu.memory_space<vmem>>, vector<1x1x64xf32>
    %126 = vector.shape_cast %125 : vector<1x1x64xf32> to vector<1x64xf32>
    %c0_53 = arith.constant 0 : index
    %c0_54 = arith.constant 0 : index
    %c0_55 = arith.constant 0 : index
    %127 = vector.load %arg9[%c0_53, %c0_54, %c0_55] : memref<2x1x64xf32, #tpu.memory_space<vmem>>, vector<1x1x64xf32>
    %128 = vector.shape_cast %127 : vector<1x1x64xf32> to vector<1x64xf32>
    %cst_56 = arith.constant dense<0.000000e+00> : vector<16xf32>
    %129 = vector.multi_reduction <add>, %124, %cst_56 [1] : vector<16x64xf32> to vector<16xf32>
    %130 = vector.shape_cast %129 : vector<16xf32> to vector<16x1xf32>
    %cst_57 = arith.constant 6.400000e+01 : f32
    %131 = vector.broadcast %cst_57 : f32 to vector<16x1xf32>
    %132 = arith.divf %130, %131 : vector<16x1xf32>
    %133 = vector.broadcast %132 : vector<16x1xf32> to vector<16x64xf32>
    %134 = arith.subf %124, %133 : vector<16x64xf32>
    %135 = arith.mulf %134, %134 : vector<16x64xf32>
    %cst_58 = arith.constant dense<0.000000e+00> : vector<16xf32>
    %136 = vector.multi_reduction <add>, %135, %cst_58 [1] : vector<16x64xf32> to vector<16xf32>
    %137 = vector.shape_cast %136 : vector<16xf32> to vector<16x1xf32>
    %cst_59 = arith.constant 6.400000e+01 : f32
    %138 = vector.broadcast %cst_59 : f32 to vector<16x1xf32>
    %139 = arith.divf %137, %138 : vector<16x1xf32>
    %140 = vector.broadcast %132 : vector<16x1xf32> to vector<16x64xf32>
    %141 = arith.subf %124, %140 : vector<16x64xf32>
    %cst_60 = arith.constant 9.99999974E-6 : f32
    %142 = vector.broadcast %cst_60 : f32 to vector<16x1xf32>
    %143 = arith.addf %139, %142 : vector<16x1xf32>
    %144 = math.rsqrt %143 : vector<16x1xf32>
    %145 = vector.broadcast %144 : vector<16x1xf32> to vector<16x64xf32>
    %146 = arith.mulf %141, %145 : vector<16x64xf32>
    %147 = vector.broadcast %126 : vector<1x64xf32> to vector<16x64xf32>
    %148 = arith.mulf %146, %147 : vector<16x64xf32>
    %149 = vector.broadcast %128 : vector<1x64xf32> to vector<16x64xf32>
    %150 = arith.addf %148, %149 : vector<16x64xf32>
    %c0_61 = arith.constant 0 : index
    %c0_62 = arith.constant 0 : index
    %c0_63 = arith.constant 0 : index
    %151 = vector.load %arg10[%c0_61, %c0_62, %c0_63] : memref<2x64x256xbf16, #tpu.memory_space<vmem>>, vector<1x64x256xbf16>
    %152 = vector.shape_cast %151 : vector<1x64x256xbf16> to vector<64x256xbf16>
    %153 = arith.truncf %150 : vector<16x64xf32> to vector<16x64xbf16>
    %cst_64 = arith.constant dense<0.000000e+00> : vector<16x256xf32>
    %154 = tpu.matmul %153, %152, %cst_64 {dimension_numbers = #tpu.dot_dimension_numbers<[1], [0], [0], [1], [0, 0, 1, 1], [], []>} : vector<16x64xbf16>, vector<64x256xbf16>, vector<16x256xf32> -> vector<16x256xf32>
    %c0_65 = arith.constant 0 : index
    %c0_66 = arith.constant 0 : index
    %c0_67 = arith.constant 0 : index
    %155 = vector.load %arg11[%c0_65, %c0_66, %c0_67] : memref<2x1x256xf32, #tpu.memory_space<vmem>>, vector<1x1x256xf32>
    %156 = vector.shape_cast %155 : vector<1x1x256xf32> to vector<1x256xf32>
    %157 = vector.broadcast %156 : vector<1x256xf32> to vector<16x256xf32>
    %158 = arith.addf %154, %157 : vector<16x256xf32>
    %cst_68 = arith.constant 1.702000e+00 : f32
    %159 = vector.broadcast %cst_68 : f32 to vector<16x256xf32>
    %160 = arith.mulf %159, %158 : vector<16x256xf32>
    %161 = arith.negf %160 : vector<16x256xf32>
    %162 = math.exp %161 : vector<16x256xf32>
    %cst_69 = arith.constant 1.000000e+00 : f32
    %163 = vector.broadcast %cst_69 : f32 to vector<16x256xf32>
    %164 = arith.addf %163, %162 : vector<16x256xf32>
    %165 = arith.divf %163, %164 : vector<16x256xf32>
    %166 = arith.mulf %158, %165 : vector<16x256xf32>
    %c0_70 = arith.constant 0 : index
    %c0_71 = arith.constant 0 : index
    %c0_72 = arith.constant 0 : index
    %167 = vector.load %arg12[%c0_70, %c0_71, %c0_72] : memref<2x256x64xbf16, #tpu.memory_space<vmem>>, vector<1x256x64xbf16>
    %168 = vector.shape_cast %167 : vector<1x256x64xbf16> to vector<256x64xbf16>
    %169 = arith.truncf %166 : vector<16x256xf32> to vector<16x256xbf16>
    %cst_73 = arith.constant dense<0.000000e+00> : vector<16x64xf32>
    %170 = tpu.matmul %169, %168, %cst_73 {dimension_numbers = #tpu.dot_dimension_numbers<[1], [0], [0], [1], [0, 0, 1, 1], [], []>} : vector<16x256xbf16>, vector<256x64xbf16>, vector<16x64xf32> -> vector<16x64xf32>
    %171 = arith.addf %124, %170 : vector<16x64xf32>
    %c0_74 = arith.constant 0 : index
    %c0_75 = arith.constant 0 : index
    %c0_76 = arith.constant 0 : index
    %172 = vector.load %arg13[%c0_74, %c0_75, %c0_76] : memref<2x1x64xf32, #tpu.memory_space<vmem>>, vector<1x1x64xf32>
    %173 = vector.shape_cast %172 : vector<1x1x64xf32> to vector<1x64xf32>
    %174 = vector.broadcast %173 : vector<1x64xf32> to vector<16x64xf32>
    %175 = arith.addf %171, %174 : vector<16x64xf32>
    %c1 = arith.constant 1 : index
    %c0_77 = arith.constant 0 : index
    %c0_78 = arith.constant 0 : index
    %176 = vector.load %arg2[%c1, %c0_77, %c0_78] : memref<2x1x64xf32, #tpu.memory_space<vmem>>, vector<1x1x64xf32>
    %177 = vector.shape_cast %176 : vector<1x1x64xf32> to vector<1x64xf32>
    %c1_79 = arith.constant 1 : index
    %c0_80 = arith.constant 0 : index
    %c0_81 = arith.constant 0 : index
    %178 = vector.load %arg3[%c1_79, %c0_80, %c0_81] : memref<2x1x64xf32, #tpu.memory_space<vmem>>, vector<1x1x64xf32>
    %179 = vector.shape_cast %178 : vector<1x1x64xf32> to vector<1x64xf32>
    %cst_82 = arith.constant dense<0.000000e+00> : vector<16xf32>
    %180 = vector.multi_reduction <add>, %175, %cst_82 [1] : vector<16x64xf32> to vector<16xf32>
    %181 = vector.shape_cast %180 : vector<16xf32> to vector<16x1xf32>
    %cst_83 = arith.constant 6.400000e+01 : f32
    %182 = vector.broadcast %cst_83 : f32 to vector<16x1xf32>
    %183 = arith.divf %181, %182 : vector<16x1xf32>
    %184 = vector.broadcast %183 : vector<16x1xf32> to vector<16x64xf32>
    %185 = arith.subf %175, %184 : vector<16x64xf32>
    %186 = arith.mulf %185, %185 : vector<16x64xf32>
    %cst_84 = arith.constant dense<0.000000e+00> : vector<16xf32>
    %187 = vector.multi_reduction <add>, %186, %cst_84 [1] : vector<16x64xf32> to vector<16xf32>
    %188 = vector.shape_cast %187 : vector<16xf32> to vector<16x1xf32>
    %cst_85 = arith.constant 6.400000e+01 : f32
    %189 = vector.broadcast %cst_85 : f32 to vector<16x1xf32>
    %190 = arith.divf %188, %189 : vector<16x1xf32>
    %191 = vector.broadcast %183 : vector<16x1xf32> to vector<16x64xf32>
    %192 = arith.subf %175, %191 : vector<16x64xf32>
    %cst_86 = arith.constant 9.99999974E-6 : f32
    %193 = vector.broadcast %cst_86 : f32 to vector<16x1xf32>
    %194 = arith.addf %190, %193 : vector<16x1xf32>
    %195 = math.rsqrt %194 : vector<16x1xf32>
    %196 = vector.broadcast %195 : vector<16x1xf32> to vector<16x64xf32>
    %197 = arith.mulf %192, %196 : vector<16x64xf32>
    %198 = vector.broadcast %177 : vector<1x64xf32> to vector<16x64xf32>
    %199 = arith.mulf %197, %198 : vector<16x64xf32>
    %200 = vector.broadcast %179 : vector<1x64xf32> to vector<16x64xf32>
    %201 = arith.addf %199, %200 : vector<16x64xf32>
    %c1_87 = arith.constant 1 : index
    %c0_88 = arith.constant 0 : index
    %c0_89 = arith.constant 0 : index
    %202 = vector.load %arg4[%c1_87, %c0_88, %c0_89] : memref<2x64x192xbf16, #tpu.memory_space<vmem>>, vector<1x64x192xbf16>
    %203 = vector.shape_cast %202 : vector<1x64x192xbf16> to vector<64x192xbf16>
    %204 = arith.truncf %201 : vector<16x64xf32> to vector<16x64xbf16>
    %cst_90 = arith.constant dense<0.000000e+00> : vector<16x192xf32>
    %205 = tpu.matmul %204, %203, %cst_90 {dimension_numbers = #tpu.dot_dimension_numbers<[1], [0], [0], [1], [0, 0, 1, 1], [], []>} : vector<16x64xbf16>, vector<64x192xbf16>, vector<16x192xf32> -> vector<16x192xf32>
    %c1_91 = arith.constant 1 : index
    %c0_92 = arith.constant 0 : index
    %c0_93 = arith.constant 0 : index
    %206 = vector.load %arg5[%c1_91, %c0_92, %c0_93] : memref<2x1x192xf32, #tpu.memory_space<vmem>>, vector<1x1x192xf32>
    %207 = vector.shape_cast %206 : vector<1x1x192xf32> to vector<1x192xf32>
    %208 = vector.broadcast %207 : vector<1x192xf32> to vector<16x192xf32>
    %209 = arith.addf %205, %208 : vector<16x192xf32>
    %c1_94 = arith.constant 1 : index
    %c0_95 = arith.constant 0 : index
    %c0_96 = arith.constant 0 : index
    %210 = vector.load %arg6[%c1_94, %c0_95, %c0_96] : memref<2x64x64xbf16, #tpu.memory_space<vmem>>, vector<1x64x64xbf16>
    %211 = vector.shape_cast %210 : vector<1x64x64xbf16> to vector<64x64xbf16>
    %cst_97 = arith.constant 0.000000e+00 : f32
    %212 = vector.broadcast %cst_97 : f32 to vector<16x64xf32>
    %213 = vector.extract_strided_slice %209 {offsets = [0, 0], sizes = [16, 32], strides = [1, 1]} : vector<16x192xf32> to vector<16x32xf32>
    %214 = vector.extract_strided_slice %209 {offsets = [0, 64], sizes = [16, 32], strides = [1, 1]} : vector<16x192xf32> to vector<16x32xf32>
    %215 = vector.extract_strided_slice %209 {offsets = [0, 128], sizes = [16, 32], strides = [1, 1]} : vector<16x192xf32> to vector<16x32xf32>
    %216 = arith.truncf %213 : vector<16x32xf32> to vector<16x32xbf16>
    %217 = arith.truncf %214 : vector<16x32xf32> to vector<16x32xbf16>
    %cst_98 = arith.constant dense<0.000000e+00> : vector<16x16xf32>
    %218 = tpu.matmul %216, %217, %cst_98 {dimension_numbers = #tpu.dot_dimension_numbers<[1], [1], [0], [0], [0, 0, 1, 0], [], []>} : vector<16x32xbf16>, vector<16x32xbf16>, vector<16x16xf32> -> vector<16x16xf32>
    %219 = arith.addf %218, %34 : vector<16x16xf32>
    %cst_99 = arith.constant dense<0xFF800000> : vector<16xf32>
    %220 = vector.multi_reduction <maximumf>, %219, %cst_99 [1] : vector<16x16xf32> to vector<16xf32>
    %221 = vector.shape_cast %220 : vector<16xf32> to vector<16x1xf32>
    %222 = vector.broadcast %221 : vector<16x1xf32> to vector<16x16xf32>
    %223 = arith.subf %219, %222 : vector<16x16xf32>
    %224 = math.exp %223 : vector<16x16xf32>
    %cst_100 = arith.constant dense<0.000000e+00> : vector<16xf32>
    %225 = vector.multi_reduction <add>, %224, %cst_100 [1] : vector<16x16xf32> to vector<16xf32>
    %226 = vector.shape_cast %225 : vector<16xf32> to vector<16x1xf32>
    %227 = tpu.reciprocal %226 {approx = true} : vector<16x1xf32> -> vector<16x1xf32>
    %228 = vector.broadcast %227 : vector<16x1xf32> to vector<16x16xf32>
    %229 = arith.mulf %224, %228 : vector<16x16xf32>
    %230 = arith.truncf %229 : vector<16x16xf32> to vector<16x16xbf16>
    %231 = arith.truncf %215 : vector<16x32xf32> to vector<16x32xbf16>
    %cst_101 = arith.constant dense<0.000000e+00> : vector<16x32xf32>
    %232 = tpu.matmul %230, %231, %cst_101 {dimension_numbers = #tpu.dot_dimension_numbers<[1], [0], [0], [1], [0, 0, 1, 1], [], []>} : vector<16x16xbf16>, vector<16x32xbf16>, vector<16x32xf32> -> vector<16x32xf32>
    %233 = vector.extract_strided_slice %211 {offsets = [0, 0], sizes = [32, 64], strides = [1, 1]} : vector<64x64xbf16> to vector<32x64xbf16>
    %234 = arith.truncf %232 : vector<16x32xf32> to vector<16x32xbf16>
    %cst_102 = arith.constant dense<0.000000e+00> : vector<16x64xf32>
    %235 = tpu.matmul %234, %233, %cst_102 {dimension_numbers = #tpu.dot_dimension_numbers<[1], [0], [0], [1], [0, 0, 1, 1], [], []>} : vector<16x32xbf16>, vector<32x64xbf16>, vector<16x64xf32> -> vector<16x64xf32>
    %236 = arith.addf %212, %235 : vector<16x64xf32>
    %237 = vector.extract_strided_slice %209 {offsets = [0, 32], sizes = [16, 32], strides = [1, 1]} : vector<16x192xf32> to vector<16x32xf32>
    %238 = vector.extract_strided_slice %209 {offsets = [0, 96], sizes = [16, 32], strides = [1, 1]} : vector<16x192xf32> to vector<16x32xf32>
    %239 = vector.extract_strided_slice %209 {offsets = [0, 160], sizes = [16, 32], strides = [1, 1]} : vector<16x192xf32> to vector<16x32xf32>
    %240 = arith.truncf %237 : vector<16x32xf32> to vector<16x32xbf16>
    %241 = arith.truncf %238 : vector<16x32xf32> to vector<16x32xbf16>
    %cst_103 = arith.constant dense<0.000000e+00> : vector<16x16xf32>
    %242 = tpu.matmul %240, %241, %cst_103 {dimension_numbers = #tpu.dot_dimension_numbers<[1], [1], [0], [0], [0, 0, 1, 0], [], []>} : vector<16x32xbf16>, vector<16x32xbf16>, vector<16x16xf32> -> vector<16x16xf32>
    %243 = arith.addf %242, %34 : vector<16x16xf32>
    %cst_104 = arith.constant dense<0xFF800000> : vector<16xf32>
    %244 = vector.multi_reduction <maximumf>, %243, %cst_104 [1] : vector<16x16xf32> to vector<16xf32>
    %245 = vector.shape_cast %244 : vector<16xf32> to vector<16x1xf32>
    %246 = vector.broadcast %245 : vector<16x1xf32> to vector<16x16xf32>
    %247 = arith.subf %243, %246 : vector<16x16xf32>
    %248 = math.exp %247 : vector<16x16xf32>
    %cst_105 = arith.constant dense<0.000000e+00> : vector<16xf32>
    %249 = vector.multi_reduction <add>, %248, %cst_105 [1] : vector<16x16xf32> to vector<16xf32>
    %250 = vector.shape_cast %249 : vector<16xf32> to vector<16x1xf32>
    %251 = tpu.reciprocal %250 {approx = true} : vector<16x1xf32> -> vector<16x1xf32>
    %252 = vector.broadcast %251 : vector<16x1xf32> to vector<16x16xf32>
    %253 = arith.mulf %248, %252 : vector<16x16xf32>
    %254 = arith.truncf %253 : vector<16x16xf32> to vector<16x16xbf16>
    %255 = arith.truncf %239 : vector<16x32xf32> to vector<16x32xbf16>
    %cst_106 = arith.constant dense<0.000000e+00> : vector<16x32xf32>
    %256 = tpu.matmul %254, %255, %cst_106 {dimension_numbers = #tpu.dot_dimension_numbers<[1], [0], [0], [1], [0, 0, 1, 1], [], []>} : vector<16x16xbf16>, vector<16x32xbf16>, vector<16x32xf32> -> vector<16x32xf32>
    %257 = vector.extract_strided_slice %211 {offsets = [32, 0], sizes = [32, 64], strides = [1, 1]} : vector<64x64xbf16> to vector<32x64xbf16>
    %258 = arith.truncf %256 : vector<16x32xf32> to vector<16x32xbf16>
    %cst_107 = arith.constant dense<0.000000e+00> : vector<16x64xf32>
    %259 = tpu.matmul %258, %257, %cst_107 {dimension_numbers = #tpu.dot_dimension_numbers<[1], [0], [0], [1], [0, 0, 1, 1], [], []>} : vector<16x32xbf16>, vector<32x64xbf16>, vector<16x64xf32> -> vector<16x64xf32>
    %260 = arith.addf %236, %259 : vector<16x64xf32>
    %261 = arith.addf %175, %260 : vector<16x64xf32>
    %c1_108 = arith.constant 1 : index
    %c0_109 = arith.constant 0 : index
    %c0_110 = arith.constant 0 : index
    %262 = vector.load %arg7[%c1_108, %c0_109, %c0_110] : memref<2x1x64xf32, #tpu.memory_space<vmem>>, vector<1x1x64xf32>
    %263 = vector.shape_cast %262 : vector<1x1x64xf32> to vector<1x64xf32>
    %264 = vector.broadcast %263 : vector<1x64xf32> to vector<16x64xf32>
    %265 = arith.addf %261, %264 : vector<16x64xf32>
    %c1_111 = arith.constant 1 : index
    %c0_112 = arith.constant 0 : index
    %c0_113 = arith.constant 0 : index
    %266 = vector.load %arg8[%c1_111, %c0_112, %c0_113] : memref<2x1x64xf32, #tpu.memory_space<vmem>>, vector<1x1x64xf32>
    %267 = vector.shape_cast %266 : vector<1x1x64xf32> to vector<1x64xf32>
    %c1_114 = arith.constant 1 : index
    %c0_115 = arith.constant 0 : index
    %c0_116 = arith.constant 0 : index
    %268 = vector.load %arg9[%c1_114, %c0_115, %c0_116] : memref<2x1x64xf32, #tpu.memory_space<vmem>>, vector<1x1x64xf32>
    %269 = vector.shape_cast %268 : vector<1x1x64xf32> to vector<1x64xf32>
    %cst_117 = arith.constant dense<0.000000e+00> : vector<16xf32>
    %270 = vector.multi_reduction <add>, %265, %cst_117 [1] : vector<16x64xf32> to vector<16xf32>
    %271 = vector.shape_cast %270 : vector<16xf32> to vector<16x1xf32>
    %cst_118 = arith.constant 6.400000e+01 : f32
    %272 = vector.broadcast %cst_118 : f32 to vector<16x1xf32>
    %273 = arith.divf %271, %272 : vector<16x1xf32>
    %274 = vector.broadcast %273 : vector<16x1xf32> to vector<16x64xf32>
    %275 = arith.subf %265, %274 : vector<16x64xf32>
    %276 = arith.mulf %275, %275 : vector<16x64xf32>
    %cst_119 = arith.constant dense<0.000000e+00> : vector<16xf32>
    %277 = vector.multi_reduction <add>, %276, %cst_119 [1] : vector<16x64xf32> to vector<16xf32>
    %278 = vector.shape_cast %277 : vector<16xf32> to vector<16x1xf32>
    %cst_120 = arith.constant 6.400000e+01 : f32
    %279 = vector.broadcast %cst_120 : f32 to vector<16x1xf32>
    %280 = arith.divf %278, %279 : vector<16x1xf32>
    %281 = vector.broadcast %273 : vector<16x1xf32> to vector<16x64xf32>
    %282 = arith.subf %265, %281 : vector<16x64xf32>
    %cst_121 = arith.constant 9.99999974E-6 : f32
    %283 = vector.broadcast %cst_121 : f32 to vector<16x1xf32>
    %284 = arith.addf %280, %283 : vector<16x1xf32>
    %285 = math.rsqrt %284 : vector<16x1xf32>
    %286 = vector.broadcast %285 : vector<16x1xf32> to vector<16x64xf32>
    %287 = arith.mulf %282, %286 : vector<16x64xf32>
    %288 = vector.broadcast %267 : vector<1x64xf32> to vector<16x64xf32>
    %289 = arith.mulf %287, %288 : vector<16x64xf32>
    %290 = vector.broadcast %269 : vector<1x64xf32> to vector<16x64xf32>
    %291 = arith.addf %289, %290 : vector<16x64xf32>
    %c1_122 = arith.constant 1 : index
    %c0_123 = arith.constant 0 : index
    %c0_124 = arith.constant 0 : index
    %292 = vector.load %arg10[%c1_122, %c0_123, %c0_124] : memref<2x64x256xbf16, #tpu.memory_space<vmem>>, vector<1x64x256xbf16>
    %293 = vector.shape_cast %292 : vector<1x64x256xbf16> to vector<64x256xbf16>
    %294 = arith.truncf %291 : vector<16x64xf32> to vector<16x64xbf16>
    %cst_125 = arith.constant dense<0.000000e+00> : vector<16x256xf32>
    %295 = tpu.matmul %294, %293, %cst_125 {dimension_numbers = #tpu.dot_dimension_numbers<[1], [0], [0], [1], [0, 0, 1, 1], [], []>} : vector<16x64xbf16>, vector<64x256xbf16>, vector<16x256xf32> -> vector<16x256xf32>
    %c1_126 = arith.constant 1 : index
    %c0_127 = arith.constant 0 : index
    %c0_128 = arith.constant 0 : index
    %296 = vector.load %arg11[%c1_126, %c0_127, %c0_128] : memref<2x1x256xf32, #tpu.memory_space<vmem>>, vector<1x1x256xf32>
    %297 = vector.shape_cast %296 : vector<1x1x256xf32> to vector<1x256xf32>
    %298 = vector.broadcast %297 : vector<1x256xf32> to vector<16x256xf32>
    %299 = arith.addf %295, %298 : vector<16x256xf32>
    %cst_129 = arith.constant 1.702000e+00 : f32
    %300 = vector.broadcast %cst_129 : f32 to vector<16x256xf32>
    %301 = arith.mulf %300, %299 : vector<16x256xf32>
    %302 = arith.negf %301 : vector<16x256xf32>
    %303 = math.exp %302 : vector<16x256xf32>
    %cst_130 = arith.constant 1.000000e+00 : f32
    %304 = vector.broadcast %cst_130 : f32 to vector<16x256xf32>
    %305 = arith.addf %304, %303 : vector<16x256xf32>
    %306 = arith.divf %304, %305 : vector<16x256xf32>
    %307 = arith.mulf %299, %306 : vector<16x256xf32>
    %c1_131 = arith.constant 1 : index
    %c0_132 = arith.constant 0 : index
    %c0_133 = arith.constant 0 : index
    %308 = vector.load %arg12[%c1_131, %c0_132, %c0_133] : memref<2x256x64xbf16, #tpu.memory_space<vmem>>, vector<1x256x64xbf16>
    %309 = vector.shape_cast %308 : vector<1x256x64xbf16> to vector<256x64xbf16>
    %310 = arith.truncf %307 : vector<16x256xf32> to vector<16x256xbf16>
    %cst_134 = arith.constant dense<0.000000e+00> : vector<16x64xf32>
    %311 = tpu.matmul %310, %309, %cst_134 {dimension_numbers = #tpu.dot_dimension_numbers<[1], [0], [0], [1], [0, 0, 1, 1], [], []>} : vector<16x256xbf16>, vector<256x64xbf16>, vector<16x64xf32> -> vector<16x64xf32>
    %312 = arith.addf %265, %311 : vector<16x64xf32>
    %c1_135 = arith.constant 1 : index
    %c0_136 = arith.constant 0 : index
    %c0_137 = arith.constant 0 : index
    %313 = vector.load %arg13[%c1_135, %c0_136, %c0_137] : memref<2x1x64xf32, #tpu.memory_space<vmem>>, vector<1x1x64xf32>
    %314 = vector.shape_cast %313 : vector<1x1x64xf32> to vector<1x64xf32>
    %315 = vector.broadcast %314 : vector<1x64xf32> to vector<16x64xf32>
    %316 = arith.addf %312, %315 : vector<16x64xf32>
    %cst_138 = arith.constant dense<0.000000e+00> : vector<2x64xf32>
    %317 = tpu.matmul %1, %316, %cst_138 {dimension_numbers = #tpu.dot_dimension_numbers<[1], [0], [0], [1], [0, 0, 1, 1], [], []>} : vector<2x16xf32>, vector<16x64xf32>, vector<2x64xf32> -> vector<2x64xf32>
    %cst_139 = arith.constant dense<0.000000e+00> : vector<2xf32>
    %318 = vector.multi_reduction <add>, %317, %cst_139 [1] : vector<2x64xf32> to vector<2xf32>
    %319 = vector.shape_cast %318 : vector<2xf32> to vector<2x1xf32>
    %cst_140 = arith.constant 6.400000e+01 : f32
    %320 = vector.broadcast %cst_140 : f32 to vector<2x1xf32>
    %321 = arith.divf %319, %320 : vector<2x1xf32>
    %322 = vector.broadcast %321 : vector<2x1xf32> to vector<2x64xf32>
    %323 = arith.subf %317, %322 : vector<2x64xf32>
    %324 = arith.mulf %323, %323 : vector<2x64xf32>
    %cst_141 = arith.constant dense<0.000000e+00> : vector<2xf32>
    %325 = vector.multi_reduction <add>, %324, %cst_141 [1] : vector<2x64xf32> to vector<2xf32>
    %326 = vector.shape_cast %325 : vector<2xf32> to vector<2x1xf32>
    %cst_142 = arith.constant 6.400000e+01 : f32
    %327 = vector.broadcast %cst_142 : f32 to vector<2x1xf32>
    %328 = arith.divf %326, %327 : vector<2x1xf32>
    %329 = vector.broadcast %321 : vector<2x1xf32> to vector<2x64xf32>
    %330 = arith.subf %317, %329 : vector<2x64xf32>
    %cst_143 = arith.constant 9.99999974E-6 : f32
    %331 = vector.broadcast %cst_143 : f32 to vector<2x1xf32>
    %332 = arith.addf %328, %331 : vector<2x1xf32>
    %333 = math.rsqrt %332 : vector<2x1xf32>
    %334 = vector.broadcast %333 : vector<2x1xf32> to vector<2x64xf32>
    %335 = arith.mulf %330, %334 : vector<2x64xf32>
    %336 = vector.broadcast %2 : vector<1x64xf32> to vector<2x64xf32>
    %337 = arith.mulf %335, %336 : vector<2x64xf32>
    %338 = vector.broadcast %3 : vector<1x64xf32> to vector<2x64xf32>
    %339 = arith.addf %337, %338 : vector<2x64xf32>
    %340 = arith.truncf %339 : vector<2x64xf32> to vector<2x64xbf16>
    %cst_144 = arith.constant dense<0.000000e+00> : vector<2x32xf32>
    %341 = tpu.matmul %340, %4, %cst_144 {dimension_numbers = #tpu.dot_dimension_numbers<[1], [0], [0], [1], [0, 0, 1, 1], [], []>} : vector<2x64xbf16>, vector<64x32xbf16>, vector<2x32xf32> -> vector<2x32xf32>
    %342 = arith.mulf %341, %341 : vector<2x32xf32>
    %cst_145 = arith.constant dense<0.000000e+00> : vector<2xf32>
    %343 = vector.multi_reduction <add>, %342, %cst_145 [1] : vector<2x32xf32> to vector<2xf32>
    %344 = vector.shape_cast %343 : vector<2xf32> to vector<2x1xf32>
    %cst_146 = arith.constant 9.99999996E-13 : f32
    %345 = vector.broadcast %cst_146 : f32 to vector<2x1xf32>
    %346 = arith.addf %344, %345 : vector<2x1xf32>
    %347 = math.rsqrt %346 : vector<2x1xf32>
    %348 = vector.broadcast %347 : vector<2x1xf32> to vector<2x32xf32>
    %349 = arith.mulf %341, %348 : vector<2x32xf32>
    %c0_147 = arith.constant 0 : index
    %c0_148 = arith.constant 0 : index
    %350 = vector.load %arg17[%c0_147, %c0_148] : memref<2x32xf32, #tpu.memory_space<vmem>>, vector<2x32xf32>
    tpu.vector_store %arg17[%c0_147, %c0_148], %349 {strides = array<i32>} : memref<2x32xf32, #tpu.memory_space<vmem>>, vector<2x32xf32>,
    return
  }
}

</mosaic_0001>

<llo_original>
// kernel: mul.24
$region0: #{mul.24}
  %s0 = inlined_call_operand.vmem [shape: f32[3,64], index: 0, kind: input, shape index: {}]
  %s1 = inlined_call_operand.vmem [shape: f32[192], index: 1, kind: output, shape index: {}]
  $region1: #{mul.24} parent=0
    #allocation0 [shape = 'u8[4096]{0}', space=vmem, size = 0x1000, scoped, tag = 'scoped mem for output reshape']
    #allocation1 [shape = 'u8[4096]{0}', space=vmem, size = 0x1000, scoped, tag = 'scoped mem for input reshape']
    %s3 = sshllo.u32 0, 4
    %v4 = vld [vmem:[%s0] sm:%s3]
    %5 = vst [vmem:[#allocation1] sm:%s3] %v4
    %s6 = smov 3
    %v7 = vld [vmem:[#allocation1] ss:$2 sm:%s6]
    %vm8 = vcmask 523264
    %9 = vst.msk [vmem:[#allocation0] sm:$0x3] %vm8, %v7
    %s10 = scalar_lea.vmem [#allocation1], 1
    %v11 = vld [vmem:[%s10] sm:$0x1]
    %12 = vrot.lane.b32.xlu0 %v11, 64
    %v13 = vpop.permute.xlu0 %12
    %vm14 = vcmask 1048064
    %15 = vst.msk [vmem:[#allocation0] sm:$0x1] %vm14, %v13
    %s17 = sshllo.u32 0, 2
    %v19 = vld [vmem:[#allocation0] sm:%s17]
    %s20 = sshllo.u32 0, 2
    %21 = vst [vmem:[%s1] sm:%s20] %v19

// kernel: tile.9
$region0: #{tile.9}
  %s0 = inlined_call_operand.vmem [shape: f32[2,5,64], index: 0, kind: input, shape index: {}]
  %s1 = inlined_call_operand.vmem [shape: f32[10,64], index: 1, kind: output, shape index: {}]
  %v2 = vld [vmem:[%s0] sm:$0x1f]
  %vm3 = vcmask 523264
  %4 = vst.msk [vmem:[%s1] sm:$0x1f] %vm3, %v2
  %s5 = scalar_lea.vmem %s0, 8
  %v6 = vld [vmem:[%s5] sm:$0x1f]
  %vm7 = vcmask 523264
  %s8 = scalar_lea.vmem %s1, 5
  %9 = vst.msk [vmem:[%s8] sm:$0x1f] %vm7, %v6

// kernel: clip_extractor_forward.2
$region0: #{clip_extractor_forward.2}
  #allocation0 [shape = 'u32[]', space=smem, size = 0x4, offset = 0x4, fixed_abs, tag = 'smem constant byte address 0x4 - core index']
  #allocation1 [shape = 'u32[144,128]{1,0:T(1,128)}', space=vmem, size = 0x12000, scoped, tag = 'internal scratch']
  %s0 = inlined_call_operand.vmem [shape: f32[10,192], index: 0, kind: input, shape index: {}]
  %s1 = inlined_call_operand.vmem [shape: bf16[192,64], index: 1, kind: input, shape index: {}]
  %s2 = inlined_call_operand.vmem [shape: f32[10,64], index: 2, kind: input, shape index: {}]
  %s3 = inlined_call_operand.vmem [shape: f32[1,64], index: 3, kind: input, shape index: {}]
  %s4 = inlined_call_operand.vmem [shape: f32[1,64], index: 4, kind: input, shape index: {}]
  %s5 = inlined_call_operand.vmem [shape: f32[2,10], index: 5, kind: input, shape index: {}]
  %s6 = inlined_call_operand.vmem [shape: f32[2,1,64], index: 6, kind: input, shape index: {}]
  %s7 = inlined_call_operand.vmem [shape: f32[2,1,64], index: 7, kind: input, shape index: {}]
  %s8 = inlined_call_operand.vmem [shape: bf16[2,64,192], index: 8, kind: input, shape index: {}]
  %s9 = inlined_call_operand.vmem [shape: f32[2,1,192], index: 9, kind: input, shape index: {}]
  %s10 = inlined_call_operand.vmem [shape: bf16[2,64,64], index: 10, kind: input, shape index: {}]
  %s11 = inlined_call_operand.vmem [shape: f32[2,1,64], index: 11, kind: input, shape index: {}]
  %s12 = inlined_call_operand.vmem [shape: f32[2,1,64], index: 12, kind: input, shape index: {}]
  %s13 = inlined_call_operand.vmem [shape: f32[2,1,64], index: 13, kind: input, shape index: {}]
  %s14 = inlined_call_operand.vmem [shape: bf16[2,64,256], index: 14, kind: input, shape index: {}]
  %s15 = inlined_call_operand.vmem [shape: f32[2,1,256], index: 15, kind: input, shape index: {}]
  %s16 = inlined_call_operand.vmem [shape: bf16[2,256,64], index: 16, kind: input, shape index: {}]
  %s17 = inlined_call_operand.vmem [shape: f32[2,1,64], index: 17, kind: input, shape index: {}]
  %s18 = inlined_call_operand.vmem [shape: f32[1,64], index: 18, kind: input, shape index: {}]
  %s19 = inlined_call_operand.vmem [shape: f32[1,64], index: 19, kind: input, shape index: {}]
  %s20 = inlined_call_operand.vmem [shape: bf16[64,32], index: 20, kind: input, shape index: {}]
  %s21 = inlined_call_operand.hbm [shape: f32[2,32], index: 21, kind: output, shape index: {}]
  %s22 = sld [smem:[#allocation0]]
  $region94: #{clip_extractor_forward.2} parent=0
    _
  %s24 = ssub.s32 1, %s22
  %s25 = scalar_select 0, %s24, %s22
  $region1: #{clip_extractor_forward.2} parent=0
    #allocation2 [shape = 'u8[1024]{0}', space=vmem, size = 0x400, scoped, tag = 'output window, operand 0, single buffered']
    #allocation3 [shape = 's32[1]{0}', space=sflag, size = 0x4, scoped, tag = 'scoped memory for clip_extractor_forward.2']
    %26 = vsyncpa [#allocation3], 0
    // Predicated region
    $region2: #{clip_extractor_forward.2} parent=1 // pred_check
      _
    $region3: #{clip_extractor_forward.2} parent=1 // pred_check_branch
      %28 = sbr.rel (0) target = $region5
    $region4: #{clip_extractor_forward.2} parent=1 // pred_region
      _
    $region5: #{clip_extractor_forward.2} parent=1 // pred_fallthru
      _
    // Predicated region
    $region6: #{clip_extractor_forward.2} parent=1 // pred_check
      _
    $region7: #{clip_extractor_forward.2} parent=1 // pred_check_branch
      %30 = sbr.rel (0) target = $region9
    $region8: #{clip_extractor_forward.2} parent=1 // pred_region
      _
    $region9: #{clip_extractor_forward.2} parent=1 // pred_fallthru
      _
    // Predicated region
    $region10: #{clip_extractor_forward.2} parent=1 // pred_check
      _
    $region11: #{clip_extractor_forward.2} parent=1 // pred_check_branch
      %32 = sbr.rel (0) target = $region13
    $region12: #{clip_extractor_forward.2} parent=1 // pred_region
      _
    $region13: #{clip_extractor_forward.2} parent=1 // pred_fallthru
      _
    // Predicated region
    $region14: #{clip_extractor_forward.2} parent=1 // pred_check
      _
    $region15: #{clip_extractor_forward.2} parent=1 // pred_check_branch
      %34 = sbr.rel (0) target = $region17
    $region16: #{clip_extractor_forward.2} parent=1 // pred_region
      _
    $region17: #{clip_extractor_forward.2} parent=1 // pred_fallthru
      _
    // Predicated region
    $region18: #{clip_extractor_forward.2} parent=1 // pred_check
      _
    $region19: #{clip_extractor_forward.2} parent=1 // pred_check_branch
      %36 = sbr.rel (0) target = $region21
    $region20: #{clip_extractor_forward.2} parent=1 // pred_region
      _
    $region21: #{clip_extractor_forward.2} parent=1 // pred_fallthru
      _
    // Predicated region
    $region22: #{clip_extractor_forward.2} parent=1 // pred_check
      _
    $region23: #{clip_extractor_forward.2} parent=1 // pred_check_branch
      %38 = sbr.rel (0) target = $region25
    $region24: #{clip_extractor_forward.2} parent=1 // pred_region
      _
    $region25: #{clip_extractor_forward.2} parent=1 // pred_fallthru
      _
    // Predicated region
    $region26: #{clip_extractor_forward.2} parent=1 // pred_check
      _
    $region27: #{clip_extractor_forward.2} parent=1 // pred_check_branch
      %40 = sbr.rel (0) target = $region29
    $region28: #{clip_extractor_forward.2} parent=1 // pred_region
      _
    $region29: #{clip_extractor_forward.2} parent=1 // pred_fallthru
      _
    // Predicated region
    $region30: #{clip_extractor_forward.2} parent=1 // pred_check
      _
    $region31: #{clip_extractor_forward.2} parent=1 // pred_check_branch
      %42 = sbr.rel (0) target = $region33
    $region32: #{clip_extractor_forward.2} parent=1 // pred_region
      _
    $region33: #{clip_extractor_forward.2} parent=1 // pred_fallthru
      _
    // Predicated region
    $region34: #{clip_extractor_forward.2} parent=1 // pred_check
      _
    $region35: #{clip_extractor_forward.2} parent=1 // pred_check_branch
      %44 = sbr.rel (0) target = $region37
    $region36: #{clip_extractor_forward.2} parent=1 // pred_region
      _
    $region37: #{clip_extractor_forward.2} parent=1 // pred_fallthru
      _
    // Predicated region
    $region38: #{clip_extractor_forward.2} parent=1 // pred_check
      _
    $region39: #{clip_extractor_forward.2} parent=1 // pred_check_branch
      %46 = sbr.rel (0) target = $region41
    $region40: #{clip_extractor_forward.2} parent=1 // pred_region
      _
    $region41: #{clip_extractor_forward.2} parent=1 // pred_fallthru
      _
    // Predicated region
    $region42: #{clip_extractor_forward.2} parent=1 // pred_check
      _
    $region43: #{clip_extractor_forward.2} parent=1 // pred_check_branch
      %48 = sbr.rel (0) target = $region45
    $region44: #{clip_extractor_forward.2} parent=1 // pred_region
      _
    $region45: #{clip_extractor_forward.2} parent=1 // pred_fallthru
      _
    // Predicated region
    $region46: #{clip_extractor_forward.2} parent=1 // pred_check
      _
    $region47: #{clip_extractor_forward.2} parent=1 // pred_check_branch
      %50 = sbr.rel (0) target = $region49
    $region48: #{clip_extractor_forward.2} parent=1 // pred_region
      _
    $region49: #{clip_extractor_forward.2} parent=1 // pred_fallthru
      _
    // Predicated region
    $region50: #{clip_extractor_forward.2} parent=1 // pred_check
      _
    $region51: #{clip_extractor_forward.2} parent=1 // pred_check_branch
      %52 = sbr.rel (0) target = $region53
    $region52: #{clip_extractor_forward.2} parent=1 // pred_region
      _
    $region53: #{clip_extractor_forward.2} parent=1 // pred_fallthru
      _
    // Predicated region
    $region54: #{clip_extractor_forward.2} parent=1 // pred_check
      _
    $region55: #{clip_extractor_forward.2} parent=1 // pred_check_branch
      %54 = sbr.rel (0) target = $region57
    $region56: #{clip_extractor_forward.2} parent=1 // pred_region
      _
    $region57: #{clip_extractor_forward.2} parent=1 // pred_fallthru
      _
    // Predicated region
    $region58: #{clip_extractor_forward.2} parent=1 // pred_check
      _
    $region59: #{clip_extractor_forward.2} parent=1 // pred_check_branch
      %56 = sbr.rel (0) target = $region61
    $region60: #{clip_extractor_forward.2} parent=1 // pred_region
      _
    $region61: #{clip_extractor_forward.2} parent=1 // pred_fallthru
      _
    // Predicated region
    $region62: #{clip_extractor_forward.2} parent=1 // pred_check
      _
    $region63: #{clip_extractor_forward.2} parent=1 // pred_check_branch
      %58 = sbr.rel (0) target = $region65
    $region64: #{clip_extractor_forward.2} parent=1 // pred_region
      _
    $region65: #{clip_extractor_forward.2} parent=1 // pred_fallthru
      _
    // Predicated region
    $region66: #{clip_extractor_forward.2} parent=1 // pred_check
      _
    $region67: #{clip_extractor_forward.2} parent=1 // pred_check_branch
      %60 = sbr.rel (0) target = $region69
    $region68: #{clip_extractor_forward.2} parent=1 // pred_region
      _
    $region69: #{clip_extractor_forward.2} parent=1 // pred_fallthru
      _
    // Predicated region
    $region70: #{clip_extractor_forward.2} parent=1 // pred_check
      _
    $region71: #{clip_extractor_forward.2} parent=1 // pred_check_branch
      %62 = sbr.rel (0) target = $region73
    $region72: #{clip_extractor_forward.2} parent=1 // pred_region
      _
    $region73: #{clip_extractor_forward.2} parent=1 // pred_fallthru
      _
    // Predicated region
    $region74: #{clip_extractor_forward.2} parent=1 // pred_check
      _
    $region75: #{clip_extractor_forward.2} parent=1 // pred_check_branch
      %64 = sbr.rel (0) target = $region77
    $region76: #{clip_extractor_forward.2} parent=1 // pred_region
      _
    $region77: #{clip_extractor_forward.2} parent=1 // pred_fallthru
      _
    // Predicated region
    $region78: #{clip_extractor_forward.2} parent=1 // pred_check
      _
    $region79: #{clip_extractor_forward.2} parent=1 // pred_check_branch
      %66 = sbr.rel (0) target = $region81
    $region80: #{clip_extractor_forward.2} parent=1 // pred_region
      _
    $region81: #{clip_extractor_forward.2} parent=1 // pred_fallthru
      _
    // Predicated region
    $region82: #{clip_extractor_forward.2} parent=1 // pred_check
      _
    $region83: #{clip_extractor_forward.2} parent=1 // pred_check_branch
      %68 = sbr.rel (0) target = $region85
    $region84: #{clip_extractor_forward.2} parent=1 // pred_region
      _
    $region85: #{clip_extractor_forward.2} parent=1 // pred_fallthru
      _
    %v70 = vld [vmem:[%s0] sm:$0xff]
    %v71 = vld [vmem:[%s0 + $0x8] sm:$0xff]
    %v72 = vld [vmem:[%s0 + $0x10] sm:$0x3]
    %v73 = vld [vmem:[%s0 + $0x18] sm:$0x3]
    %v74 = vld [vmem:[%s1] sm:$0xf]
    %v75 = vld [vmem:[%s1 + $0x4] sm:$0xf]
    %v76 = vld [vmem:[%s1 + $0x8] sm:$0xf]
    %v77 = vld [vmem:[%s1 + $0xc] sm:$0xf]
    %v78 = vld [vmem:[%s1 + $0x10] sm:$0xf]
    %v79 = vld [vmem:[%s1 + $0x14] sm:$0xf]
    %v80 = vld [vmem:[%s1 + $0x18] sm:$0xf]
    %v81 = vld [vmem:[%s1 + $0x1c] sm:$0xf]
    %v82 = vld [vmem:[%s1 + $0x20] sm:$0xf]
    %v83 = vld [vmem:[%s1 + $0x24] sm:$0xf]
    %v84 = vld [vmem:[%s1 + $0x28] sm:$0xf]
    %v85 = vld [vmem:[%s1 + $0x2c] sm:$0xf]
    %v86 = vld [vmem:[%s1 + $0x30] sm:$0xf]
    %v87 = vld [vmem:[%s1 + $0x34] sm:$0xf]
    %v88 = vld [vmem:[%s1 + $0x38] sm:$0xf]
    %v89 = vld [vmem:[%s1 + $0x3c] sm:$0xf]
    %v90 = vld [vmem:[%s1 + $0x40] sm:$0xf]
    %v91 = vld [vmem:[%s1 + $0x44] sm:$0xf]
    %v92 = vld [vmem:[%s1 + $0x48] sm:$0xf]
    %v93 = vld [vmem:[%s1 + $0x4c] sm:$0xf]
    %v94 = vld [vmem:[%s1 + $0x50] sm:$0xf]
    %v95 = vld [vmem:[%s1 + $0x54] sm:$0xf]
    %v96 = vld [vmem:[%s1 + $0x58] sm:$0xf]
    %v97 = vld [vmem:[%s1 + $0x5c] sm:$0xf]
    %v98 = vpack.c.bf16 %v72, %v70
    %v99 = vpack.c.bf16 %v73, %v71
    %v100 = vld [vmem:[%s2] sm:$0xff]
    %v101 = vld [vmem:[%s2 + $0x8] sm:$0x3]
    %v126 = vunpack.c.l.b16 %v74
    %v127 = vunpack.c.l.b16 %v75
    %v128 = vunpack.c.l.b16 %v76
    %v129 = vunpack.c.l.b16 %v77
    %v130 = vunpack.c.l.b16 %v78
    %v131 = vunpack.c.l.b16 %v79
    %v132 = vunpack.c.l.b16 %v80
    %v133 = vunpack.c.l.b16 %v81
    %v134 = vunpack.c.l.b16 %v82
    %v135 = vunpack.c.l.b16 %v83
    %v136 = vunpack.c.l.b16 %v84
    %v137 = vunpack.c.l.b16 %v85
    %v138 = vunpack.c.l.b16 %v86
    %v139 = vunpack.c.l.b16 %v87
    %v140 = vunpack.c.l.b16 %v88
    %v141 = vunpack.c.l.b16 %v89
    %v142 = vunpack.c.l.b16 %v90
    %v143 = vunpack.c.l.b16 %v91
    %v144 = vunpack.c.l.b16 %v92
    %v145 = vunpack.c.l.b16 %v93
    %v146 = vunpack.c.l.b16 %v94
    %v147 = vunpack.c.l.b16 %v95
    %v148 = vunpack.c.l.b16 %v96
    %v149 = vunpack.c.l.b16 %v97
    %v150 = vpack.c.b16 %v127, %v126
    %v151 = vpack.c.b16 %v129, %v128
    %v152 = vpack.c.b16 %v131, %v130
    %v153 = vpack.c.b16 %v133, %v132
    %v154 = vpack.c.b16 %v135, %v134
    %v155 = vpack.c.b16 %v137, %v136
    %v156 = vpack.c.b16 %v139, %v138
    %v157 = vpack.c.b16 %v141, %v140
    %v158 = vpack.c.b16 %v143, %v142
    %v159 = vpack.c.b16 %v145, %v144
    %v160 = vpack.c.b16 %v147, %v146
    %v161 = vpack.c.b16 %v149, %v148
    %vm174 = vcmask 523264
    %v176 = vsel %vm174, %v99, 0
    %178 = vmatprep.subr.bf16.mxu0 0
    %179 = vmatpush1.bf16.msra.mxu0 %v150
    %180 = vmatprep.subr.bf16.mxu0 0
    %181 = vmatpush1.bf16.msra.mxu0 %v151
    %182 = vmatprep.subr.bf16.mxu0 0
    %183 = vmatpush1.bf16.msra.mxu0 %v152
    %184 = vmatprep.subr.bf16.mxu0 0
    %185 = vmatpush1.bf16.msra.mxu0 %v153
    %186 = vmatprep.subr.bf16.mxu0 0
    %187 = vmatpush1.bf16.msra.mxu0 %v154
    %188 = vmatprep.subr.bf16.mxu0 0
    %189 = vmatpush1.bf16.msra.mxu0 %v155
    %190 = vmatprep.subr.bf16.mxu0 0
    %191 = vmatpush1.bf16.msra.mxu0 %v156
    %192 = vmatprep.subr.bf16.mxu0 0
    %193 = vmatpush1.bf16.msra.mxu0 %v157
    %194 = vmatprep.subr.bf16.mxu0 0
    %195 = vmatpush1.bf16.msra.mxu0 %v158
    %196 = vmatprep.subr.bf16.mxu0 0
    %197 = vmatpush1.bf16.msra.mxu0 %v159
    %198 = vmatprep.subr.bf16.mxu0 0
    %199 = vmatpush1.bf16.msra.mxu0 %v160
    %200 = vmatprep.subr.bf16.mxu0 0
    %201 = vmatpush1.bf16.msra.mxu0 %v161
    %202 = vmatprep.subr.bf16.mxu0 0
    %203 = vmatpush1.bf16.msra.mxu0 0
    %204 = vmatprep.subr.bf16.mxu0 0
    %205 = vmatpush1.bf16.msra.mxu0 0
    %206 = vmatprep.subr.bf16.mxu0 0
    %207 = vmatpush1.bf16.msra.mxu0 0
    %208 = vmatprep.subr.bf16.mxu0 0
    %209 = vmatpush1.bf16.msra.mxu0 0
    %210 = vmatprep.mubr.bf16.mxu0 %v176
    %211 = vmatmul.mubr.bf16.gmra.mrb[0].mxu0 %v98
    %v212 = vpop.f32.mrb[0].mxu0
    %v213 = vadd.f32 %v100, %v212
    %v214 = vpop.f32.mrb[0].mxu0
    %v215 = vpop.f32.mrb[0].mxu0
    %v216 = vadd.f32 %v101, %v215
    %v217 = vpop.f32.mrb[0].mxu0
    %218 = vdwg.mxu0
    %v219 = vld [vmem:[%s3] sm:$0x1]
    %v220 = vld [vmem:[%s4] sm:$0x1]
    %v221 = vsel %vm174, %v213, 0.0
    %222 = vadd.xlane.f32.xlu0 %v221
    %v223 = vpop.xlane.xlu0 %222
    %vm224 = vcmask 517120
    %v225 = vsel %vm224, %v216, 0.0
    %226 = vadd.xlane.f32.xlu0 %v225
    %v227 = vpop.xlane.xlu0 %226
    %v228 = vrcp.pop 64.0
    %v229 = vmul.f32 %v223, %v228
    %v230 = vmul.f32 %v227, %v228
    %v231 = vsub.f32 %v213, %v229
    %v232 = vsub.f32 %v216, %v230
    %v233 = vmul.f32 %v231, %v231
    %v234 = vmul.f32 %v232, %v232
    %v235 = vsel %vm174, %v233, 0.0
    %236 = vadd.xlane.f32.xlu0 %v235
    %v237 = vpop.xlane.xlu0 %236
    %v238 = vsel %vm224, %v234, 0.0
    %239 = vadd.xlane.f32.xlu0 %v238
    %v240 = vpop.xlane.xlu0 %239
    %v241 = vmul.f32 %v237, %v228
    %v242 = vmul.f32 %v240, %v228
    %v243 = vadd.f32 %v241, 1e-05
    %v244 = vadd.f32 %v242, 1e-05
    %v245 = vrsqrt.pop %v243
    %v246 = vrsqrt.pop %v244
    %v247 = vmul.f32 %v231, %v245
    %v248 = vmul.f32 %v232, %v246
    %v250 = vlaneseq
    %v251 = vshrl.u32 %v250, 7
    %v252 = vsub.s32 0, %v251
    %v253 = vrot.slane %v219, %v252
    %v255 = vmul.f32 %v247, %v253
    %v256 = vmul.f32 %v248, %v253
    %v258 = vlaneseq
    %v259 = vshrl.u32 %v258, 7
    %v260 = vsub.s32 0, %v259
    %v261 = vrot.slane %v220, %v260
    %v263 = vadd.f32 %v255, %v261
    %v264 = vadd.f32 %v256, %v261
    %v265 = vld [vmem:[%s5] sm:$0x3]
    %v266 = vld [vmem:[%s18] sm:$0x1]
    %v267 = vld [vmem:[%s19] sm:$0x1]
    %v268 = vld [vmem:[%s20] sm:$0xf]
    %v269 = vld [vmem:[%s20 + $0x4] sm:$0xf]
    %v270 = vld [vmem:[%s20 + $0x8] sm:$0xf]
    %v271 = vld [vmem:[%s20 + $0xc] sm:$0xf]
    %v272 = vld [vmem:[%s20 + $0x10] sm:$0xf]
    %v273 = vld [vmem:[%s20 + $0x14] sm:$0xf]
    %v274 = vld [vmem:[%s20 + $0x18] sm:$0xf]
    %v275 = vld [vmem:[%s20 + $0x1c] sm:$0xf]
    %v276 = vlaneseq
    %v277 = vshrl.u32 %v276, 7
    %v278 = vadd.s32 %v277, 8
    %v279 = vlaneseq
    %v280 = vand.u32 %v279, 127
    %vm281 = vcmp.ge.s32.totalorder %v277, 0
    %vm282 = vcmp.ge.s32.totalorder %v278, 0
    %vm283 = vcmp.lt.s32.totalorder %v277, 5
    %vm284 = vcmp.lt.s32.totalorder %v278, 5
    %vm285 = vmand %vm281, %vm283
    %vm286 = vmand %vm282, %vm284
    %vm287 = vcmp.ge.s32.totalorder %v280, 0
    %vm288 = vmand %vm285, %vm287
    %vm289 = vmand %vm286, %vm287
    %vm290 = vcmp.lt.s32.totalorder %v280, 5
    %vm291 = vmand %vm288, %vm290
    %vm292 = vmand %vm289, %vm290
    %vm293 = vcmp.ge.s32.totalorder %v277, 5
    %vm294 = vcmp.ge.s32.totalorder %v278, 5
    %vm295 = vcmp.lt.s32.totalorder %v277, 10
    %vm296 = vcmp.lt.s32.totalorder %v278, 10
    %vm297 = vmand %vm293, %vm295
    %vm298 = vmand %vm294, %vm296
    %vm299 = vcmp.ge.s32.totalorder %v280, 5
    %vm300 = vmand %vm297, %vm299
    %vm301 = vmand %vm298, %vm299
    %vm302 = vcmp.lt.s32.totalorder %v280, 10
    %vm303 = vmand %vm300, %vm302
    %vm304 = vmand %vm301, %vm302
    %vm305 = vmor %vm291, %vm303
    %vm306 = vmor %vm292, %vm304
    %v307 = vsel %vm305, 0.0, -1e+09
    %v308 = vsel %vm306, 0.0, -1e+09
    %v309 = vld [vmem:[%s6] sm:$0x1]
    %v310 = vld [vmem:[%s7] sm:$0x1]
    %v311 = vsel %vm174, %v263, 0.0
    %312 = vadd.xlane.f32.xlu0 %v311
    %v313 = vpop.xlane.xlu0 %312
    %v314 = vsel %vm224, %v264, 0.0
    %315 = vadd.xlane.f32.xlu0 %v314
    %v316 = vpop.xlane.xlu0 %315
    %v317 = vmul.f32 %v313, %v228
    %v318 = vmul.f32 %v316, %v228
    %v319 = vsub.f32 %v263, %v317
    %v320 = vsub.f32 %v264, %v318
    %v321 = vmul.f32 %v319, %v319
    %v322 = vmul.f32 %v320, %v320
    %v323 = vsel %vm174, %v321, 0.0
    %324 = vadd.xlane.f32.xlu0 %v323
    %v325 = vpop.xlane.xlu0 %324
    %v326 = vsel %vm224, %v322, 0.0
    %327 = vadd.xlane.f32.xlu0 %v326
    %v328 = vpop.xlane.xlu0 %327
    %v329 = vmul.f32 %v325, %v228
    %v330 = vmul.f32 %v328, %v228
    %v331 = vadd.f32 %v329, 1e-05
    %v332 = vadd.f32 %v330, 1e-05
    %v333 = vrsqrt.pop %v331
    %v334 = vrsqrt.pop %v332
    %v335 = vmul.f32 %v319, %v333
    %v336 = vmul.f32 %v320, %v334
    %v338 = vlaneseq
    %v339 = vshrl.u32 %v338, 7
    %v340 = vsub.s32 0, %v339
    %v341 = vrot.slane %v309, %v340
    %v343 = vmul.f32 %v335, %v341
    %v344 = vmul.f32 %v336, %v341
    %v346 = vlaneseq
    %v347 = vshrl.u32 %v346, 7
    %v348 = vsub.s32 0, %v347
    %v349 = vrot.slane %v310, %v348
    %v351 = vadd.f32 %v343, %v349
    %v352 = vadd.f32 %v344, %v349
    %v353 = vld [vmem:[%s8] sm:$0xff]
    %v354 = vld [vmem:[%s8 + $0x8] sm:$0xff]
    %v355 = vld [vmem:[%s8 + $0x10] sm:$0xff]
    %v356 = vld [vmem:[%s8 + $0x18] sm:$0xff]
    %v357 = vld [vmem:[%s8 + $0x20] sm:$0xff]
    %v358 = vld [vmem:[%s8 + $0x28] sm:$0xff]
    %v359 = vld [vmem:[%s8 + $0x30] sm:$0xff]
    %v360 = vld [vmem:[%s8 + $0x38] sm:$0xff]
    %v361 = vpack.c.bf16 %v352, %v351
    %v362 = vld [vmem:[%s9] sm:$0x3]
    %v364 = vlaneseq
    %v365 = vshrl.u32 %v364, 7
    %v366 = vsub.s32 0, %v365
    %v367 = vrot.slane %v362, %v366
    %v368 = vlaneseq
    %v369 = vshrl.u32 %v368, 7
    %v370 = vsub.s32 1, %v369
    %v371 = vrot.slane %v362, %v370
    %v382 = vunpack.c.l.b16 %v353
    %v383 = vunpack.c.h.b16 %v353
    %v384 = vunpack.c.l.b16 %v354
    %v385 = vunpack.c.h.b16 %v354
    %v386 = vunpack.c.l.b16 %v355
    %v387 = vunpack.c.h.b16 %v355
    %v388 = vunpack.c.l.b16 %v356
    %v389 = vunpack.c.h.b16 %v356
    %v390 = vunpack.c.l.b16 %v357
    %v391 = vunpack.c.h.b16 %v357
    %v392 = vunpack.c.l.b16 %v358
    %v393 = vunpack.c.h.b16 %v358
    %v394 = vunpack.c.l.b16 %v359
    %v395 = vunpack.c.h.b16 %v359
    %v396 = vunpack.c.l.b16 %v360
    %v397 = vunpack.c.h.b16 %v360
    %v398 = vpack.c.b16 %v384, %v382
    %v399 = vpack.c.b16 %v385, %v383
    %v400 = vpack.c.b16 %v388, %v386
    %v401 = vpack.c.b16 %v389, %v387
    %v402 = vpack.c.b16 %v392, %v390
    %v403 = vpack.c.b16 %v393, %v391
    %v404 = vpack.c.b16 %v396, %v394
    %v405 = vpack.c.b16 %v397, %v395
    %v415 = vsel %vm174, %v361, 0
    %417 = vmatprep.subr.bf16.mxu0 %v399
    %418 = vmatpush1.bf16.msra.mxu0 %v398
    %419 = vmatprep.subr.bf16.mxu0 %v401
    %420 = vmatpush1.bf16.msra.mxu0 %v400
    %421 = vmatprep.subr.bf16.mxu0 %v403
    %422 = vmatpush1.bf16.msra.mxu0 %v402
    %423 = vmatprep.subr.bf16.mxu0 %v405
    %424 = vmatpush1.bf16.msra.mxu0 %v404
    %425 = vmatprep.subr.bf16.mxu0 0
    %426 = vmatpush1.bf16.msra.mxu0 0
    %427 = vmatprep.subr.bf16.mxu0 0
    %428 = vmatpush1.bf16.msra.mxu0 0
    %429 = vmatprep.subr.bf16.mxu0 0
    %430 = vmatpush1.bf16.msra.mxu0 0
    %431 = vmatprep.subr.bf16.mxu0 0
    %432 = vmatpush1.bf16.msra.mxu0 0
    %433 = vmatprep.subr.bf16.mxu0 0
    %434 = vmatpush1.bf16.msra.mxu0 0
    %435 = vmatprep.subr.bf16.mxu0 0
    %436 = vmatpush1.bf16.msra.mxu0 0
    %437 = vmatprep.subr.bf16.mxu0 0
    %438 = vmatpush1.bf16.msra.mxu0 0
    %439 = vmatprep.subr.bf16.mxu0 0
    %440 = vmatpush1.bf16.msra.mxu0 0
    %441 = vmatprep.subr.bf16.mxu0 0
    %442 = vmatpush1.bf16.msra.mxu0 0
    %443 = vmatprep.subr.bf16.mxu0 0
    %444 = vmatpush1.bf16.msra.mxu0 0
    %445 = vmatprep.subr.bf16.mxu0 0
    %446 = vmatpush1.bf16.msra.mxu0 0
    %447 = vmatprep.subr.bf16.mxu0 0
    %448 = vmatpush1.bf16.msra.mxu0 0
    %449 = vmatprep.mubr.bf16.mxu0 0
    %450 = vmatmul.mubr.bf16.gmra.mrb[0].mxu0 %v415
    %v451 = vpop.f32.mrb[0].mxu0
    %v452 = vadd.f32 %v367, %v451
    %v453 = vpop.f32.mrb[0].mxu0
    %v454 = vadd.f32 %v371, %v453
    %v455 = vpop.f32.mrb[0].mxu0
    %v456 = vadd.f32 %v367, %v455
    %v457 = vpop.f32.mrb[0].mxu0
    %v458 = vadd.f32 %v371, %v457
    %459 = vdwg.mxu0
    %v460 = vld [vmem:[%s10] sm:$0xf]
    %v461 = vld [vmem:[%s10 + $0x4] sm:$0xf]
    %v462 = vld [vmem:[%s10 + $0x8] sm:$0xf]
    %v463 = vld [vmem:[%s10 + $0xc] sm:$0xf]
    %v464 = vld [vmem:[%s10 + $0x10] sm:$0xf]
    %v465 = vld [vmem:[%s10 + $0x14] sm:$0xf]
    %v466 = vld [vmem:[%s10 + $0x18] sm:$0xf]
    %v467 = vld [vmem:[%s10 + $0x1c] sm:$0xf]
    %v468 = vpack.c.bf16 %v456, %v452
    %470 = vrot.lane.b32.xlu0 %v468, 64
    %v471 = vpop.permute.xlu0 %470
    %vm472 = vcmask 261120
    %v474 = vsel %vm472, %v468, 0
    %v477 = vsel %vm472, %v471, 0
    %479 = vmatprep.subr.bf16.mxu0 0
    %480 = vmatpush1.bf16.xpose.msra.mxu0 %v477
    %481 = vmatprep.subr.bf16.mxu0 0
    %482 = vmatpush1.bf16.xpose.msra.mxu0 0
    %483 = vmatprep.subr.bf16.mxu0 0
    %484 = vmatpush1.bf16.xpose.msra.mxu0 0
    %485 = vmatprep.subr.bf16.mxu0 0
    %486 = vmatpush1.bf16.xpose.msra.mxu0 0
    %487 = vmatprep.subr.bf16.mxu0 0
    %488 = vmatpush1.bf16.xpose.msra.mxu0 0
    %489 = vmatprep.subr.bf16.mxu0 0
    %490 = vmatpush1.bf16.xpose.msra.mxu0 0
    %491 = vmatprep.subr.bf16.mxu0 0
    %492 = vmatpush1.bf16.xpose.msra.mxu0 0
    %493 = vmatprep.subr.bf16.mxu0 0
    %494 = vmatpush1.bf16.xpose.msra.mxu0 0
    %495 = vmatprep.subr.bf16.mxu0 0
    %496 = vmatpush1.bf16.xpose.msra.mxu0 0
    %497 = vmatprep.subr.bf16.mxu0 0
    %498 = vmatpush1.bf16.xpose.msra.mxu0 0
    %499 = vmatprep.subr.bf16.mxu0 0
    %500 = vmatpush1.bf16.xpose.msra.mxu0 0
    %501 = vmatprep.subr.bf16.mxu0 0
    %502 = vmatpush1.bf16.xpose.msra.mxu0 0
    %503 = vmatprep.subr.bf16.mxu0 0
    %504 = vmatpush1.bf16.xpose.msra.mxu0 0
    %505 = vmatprep.subr.bf16.mxu0 0
    %506 = vmatpush1.bf16.xpose.msra.mxu0 0
    %507 = vmatprep.subr.bf16.mxu0 0
    %508 = vmatpush1.bf16.xpose.msra.mxu0 0
    %509 = vmatprep.subr.bf16.mxu0 0
    %510 = vmatpush1.bf16.xpose.msra.mxu0 0
    %511 = vmatprep.mubr.bf16.mxu0 0
    %512 = vmatmul.mubr.bf16.gmra.mrb[0].mxu0 %v474
    %v513 = vpop.f32.mrb[0].mxu0
    %v514 = vadd.f32 %v307, %v513
    %v515 = vpop.f32.mrb[0].mxu0
    %v516 = vpop.f32.mrb[0].mxu0
    %v517 = vadd.f32 %v308, %v516
    %v518 = vpop.f32.mrb[0].mxu0
    %519 = vdwg.mxu0
    %vm520 = vcmask 80896
    %v521 = vsel %vm520, %v514, -inf
    %522 = vmax.xlane.f32.xlu0 %v521
    %v523 = vpop.xlane.xlu0 %522
    %vm524 = vcmask 74752
    %v525 = vsel %vm524, %v517, -inf
    %526 = vmax.xlane.f32.xlu0 %v525
    %v527 = vpop.xlane.xlu0 %526
    %v528 = vsub.f32 %v514, %v523
    %v529 = vsub.f32 %v517, %v527
    %v530 = vmul.f32 %v528, 1.442695
    %v531 = vpow.pop %v530
    %v532 = vmul.f32 %v529, 1.442695
    %v533 = vpow.pop %v532
    %v534 = vsel %vm520, %v531, 0.0
    %535 = vadd.xlane.f32.xlu0 %v534
    %v536 = vpop.xlane.xlu0 %535
    %v537 = vsel %vm524, %v533, 0.0
    %538 = vadd.xlane.f32.xlu0 %v537
    %v539 = vpop.xlane.xlu0 %538
    %v540 = vrcp.pop %v536
    %v541 = vrcp.pop %v539
    %v542 = vmul.f32 %v531, %v540
    %v543 = vmul.f32 %v533, %v541
    %v544 = vpack.c.bf16 %v543, %v542
    %v545 = vpack.c.bf16 %v458, %v454
    %v547 = vsel %vm520, %v544, 0
    %vm549 = vcmask 1044480
    %v551 = vsel %vm549, %v545, 0
    %553 = vmatprep.subr.bf16.mxu0 0
    %554 = vmatpush1.bf16.msra.mxu0 %v551
    %555 = vmatprep.subr.bf16.mxu0 0
    %556 = vmatpush1.bf16.msra.mxu0 0
    %557 = vmatprep.subr.bf16.mxu0 0
    %558 = vmatpush1.bf16.msra.mxu0 0
    %559 = vmatprep.subr.bf16.mxu0 0
    %560 = vmatpush1.bf16.msra.mxu0 0
    %561 = vmatprep.subr.bf16.mxu0 0
    %562 = vmatpush1.bf16.msra.mxu0 0
    %563 = vmatprep.subr.bf16.mxu0 0
    %564 = vmatpush1.bf16.msra.mxu0 0
    %565 = vmatprep.subr.bf16.mxu0 0
    %566 = vmatpush1.bf16.msra.mxu0 0
    %567 = vmatprep.subr.bf16.mxu0 0
    %568 = vmatpush1.bf16.msra.mxu0 0
    %569 = vmatprep.subr.bf16.mxu0 0
    %570 = vmatpush1.bf16.msra.mxu0 0
    %571 = vmatprep.subr.bf16.mxu0 0
    %572 = vmatpush1.bf16.msra.mxu0 0
    %573 = vmatprep.subr.bf16.mxu0 0
    %574 = vmatpush1.bf16.msra.mxu0 0
    %575 = vmatprep.subr.bf16.mxu0 0
    %576 = vmatpush1.bf16.msra.mxu0 0
    %577 = vmatprep.subr.bf16.mxu0 0
    %578 = vmatpush1.bf16.msra.mxu0 0
    %579 = vmatprep.subr.bf16.mxu0 0
    %580 = vmatpush1.bf16.msra.mxu0 0
    %581 = vmatprep.subr.bf16.mxu0 0
    %582 = vmatpush1.bf16.msra.mxu0 0
    %583 = vmatprep.subr.bf16.mxu0 0
    %584 = vmatpush1.bf16.msra.mxu0 0
    %585 = vmatprep.mubr.bf16.mxu0 0
    %586 = vmatmul.mubr.bf16.gmra.mrb[0].mxu0 %v547
    %v587 = vpop.f32.mrb[0].mxu0
    %v588 = vadd.f32 0.0, %v587
    %v589 = vpop.f32.mrb[0].mxu0
    %v590 = vpop.f32.mrb[0].mxu0
    %v591 = vadd.f32 0.0, %v590
    %v592 = vpop.f32.mrb[0].mxu0
    %593 = vdwg.mxu0
    %v594 = vpack.c.bf16 %v591, %v588
    %595 = vrot.lane.b32.xlu0 %v468, 96
    %v596 = vpop.permute.xlu0 %595
    %597 = vrot.lane.b32.xlu0 %v468, 32
    %v598 = vpop.permute.xlu0 %597
    %v600 = vsel %vm472, %v596, 0
    %v603 = vsel %vm472, %v598, 0
    %605 = vmatprep.subr.bf16.mxu0 0
    %606 = vmatpush1.bf16.xpose.msra.mxu0 %v603
    %607 = vmatprep.subr.bf16.mxu0 0
    %608 = vmatpush1.bf16.xpose.msra.mxu0 0
    %609 = vmatprep.subr.bf16.mxu0 0
    %610 = vmatpush1.bf16.xpose.msra.mxu0 0
    %611 = vmatprep.subr.bf16.mxu0 0
    %612 = vmatpush1.bf16.xpose.msra.mxu0 0
    %613 = vmatprep.subr.bf16.mxu0 0
    %614 = vmatpush1.bf16.xpose.msra.mxu0 0
    %615 = vmatprep.subr.bf16.mxu0 0
    %616 = vmatpush1.bf16.xpose.msra.mxu0 0
    %617 = vmatprep.subr.bf16.mxu0 0
    %618 = vmatpush1.bf16.xpose.msra.mxu0 0
    %619 = vmatprep.subr.bf16.mxu0 0
    %620 = vmatpush1.bf16.xpose.msra.mxu0 0
    %621 = vmatprep.subr.bf16.mxu0 0
    %622 = vmatpush1.bf16.xpose.msra.mxu0 0
    %623 = vmatprep.subr.bf16.mxu0 0
    %624 = vmatpush1.bf16.xpose.msra.mxu0 0
    %625 = vmatprep.subr.bf16.mxu0 0
    %626 = vmatpush1.bf16.xpose.msra.mxu0 0
    %627 = vmatprep.subr.bf16.mxu0 0
    %628 = vmatpush1.bf16.xpose.msra.mxu0 0
    %629 = vmatprep.subr.bf16.mxu0 0
    %630 = vmatpush1.bf16.xpose.msra.mxu0 0
    %631 = vmatprep.subr.bf16.mxu0 0
    %632 = vmatpush1.bf16.xpose.msra.mxu0 0
    %633 = vmatprep.subr.bf16.mxu0 0
    %634 = vmatpush1.bf16.xpose.msra.mxu0 0
    %635 = vmatprep.subr.bf16.mxu0 0
    %636 = vmatpush1.bf16.xpose.msra.mxu0 0
    %637 = vmatprep.mubr.bf16.mxu0 0
    %638 = vmatmul.mubr.bf16.gmra.mrb[0].mxu0 %v600
    %v639 = vpop.f32.mrb[0].mxu0
    %v640 = vadd.f32 %v307, %v639
    %v641 = vpop.f32.mrb[0].mxu0
    %v642 = vpop.f32.mrb[0].mxu0
    %v643 = vadd.f32 %v308, %v642
    %v644 = vpop.f32.mrb[0].mxu0
    %645 = vdwg.mxu0
    %v646 = vsel %vm520, %v640, -inf
    %647 = vmax.xlane.f32.xlu0 %v646
    %v648 = vpop.xlane.xlu0 %647
    %v649 = vsel %vm524, %v643, -inf
    %650 = vmax.xlane.f32.xlu0 %v649
    %v651 = vpop.xlane.xlu0 %650
    %v652 = vsub.f32 %v640, %v648
    %v653 = vsub.f32 %v643, %v651
    %v654 = vmul.f32 %v652, 1.442695
    %v655 = vpow.pop %v654
    %v656 = vmul.f32 %v653, 1.442695
    %v657 = vpow.pop %v656
    %v658 = vsel %vm520, %v655, 0.0
    %659 = vadd.xlane.f32.xlu0 %v658
    %v660 = vpop.xlane.xlu0 %659
    %v661 = vsel %vm524, %v657, 0.0
    %662 = vadd.xlane.f32.xlu0 %v661
    %v663 = vpop.xlane.xlu0 %662
    %v664 = vrcp.pop %v660
    %v665 = vrcp.pop %v663
    %v666 = vmul.f32 %v655, %v664
    %v667 = vmul.f32 %v657, %v665
    %v668 = vpack.c.bf16 %v667, %v666
    %670 = vrot.lane.b32.xlu0 %v545, 96
    %v671 = vpop.permute.xlu0 %670
    %v673 = vsel %vm520, %v668, 0
    %v676 = vsel %vm549, %v671, 0
    %678 = vmatprep.subr.bf16.mxu0 0
    %679 = vmatpush1.bf16.msra.mxu0 %v676
    %680 = vmatprep.subr.bf16.mxu0 0
    %681 = vmatpush1.bf16.msra.mxu0 0
    %682 = vmatprep.subr.bf16.mxu0 0
    %683 = vmatpush1.bf16.msra.mxu0 0
    %684 = vmatprep.subr.bf16.mxu0 0
    %685 = vmatpush1.bf16.msra.mxu0 0
    %686 = vmatprep.subr.bf16.mxu0 0
    %687 = vmatpush1.bf16.msra.mxu0 0
    %688 = vmatprep.subr.bf16.mxu0 0
    %689 = vmatpush1.bf16.msra.mxu0 0
    %690 = vmatprep.subr.bf16.mxu0 0
    %691 = vmatpush1.bf16.msra.mxu0 0
    %692 = vmatprep.subr.bf16.mxu0 0
    %693 = vmatpush1.bf16.msra.mxu0 0
    %694 = vmatprep.subr.bf16.mxu0 0
    %695 = vmatpush1.bf16.msra.mxu0 0
    %696 = vmatprep.subr.bf16.mxu0 0
    %697 = vmatpush1.bf16.msra.mxu0 0
    %698 = vmatprep.subr.bf16.mxu0 0
    %699 = vmatpush1.bf16.msra.mxu0 0
    %700 = vmatprep.subr.bf16.mxu0 0
    %701 = vmatpush1.bf16.msra.mxu0 0
    %702 = vmatprep.subr.bf16.mxu0 0
    %703 = vmatpush1.bf16.msra.mxu0 0
    %704 = vmatprep.subr.bf16.mxu0 0
    %705 = vmatpush1.bf16.msra.mxu0 0
    %706 = vmatprep.subr.bf16.mxu0 0
    %707 = vmatpush1.bf16.msra.mxu0 0
    %708 = vmatprep.subr.bf16.mxu0 0
    %709 = vmatpush1.bf16.msra.mxu0 0
    %710 = vmatprep.mubr.bf16.mxu0 0
    %711 = vmatmul.mubr.bf16.gmra.mrb[0].mxu0 %v673
    %v712 = vpop.f32.mrb[0].mxu0
    %v713 = vadd.f32 0.0, %v712
    %v714 = vpop.f32.mrb[0].mxu0
    %v715 = vpop.f32.mrb[0].mxu0
    %v716 = vadd.f32 0.0, %v715
    %v717 = vpop.f32.mrb[0].mxu0
    %718 = vdwg.mxu0
    %v719 = vpack.c.bf16 %v716, %v713
    %v724 = vunpack.c.l.b16 %v464
    %v725 = vunpack.c.l.b16 %v465
    %v726 = vunpack.c.l.b16 %v466
    %v727 = vunpack.c.l.b16 %v467
    %v728 = vpack.c.b16 %v725, %v724
    %v729 = vpack.c.b16 %v727, %v726
    %v733 = vsel %vm472, %v719, 0
    %735 = vmatprep.subr.bf16.mxu0 0
    %736 = vmatpush1.bf16.msra.mxu0 %v728
    %737 = vmatprep.subr.bf16.mxu0 0
    %738 = vmatpush1.bf16.msra.mxu0 %v729
    %739 = vmatprep.subr.bf16.mxu0 0
    %740 = vmatpush1.bf16.msra.mxu0 0
    %741 = vmatprep.subr.bf16.mxu0 0
    %742 = vmatpush1.bf16.msra.mxu0 0
    %743 = vmatprep.subr.bf16.mxu0 0
    %744 = vmatpush1.bf16.msra.mxu0 0
    %745 = vmatprep.subr.bf16.mxu0 0
    %746 = vmatpush1.bf16.msra.mxu0 0
    %747 = vmatprep.subr.bf16.mxu0 0
    %748 = vmatpush1.bf16.msra.mxu0 0
    %749 = vmatprep.subr.bf16.mxu0 0
    %750 = vmatpush1.bf16.msra.mxu0 0
    %751 = vmatprep.subr.bf16.mxu0 0
    %752 = vmatpush1.bf16.msra.mxu0 0
    %753 = vmatprep.subr.bf16.mxu0 0
    %754 = vmatpush1.bf16.msra.mxu0 0
    %755 = vmatprep.subr.bf16.mxu0 0
    %756 = vmatpush1.bf16.msra.mxu0 0
    %757 = vmatprep.subr.bf16.mxu0 0
    %758 = vmatpush1.bf16.msra.mxu0 0
    %759 = vmatprep.subr.bf16.mxu0 0
    %760 = vmatpush1.bf16.msra.mxu0 0
    %761 = vmatprep.subr.bf16.mxu0 0
    %762 = vmatpush1.bf16.msra.mxu0 0
    %763 = vmatprep.subr.bf16.mxu0 0
    %764 = vmatpush1.bf16.msra.mxu0 0
    %765 = vmatprep.subr.bf16.mxu0 0
    %766 = vmatpush1.bf16.msra.mxu0 0
    %767 = vmatprep.mubr.bf16.mxu0 0
    %768 = vmatmul.mubr.bf16.gmra.mrb[0].mxu0 %v733
    %v769 = vpop.f32.mrb[0].mxu0
    %v770 = vadd.f32 0.0, %v769
    %v771 = vpop.f32.mrb[0].mxu0
    %v772 = vpop.f32.mrb[0].mxu0
    %v773 = vadd.f32 0.0, %v772
    %v774 = vpop.f32.mrb[0].mxu0
    %775 = vdwg.mxu0
    %v780 = vunpack.c.l.b16 %v460
    %v781 = vunpack.c.l.b16 %v461
    %v782 = vunpack.c.l.b16 %v462
    %v783 = vunpack.c.l.b16 %v463
    %v784 = vpack.c.b16 %v781, %v780
    %v785 = vpack.c.b16 %v783, %v782
    %v789 = vsel %vm472, %v594, 0
    %791 = vmatprep.subr.bf16.mxu0 0
    %792 = vmatpush1.bf16.msra.mxu0 %v784
    %793 = vmatprep.subr.bf16.mxu0 0
    %794 = vmatpush1.bf16.msra.mxu0 %v785
    %795 = vmatprep.subr.bf16.mxu0 0
    %796 = vmatpush1.bf16.msra.mxu0 0
    %797 = vmatprep.subr.bf16.mxu0 0
    %798 = vmatpush1.bf16.msra.mxu0 0
    %799 = vmatprep.subr.bf16.mxu0 0
    %800 = vmatpush1.bf16.msra.mxu0 0
    %801 = vmatprep.subr.bf16.mxu0 0
    %802 = vmatpush1.bf16.msra.mxu0 0
    %803 = vmatprep.subr.bf16.mxu0 0
    %804 = vmatpush1.bf16.msra.mxu0 0
    %805 = vmatprep.subr.bf16.mxu0 0
    %806 = vmatpush1.bf16.msra.mxu0 0
    %807 = vmatprep.subr.bf16.mxu0 0
    %808 = vmatpush1.bf16.msra.mxu0 0
    %809 = vmatprep.subr.bf16.mxu0 0
    %810 = vmatpush1.bf16.msra.mxu0 0
    %811 = vmatprep.subr.bf16.mxu0 0
    %812 = vmatpush1.bf16.msra.mxu0 0
    %813 = vmatprep.subr.bf16.mxu0 0
    %814 = vmatpush1.bf16.msra.mxu0 0
    %815 = vmatprep.subr.bf16.mxu0 0
    %816 = vmatpush1.bf16.msra.mxu0 0
    %817 = vmatprep.subr.bf16.mxu0 0
    %818 = vmatpush1.bf16.msra.mxu0 0
    %819 = vmatprep.subr.bf16.mxu0 0
    %820 = vmatpush1.bf16.msra.mxu0 0
    %821 = vmatprep.subr.bf16.mxu0 0
    %822 = vmatpush1.bf16.msra.mxu0 0
    %823 = vmatprep.mubr.bf16.mxu0 0
    %824 = vmatmul.mubr.bf16.gmra.mrb[0].mxu0 %v789
    %v825 = vpop.f32.mrb[0].mxu0
    %v826 = vadd.f32 %v770, %v825
    %v827 = vpop.f32.mrb[0].mxu0
    %v828 = vpop.f32.mrb[0].mxu0
    %v829 = vadd.f32 %v773, %v828
    %v830 = vpop.f32.mrb[0].mxu0
    %831 = vdwg.mxu0
    %v832 = vadd.f32 %v263, %v826
    %v833 = vadd.f32 %v264, %v829
    %v834 = vld [vmem:[%s11] sm:$0x1]
    %v836 = vlaneseq
    %v837 = vshrl.u32 %v836, 7
    %v838 = vsub.s32 0, %v837
    %v839 = vrot.slane %v834, %v838
    %v841 = vadd.f32 %v832, %v839
    %v842 = vadd.f32 %v833, %v839
    %v843 = vld [vmem:[%s12] sm:$0x1]
    %v844 = vld [vmem:[%s13] sm:$0x1]
    %v845 = vsel %vm174, %v841, 0.0
    %846 = vadd.xlane.f32.xlu0 %v845
    %v847 = vpop.xlane.xlu0 %846
    %v848 = vsel %vm224, %v842, 0.0
    %849 = vadd.xlane.f32.xlu0 %v848
    %v850 = vpop.xlane.xlu0 %849
    %v851 = vmul.f32 %v847, %v228
    %v852 = vmul.f32 %v850, %v228
    %v853 = vsub.f32 %v841, %v851
    %v854 = vsub.f32 %v842, %v852
    %v855 = vmul.f32 %v853, %v853
    %v856 = vmul.f32 %v854, %v854
    %v857 = vsel %vm174, %v855, 0.0
    %858 = vadd.xlane.f32.xlu0 %v857
    %v859 = vpop.xlane.xlu0 %858
    %v860 = vsel %vm224, %v856, 0.0
    %861 = vadd.xlane.f32.xlu0 %v860
    %v862 = vpop.xlane.xlu0 %861
    %v863 = vmul.f32 %v859, %v228
    %v864 = vmul.f32 %v862, %v228
    %v865 = vadd.f32 %v863, 1e-05
    %v866 = vadd.f32 %v864, 1e-05
    %v867 = vrsqrt.pop %v865
    %v868 = vrsqrt.pop %v866
    %v869 = vmul.f32 %v853, %v867
    %v870 = vmul.f32 %v854, %v868
    %v872 = vlaneseq
    %v873 = vshrl.u32 %v872, 7
    %v874 = vsub.s32 0, %v873
    %v875 = vrot.slane %v843, %v874
    %v877 = vmul.f32 %v869, %v875
    %v878 = vmul.f32 %v870, %v875
    %v880 = vlaneseq
    %v881 = vshrl.u32 %v880, 7
    %v882 = vsub.s32 0, %v881
    %v883 = vrot.slane %v844, %v882
    %v885 = vadd.f32 %v877, %v883
    %v886 = vadd.f32 %v878, %v883
    %v887 = vld [vmem:[%s14] sm:$0xff]
    %v888 = vld [vmem:[%s14 + $0x8] sm:$0xff]
    %v889 = vld [vmem:[%s14 + $0x10] sm:$0xff]
    %v890 = vld [vmem:[%s14 + $0x18] sm:$0xff]
    %v891 = vld [vmem:[%s14 + $0x20] sm:$0xff]
    %v892 = vld [vmem:[%s14 + $0x28] sm:$0xff]
    %v893 = vld [vmem:[%s14 + $0x30] sm:$0xff]
    %v894 = vld [vmem:[%s14 + $0x38] sm:$0xff]
    %v895 = vpack.c.bf16 %v886, %v885
    %v896 = vld [vmem:[%s15] sm:$0x3]
    %v898 = vlaneseq
    %v899 = vshrl.u32 %v898, 7
    %v900 = vsub.s32 0, %v899
    %v901 = vrot.slane %v896, %v900
    %v902 = vlaneseq
    %v903 = vshrl.u32 %v902, 7
    %v904 = vsub.s32 1, %v903
    %v905 = vrot.slane %v896, %v904
    %v916 = vunpack.c.l.b16 %v887
    %v917 = vunpack.c.h.b16 %v887
    %v918 = vunpack.c.l.b16 %v888
    %v919 = vunpack.c.h.b16 %v888
    %v920 = vunpack.c.l.b16 %v889
    %v921 = vunpack.c.h.b16 %v889
    %v922 = vunpack.c.l.b16 %v890
    %v923 = vunpack.c.h.b16 %v890
    %v924 = vunpack.c.l.b16 %v891
    %v925 = vunpack.c.h.b16 %v891
    %v926 = vunpack.c.l.b16 %v892
    %v927 = vunpack.c.h.b16 %v892
    %v928 = vunpack.c.l.b16 %v893
    %v929 = vunpack.c.h.b16 %v893
    %v930 = vunpack.c.l.b16 %v894
    %v931 = vunpack.c.h.b16 %v894
    %v932 = vpack.c.b16 %v918, %v916
    %v933 = vpack.c.b16 %v919, %v917
    %v934 = vpack.c.b16 %v922, %v920
    %v935 = vpack.c.b16 %v923, %v921
    %v936 = vpack.c.b16 %v926, %v924
    %v937 = vpack.c.b16 %v927, %v925
    %v938 = vpack.c.b16 %v930, %v928
    %v939 = vpack.c.b16 %v931, %v929
    %v949 = vsel %vm174, %v895, 0
    %951 = vmatprep.subr.bf16.mxu0 %v933
    %952 = vmatpush1.bf16.msra.mxu0 %v932
    %953 = vmatprep.subr.bf16.mxu0 %v935
    %954 = vmatpush1.bf16.msra.mxu0 %v934
    %955 = vmatprep.subr.bf16.mxu0 %v937
    %956 = vmatpush1.bf16.msra.mxu0 %v936
    %957 = vmatprep.subr.bf16.mxu0 %v939
    %958 = vmatpush1.bf16.msra.mxu0 %v938
    %959 = vmatprep.subr.bf16.mxu0 0
    %960 = vmatpush1.bf16.msra.mxu0 0
    %961 = vmatprep.subr.bf16.mxu0 0
    %962 = vmatpush1.bf16.msra.mxu0 0
    %963 = vmatprep.subr.bf16.mxu0 0
    %964 = vmatpush1.bf16.msra.mxu0 0
    %965 = vmatprep.subr.bf16.mxu0 0
    %966 = vmatpush1.bf16.msra.mxu0 0
    %967 = vmatprep.subr.bf16.mxu0 0
    %968 = vmatpush1.bf16.msra.mxu0 0
    %969 = vmatprep.subr.bf16.mxu0 0
    %970 = vmatpush1.bf16.msra.mxu0 0
    %971 = vmatprep.subr.bf16.mxu0 0
    %972 = vmatpush1.bf16.msra.mxu0 0
    %973 = vmatprep.subr.bf16.mxu0 0
    %974 = vmatpush1.bf16.msra.mxu0 0
    %975 = vmatprep.subr.bf16.mxu0 0
    %976 = vmatpush1.bf16.msra.mxu0 0
    %977 = vmatprep.subr.bf16.mxu0 0
    %978 = vmatpush1.bf16.msra.mxu0 0
    %979 = vmatprep.subr.bf16.mxu0 0
    %980 = vmatpush1.bf16.msra.mxu0 0
    %981 = vmatprep.subr.bf16.mxu0 0
    %982 = vmatpush1.bf16.msra.mxu0 0
    %983 = vmatprep.mubr.bf16.mxu0 0
    %984 = vmatmul.mubr.bf16.gmra.mrb[0].mxu0 %v949
    %v985 = vpop.f32.mrb[0].mxu0
    %v986 = vadd.f32 %v901, %v985
    %v987 = vpop.f32.mrb[0].mxu0
    %v988 = vadd.f32 %v905, %v987
    %v989 = vpop.f32.mrb[0].mxu0
    %v990 = vadd.f32 %v901, %v989
    %v991 = vpop.f32.mrb[0].mxu0
    %v992 = vadd.f32 %v905, %v991
    %993 = vdwg.mxu0
    %v994 = vmul.f32 %v986, 1.702
    %v995 = vmul.f32 %v988, 1.702
    %v996 = vmul.f32 %v990, 1.702
    %v997 = vmul.f32 %v992, 1.702
    %v998 = vxor.u32 %v994, 2147483648
    %v999 = vxor.u32 %v995, 2147483648
    %v1000 = vxor.u32 %v996, 2147483648
    %v1001 = vxor.u32 %v997, 2147483648
    %v1002 = vmul.f32 %v998, 1.442695
    %v1003 = vpow.pop %v1002
    %v1004 = vmul.f32 %v999, 1.442695
    %v1005 = vpow.pop %v1004
    %v1006 = vmul.f32 %v1000, 1.442695
    %v1007 = vpow.pop %v1006
    %v1008 = vmul.f32 %v1001, 1.442695
    %v1009 = vpow.pop %v1008
    %v1010 = vadd.f32 %v1003, 1.0
    %v1011 = vadd.f32 %v1005, 1.0
    %v1012 = vadd.f32 %v1007, 1.0
    %v1013 = vadd.f32 %v1009, 1.0
    %v1014 = vrcp.pop %v1010
    %v1015 = vmul.f32 1.0, %v1014
    %v1016 = vrcp.pop %v1011
    %v1017 = vmul.f32 1.0, %v1016
    %v1018 = vrcp.pop %v1012
    %v1019 = vmul.f32 1.0, %v1018
    %v1020 = vrcp.pop %v1013
    %v1021 = vmul.f32 1.0, %v1020
    %v1022 = vmul.f32 %v986, %v1015
    %v1023 = vmul.f32 %v988, %v1017
    %v1024 = vmul.f32 %v990, %v1019
    %v1025 = vmul.f32 %v992, %v1021
    %v1026 = vld [vmem:[%s16] sm:$0xf]
    %v1027 = vld [vmem:[%s16 + $0x4] sm:$0xf]
    %v1028 = vld [vmem:[%s16 + $0x8] sm:$0xf]
    %v1029 = vld [vmem:[%s16 + $0xc] sm:$0xf]
    %v1030 = vld [vmem:[%s16 + $0x10] sm:$0xf]
    %v1031 = vld [vmem:[%s16 + $0x14] sm:$0xf]
    %v1032 = vld [vmem:[%s16 + $0x18] sm:$0xf]
    %v1033 = vld [vmem:[%s16 + $0x1c] sm:$0xf]
    %v1034 = vld [vmem:[%s16 + $0x20] sm:$0xf]
    %v1035 = vld [vmem:[%s16 + $0x24] sm:$0xf]
    %v1036 = vld [vmem:[%s16 + $0x28] sm:$0xf]
    %v1037 = vld [vmem:[%s16 + $0x2c] sm:$0xf]
    %v1038 = vld [vmem:[%s16 + $0x30] sm:$0xf]
    %v1039 = vld [vmem:[%s16 + $0x34] sm:$0xf]
    %v1040 = vld [vmem:[%s16 + $0x38] sm:$0xf]
    %v1041 = vld [vmem:[%s16 + $0x3c] sm:$0xf]
    %v1042 = vld [vmem:[%s16 + $0x40] sm:$0xf]
    %v1043 = vld [vmem:[%s16 + $0x44] sm:$0xf]
    %v1044 = vld [vmem:[%s16 + $0x48] sm:$0xf]
    %v1045 = vld [vmem:[%s16 + $0x4c] sm:$0xf]
    %v1046 = vld [vmem:[%s16 + $0x50] sm:$0xf]
    %v1047 = vld [vmem:[%s16 + $0x54] sm:$0xf]
    %v1048 = vld [vmem:[%s16 + $0x58] sm:$0xf]
    %v1049 = vld [vmem:[%s16 + $0x5c] sm:$0xf]
    %v1050 = vld [vmem:[%s16 + $0x60] sm:$0xf]
    %v1051 = vld [vmem:[%s16 + $0x64] sm:$0xf]
    %v1052 = vld [vmem:[%s16 + $0x68] sm:$0xf]
    %v1053 = vld [vmem:[%s16 + $0x6c] sm:$0xf]
    %v1054 = vld [vmem:[%s16 + $0x70] sm:$0xf]
    %v1055 = vld [vmem:[%s16 + $0x74] sm:$0xf]
    %v1056 = vld [vmem:[%s16 + $0x78] sm:$0xf]
    %v1057 = vld [vmem:[%s16 + $0x7c] sm:$0xf]
    %v1058 = vpack.c.bf16 %v1024, %v1022
    %v1059 = vpack.c.bf16 %v1025, %v1023
    %v1092 = vunpack.c.l.b16 %v1026
    %v1093 = vunpack.c.l.b16 %v1027
    %v1094 = vunpack.c.l.b16 %v1028
    %v1095 = vunpack.c.l.b16 %v1029
    %v1096 = vunpack.c.l.b16 %v1030
    %v1097 = vunpack.c.l.b16 %v1031
    %v1098 = vunpack.c.l.b16 %v1032
    %v1099 = vunpack.c.l.b16 %v1033
    %v1100 = vunpack.c.l.b16 %v1034
    %v1101 = vunpack.c.l.b16 %v1035
    %v1102 = vunpack.c.l.b16 %v1036
    %v1103 = vunpack.c.l.b16 %v1037
    %v1104 = vunpack.c.l.b16 %v1038
    %v1105 = vunpack.c.l.b16 %v1039
    %v1106 = vunpack.c.l.b16 %v1040
    %v1107 = vunpack.c.l.b16 %v1041
    %v1108 = vunpack.c.l.b16 %v1042
    %v1109 = vunpack.c.l.b16 %v1043
    %v1110 = vunpack.c.l.b16 %v1044
    %v1111 = vunpack.c.l.b16 %v1045
    %v1112 = vunpack.c.l.b16 %v1046
    %v1113 = vunpack.c.l.b16 %v1047
    %v1114 = vunpack.c.l.b16 %v1048
    %v1115 = vunpack.c.l.b16 %v1049
    %v1116 = vunpack.c.l.b16 %v1050
    %v1117 = vunpack.c.l.b16 %v1051
    %v1118 = vunpack.c.l.b16 %v1052
    %v1119 = vunpack.c.l.b16 %v1053
    %v1120 = vunpack.c.l.b16 %v1054
    %v1121 = vunpack.c.l.b16 %v1055
    %v1122 = vunpack.c.l.b16 %v1056
    %v1123 = vunpack.c.l.b16 %v1057
    %v1124 = vpack.c.b16 %v1093, %v1092
    %v1125 = vpack.c.b16 %v1095, %v1094
    %v1126 = vpack.c.b16 %v1097, %v1096
    %v1127 = vpack.c.b16 %v1099, %v1098
    %v1128 = vpack.c.b16 %v1101, %v1100
    %v1129 = vpack.c.b16 %v1103, %v1102
    %v1130 = vpack.c.b16 %v1105, %v1104
    %v1131 = vpack.c.b16 %v1107, %v1106
    %v1132 = vpack.c.b16 %v1109, %v1108
    %v1133 = vpack.c.b16 %v1111, %v1110
    %v1134 = vpack.c.b16 %v1113, %v1112
    %v1135 = vpack.c.b16 %v1115, %v1114
    %v1136 = vpack.c.b16 %v1117, %v1116
    %v1137 = vpack.c.b16 %v1119, %v1118
    %v1138 = vpack.c.b16 %v1121, %v1120
    %v1139 = vpack.c.b16 %v1123, %v1122
    %1156 = vmatprep.subr.bf16.mxu0 0
    %1157 = vmatpush1.bf16.msra.mxu0 %v1124
    %1158 = vmatprep.subr.bf16.mxu0 0
    %1159 = vmatpush1.bf16.msra.mxu0 %v1125
    %1160 = vmatprep.subr.bf16.mxu0 0
    %1161 = vmatpush1.bf16.msra.mxu0 %v1126
    %1162 = vmatprep.subr.bf16.mxu0 0
    %1163 = vmatpush1.bf16.msra.mxu0 %v1127
    %1164 = vmatprep.subr.bf16.mxu0 0
    %1165 = vmatpush1.bf16.msra.mxu0 %v1128
    %1166 = vmatprep.subr.bf16.mxu0 0
    %1167 = vmatpush1.bf16.msra.mxu0 %v1129
    %1168 = vmatprep.subr.bf16.mxu0 0
    %1169 = vmatpush1.bf16.msra.mxu0 %v1130
    %1170 = vmatprep.subr.bf16.mxu0 0
    %1171 = vmatpush1.bf16.msra.mxu0 %v1131
    %1172 = vmatprep.subr.bf16.mxu0 0
    %1173 = vmatpush1.bf16.msra.mxu0 %v1132
    %1174 = vmatprep.subr.bf16.mxu0 0
    %1175 = vmatpush1.bf16.msra.mxu0 %v1133
    %1176 = vmatprep.subr.bf16.mxu0 0
    %1177 = vmatpush1.bf16.msra.mxu0 %v1134
    %1178 = vmatprep.subr.bf16.mxu0 0
    %1179 = vmatpush1.bf16.msra.mxu0 %v1135
    %1180 = vmatprep.subr.bf16.mxu0 0
    %1181 = vmatpush1.bf16.msra.mxu0 %v1136
    %1182 = vmatprep.subr.bf16.mxu0 0
    %1183 = vmatpush1.bf16.msra.mxu0 %v1137
    %1184 = vmatprep.subr.bf16.mxu0 0
    %1185 = vmatpush1.bf16.msra.mxu0 %v1138
    %1186 = vmatprep.subr.bf16.mxu0 0
    %1187 = vmatpush1.bf16.msra.mxu0 %v1139
    %1188 = vmatprep.mubr.bf16.mxu0 %v1059
    %1189 = vmatmul.mubr.bf16.gmra.mrb[0].mxu0 %v1058
    %v1190 = vpop.f32.mrb[0].mxu0
    %v1191 = vadd.f32 0.0, %v1190
    %v1192 = vpop.f32.mrb[0].mxu0
    %v1193 = vpop.f32.mrb[0].mxu0
    %v1194 = vadd.f32 0.0, %v1193
    %v1195 = vpop.f32.mrb[0].mxu0
    %1196 = vdwg.mxu0
    %v1197 = vadd.f32 %v841, %v1191
    %v1198 = vadd.f32 %v842, %v1194
    %v1199 = vld [vmem:[%s17] sm:$0x1]
    %v1201 = vlaneseq
    %v1202 = vshrl.u32 %v1201, 7
    %v1203 = vsub.s32 0, %v1202
    %v1204 = vrot.slane %v1199, %v1203
    %v1206 = vadd.f32 %v1197, %v1204
    %v1207 = vadd.f32 %v1198, %v1204
    %s1208 = scalar_lea.vmem %s6, 1
    %v1209 = vld [vmem:[%s1208] sm:$0x1]
    %s1210 = scalar_lea.vmem %s7, 1
    %v1211 = vld [vmem:[%s1210] sm:$0x1]
    %v1212 = vsel %vm174, %v1206, 0.0
    %1213 = vadd.xlane.f32.xlu0 %v1212
    %v1214 = vpop.xlane.xlu0 %1213
    %v1215 = vsel %vm224, %v1207, 0.0
    %1216 = vadd.xlane.f32.xlu0 %v1215
    %v1217 = vpop.xlane.xlu0 %1216
    %v1218 = vmul.f32 %v1214, %v228
    %v1219 = vmul.f32 %v1217, %v228
    %v1220 = vsub.f32 %v1206, %v1218
    %v1221 = vsub.f32 %v1207, %v1219
    %v1222 = vmul.f32 %v1220, %v1220
    %v1223 = vmul.f32 %v1221, %v1221
    %v1224 = vsel %vm174, %v1222, 0.0
    %1225 = vadd.xlane.f32.xlu0 %v1224
    %v1226 = vpop.xlane.xlu0 %1225
    %v1227 = vsel %vm224, %v1223, 0.0
    %1228 = vadd.xlane.f32.xlu0 %v1227
    %v1229 = vpop.xlane.xlu0 %1228
    %v1230 = vmul.f32 %v1226, %v228
    %v1231 = vmul.f32 %v1229, %v228
    %v1232 = vadd.f32 %v1230, 1e-05
    %v1233 = vadd.f32 %v1231, 1e-05
    %v1234 = vrsqrt.pop %v1232
    %v1235 = vrsqrt.pop %v1233
    %v1236 = vmul.f32 %v1220, %v1234
    %v1237 = vmul.f32 %v1221, %v1235
    %v1239 = vlaneseq
    %v1240 = vshrl.u32 %v1239, 7
    %v1241 = vsub.s32 0, %v1240
    %v1242 = vrot.slane %v1209, %v1241
    %v1244 = vmul.f32 %v1236, %v1242
    %v1245 = vmul.f32 %v1237, %v1242
    %v1247 = vlaneseq
    %v1248 = vshrl.u32 %v1247, 7
    %v1249 = vsub.s32 0, %v1248
    %v1250 = vrot.slane %v1211, %v1249
    %v1252 = vadd.f32 %v1244, %v1250
    %v1253 = vadd.f32 %v1245, %v1250
    %s1254 = scalar_lea.vmem %s8, 64
    %v1255 = vld [vmem:[%s1254] sm:$0xff]
    %v1256 = vld [vmem:[%s1254 + $0x8] sm:$0xff]
    %v1257 = vld [vmem:[%s1254 + $0x10] sm:$0xff]
    %v1258 = vld [vmem:[%s1254 + $0x18] sm:$0xff]
    %v1259 = vld [vmem:[%s1254 + $0x20] sm:$0xff]
    %v1260 = vld [vmem:[%s1254 + $0x28] sm:$0xff]
    %v1261 = vld [vmem:[%s1254 + $0x30] sm:$0xff]
    %v1262 = vld [vmem:[%s1254 + $0x38] sm:$0xff]
    %v1263 = vpack.c.bf16 %v1253, %v1252
    %s1264 = scalar_lea.vmem %s9, 2
    %v1265 = vld [vmem:[%s1264] sm:$0x3]
    %v1267 = vlaneseq
    %v1268 = vshrl.u32 %v1267, 7
    %v1269 = vsub.s32 0, %v1268
    %v1270 = vrot.slane %v1265, %v1269
    %v1271 = vlaneseq
    %v1272 = vshrl.u32 %v1271, 7
    %v1273 = vsub.s32 1, %v1272
    %v1274 = vrot.slane %v1265, %v1273
    %v1285 = vunpack.c.l.b16 %v1255
    %v1286 = vunpack.c.h.b16 %v1255
    %v1287 = vunpack.c.l.b16 %v1256
    %v1288 = vunpack.c.h.b16 %v1256
    %v1289 = vunpack.c.l.b16 %v1257
    %v1290 = vunpack.c.h.b16 %v1257
    %v1291 = vunpack.c.l.b16 %v1258
    %v1292 = vunpack.c.h.b16 %v1258
    %v1293 = vunpack.c.l.b16 %v1259
    %v1294 = vunpack.c.h.b16 %v1259
    %v1295 = vunpack.c.l.b16 %v1260
    %v1296 = vunpack.c.h.b16 %v1260
    %v1297 = vunpack.c.l.b16 %v1261
    %v1298 = vunpack.c.h.b16 %v1261
    %v1299 = vunpack.c.l.b16 %v1262
    %v1300 = vunpack.c.h.b16 %v1262
    %v1301 = vpack.c.b16 %v1287, %v1285
    %v1302 = vpack.c.b16 %v1288, %v1286
    %v1303 = vpack.c.b16 %v1291, %v1289
    %v1304 = vpack.c.b16 %v1292, %v1290
    %v1305 = vpack.c.b16 %v1295, %v1293
    %v1306 = vpack.c.b16 %v1296, %v1294
    %v1307 = vpack.c.b16 %v1299, %v1297
    %v1308 = vpack.c.b16 %v1300, %v1298
    %v1318 = vsel %vm174, %v1263, 0
    %1320 = vmatprep.subr.bf16.mxu0 %v1302
    %1321 = vmatpush1.bf16.msra.mxu0 %v1301
    %1322 = vmatprep.subr.bf16.mxu0 %v1304
    %1323 = vmatpush1.bf16.msra.mxu0 %v1303
    %1324 = vmatprep.subr.bf16.mxu0 %v1306
    %1325 = vmatpush1.bf16.msra.mxu0 %v1305
    %1326 = vmatprep.subr.bf16.mxu0 %v1308
    %1327 = vmatpush1.bf16.msra.mxu0 %v1307
    %1328 = vmatprep.subr.bf16.mxu0 0
    %1329 = vmatpush1.bf16.msra.mxu0 0
    %1330 = vmatprep.subr.bf16.mxu0 0
    %1331 = vmatpush1.bf16.msra.mxu0 0
    %1332 = vmatprep.subr.bf16.mxu0 0
    %1333 = vmatpush1.bf16.msra.mxu0 0
    %1334 = vmatprep.subr.bf16.mxu0 0
    %1335 = vmatpush1.bf16.msra.mxu0 0
    %1336 = vmatprep.subr.bf16.mxu0 0
    %1337 = vmatpush1.bf16.msra.mxu0 0
    %1338 = vmatprep.subr.bf16.mxu0 0
    %1339 = vmatpush1.bf16.msra.mxu0 0
    %1340 = vmatprep.subr.bf16.mxu0 0
    %1341 = vmatpush1.bf16.msra.mxu0 0
    %1342 = vmatprep.subr.bf16.mxu0 0
    %1343 = vmatpush1.bf16.msra.mxu0 0
    %1344 = vmatprep.subr.bf16.mxu0 0
    %1345 = vmatpush1.bf16.msra.mxu0 0
    %1346 = vmatprep.subr.bf16.mxu0 0
    %1347 = vmatpush1.bf16.msra.mxu0 0
    %1348 = vmatprep.subr.bf16.mxu0 0
    %1349 = vmatpush1.bf16.msra.mxu0 0
    %1350 = vmatprep.subr.bf16.mxu0 0
    %1351 = vmatpush1.bf16.msra.mxu0 0
    %1352 = vmatprep.mubr.bf16.mxu0 0
    %1353 = vmatmul.mubr.bf16.gmra.mrb[0].mxu0 %v1318
    %v1354 = vpop.f32.mrb[0].mxu0
    %v1355 = vadd.f32 %v1270, %v1354
    %v1356 = vpop.f32.mrb[0].mxu0
    %v1357 = vadd.f32 %v1274, %v1356
    %v1358 = vpop.f32.mrb[0].mxu0
    %v1359 = vadd.f32 %v1270, %v1358
    %v1360 = vpop.f32.mrb[0].mxu0
    %v1361 = vadd.f32 %v1274, %v1360
    %1362 = vdwg.mxu0
    %s1363 = scalar_lea.vmem %s10, 32
    %v1364 = vld [vmem:[%s1363] sm:$0xf]
    %v1365 = vld [vmem:[%s1363 + $0x4] sm:$0xf]
    %v1366 = vld [vmem:[%s1363 + $0x8] sm:$0xf]
    %v1367 = vld [vmem:[%s1363 + $0xc] sm:$0xf]
    %v1368 = vld [vmem:[%s1363 + $0x10] sm:$0xf]
    %v1369 = vld [vmem:[%s1363 + $0x14] sm:$0xf]
    %v1370 = vld [vmem:[%s1363 + $0x18] sm:$0xf]
    %v1371 = vld [vmem:[%s1363 + $0x1c] sm:$0xf]
    %v1372 = vpack.c.bf16 %v1359, %v1355
    %1374 = vrot.lane.b32.xlu0 %v1372, 64
    %v1375 = vpop.permute.xlu0 %1374
    %v1377 = vsel %vm472, %v1372, 0
    %v1380 = vsel %vm472, %v1375, 0
    %1382 = vmatprep.subr.bf16.mxu0 0
    %1383 = vmatpush1.bf16.xpose.msra.mxu0 %v1380
    %1384 = vmatprep.subr.bf16.mxu0 0
    %1385 = vmatpush1.bf16.xpose.msra.mxu0 0
    %1386 = vmatprep.subr.bf16.mxu0 0
    %1387 = vmatpush1.bf16.xpose.msra.mxu0 0
    %1388 = vmatprep.subr.bf16.mxu0 0
    %1389 = vmatpush1.bf16.xpose.msra.mxu0 0
    %1390 = vmatprep.subr.bf16.mxu0 0
    %1391 = vmatpush1.bf16.xpose.msra.mxu0 0
    %1392 = vmatprep.subr.bf16.mxu0 0
    %1393 = vmatpush1.bf16.xpose.msra.mxu0 0
    %1394 = vmatprep.subr.bf16.mxu0 0
    %1395 = vmatpush1.bf16.xpose.msra.mxu0 0
    %1396 = vmatprep.subr.bf16.mxu0 0
    %1397 = vmatpush1.bf16.xpose.msra.mxu0 0
    %1398 = vmatprep.subr.bf16.mxu0 0
    %1399 = vmatpush1.bf16.xpose.msra.mxu0 0
    %1400 = vmatprep.subr.bf16.mxu0 0
    %1401 = vmatpush1.bf16.xpose.msra.mxu0 0
    %1402 = vmatprep.subr.bf16.mxu0 0
    %1403 = vmatpush1.bf16.xpose.msra.mxu0 0
    %1404 = vmatprep.subr.bf16.mxu0 0
    %1405 = vmatpush1.bf16.xpose.msra.mxu0 0
    %1406 = vmatprep.subr.bf16.mxu0 0
    %1407 = vmatpush1.bf16.xpose.msra.mxu0 0
    %1408 = vmatprep.subr.bf16.mxu0 0
    %1409 = vmatpush1.bf16.xpose.msra.mxu0 0
    %1410 = vmatprep.subr.bf16.mxu0 0
    %1411 = vmatpush1.bf16.xpose.msra.mxu0 0
    %1412 = vmatprep.subr.bf16.mxu0 0
    %1413 = vmatpush1.bf16.xpose.msra.mxu0 0
    %1414 = vmatprep.mubr.bf16.mxu0 0
    %1415 = vmatmul.mubr.bf16.gmra.mrb[0].mxu0 %v1377
    %v1416 = vpop.f32.mrb[0].mxu0
    %v1417 = vadd.f32 %v307, %v1416
    %v1418 = vpop.f32.mrb[0].mxu0
    %v1419 = vpop.f32.mrb[0].mxu0
    %v1420 = vadd.f32 %v308, %v1419
    %v1421 = vpop.f32.mrb[0].mxu0
    %1422 = vdwg.mxu0
    %v1423 = vsel %vm520, %v1417, -inf
    %1424 = vmax.xlane.f32.xlu0 %v1423
    %v1425 = vpop.xlane.xlu0 %1424
    %v1426 = vsel %vm524, %v1420, -inf
    %1427 = vmax.xlane.f32.xlu0 %v1426
    %v1428 = vpop.xlane.xlu0 %1427
    %v1429 = vsub.f32 %v1417, %v1425
    %v1430 = vsub.f32 %v1420, %v1428
    %v1431 = vmul.f32 %v1429, 1.442695
    %v1432 = vpow.pop %v1431
    %v1433 = vmul.f32 %v1430, 1.442695
    %v1434 = vpow.pop %v1433
    %v1435 = vsel %vm520, %v1432, 0.0
    %1436 = vadd.xlane.f32.xlu0 %v1435
    %v1437 = vpop.xlane.xlu0 %1436
    %v1438 = vsel %vm524, %v1434, 0.0
    %1439 = vadd.xlane.f32.xlu0 %v1438
    %v1440 = vpop.xlane.xlu0 %1439
    %v1441 = vrcp.pop %v1437
    %v1442 = vrcp.pop %v1440
    %v1443 = vmul.f32 %v1432, %v1441
    %v1444 = vmul.f32 %v1434, %v1442
    %v1445 = vpack.c.bf16 %v1444, %v1443
    %v1446 = vpack.c.bf16 %v1361, %v1357
    %v1448 = vsel %vm520, %v1445, 0
    %v1451 = vsel %vm549, %v1446, 0
    %1453 = vmatprep.subr.bf16.mxu0 0
    %1454 = vmatpush1.bf16.msra.mxu0 %v1451
    %1455 = vmatprep.subr.bf16.mxu0 0
    %1456 = vmatpush1.bf16.msra.mxu0 0
    %1457 = vmatprep.subr.bf16.mxu0 0
    %1458 = vmatpush1.bf16.msra.mxu0 0
    %1459 = vmatprep.subr.bf16.mxu0 0
    %1460 = vmatpush1.bf16.msra.mxu0 0
    %1461 = vmatprep.subr.bf16.mxu0 0
    %1462 = vmatpush1.bf16.msra.mxu0 0
    %1463 = vmatprep.subr.bf16.mxu0 0
    %1464 = vmatpush1.bf16.msra.mxu0 0
    %1465 = vmatprep.subr.bf16.mxu0 0
    %1466 = vmatpush1.bf16.msra.mxu0 0
    %1467 = vmatprep.subr.bf16.mxu0 0
    %1468 = vmatpush1.bf16.msra.mxu0 0
    %1469 = vmatprep.subr.bf16.mxu0 0
    %1470 = vmatpush1.bf16.msra.mxu0 0
    %1471 = vmatprep.subr.bf16.mxu0 0
    %1472 = vmatpush1.bf16.msra.mxu0 0
    %1473 = vmatprep.subr.bf16.mxu0 0
    %1474 = vmatpush1.bf16.msra.mxu0 0
    %1475 = vmatprep.subr.bf16.mxu0 0
    %1476 = vmatpush1.bf16.msra.mxu0 0
    %1477 = vmatprep.subr.bf16.mxu0 0
    %1478 = vmatpush1.bf16.msra.mxu0 0
    %1479 = vmatprep.subr.bf16.mxu0 0
    %1480 = vmatpush1.bf16.msra.mxu0 0
    %1481 = vmatprep.subr.bf16.mxu0 0
    %1482 = vmatpush1.bf16.msra.mxu0 0
    %1483 = vmatprep.subr.bf16.mxu0 0
    %1484 = vmatpush1.bf16.msra.mxu0 0
    %1485 = vmatprep.mubr.bf16.mxu0 0
    %1486 = vmatmul.mubr.bf16.gmra.mrb[0].mxu0 %v1448
    %v1487 = vpop.f32.mrb[0].mxu0
    %v1488 = vadd.f32 0.0, %v1487
    %v1489 = vpop.f32.mrb[0].mxu0
    %v1490 = vpop.f32.mrb[0].mxu0
    %v1491 = vadd.f32 0.0, %v1490
    %v1492 = vpop.f32.mrb[0].mxu0
    %1493 = vdwg.mxu0
    %v1494 = vpack.c.bf16 %v1491, %v1488
    %1495 = vrot.lane.b32.xlu0 %v1372, 96
    %v1496 = vpop.permute.xlu0 %1495
    %1497 = vrot.lane.b32.xlu0 %v1372, 32
    %v1498 = vpop.permute.xlu0 %1497
    %v1500 = vsel %vm472, %v1496, 0
    %v1503 = vsel %vm472, %v1498, 0
    %1505 = vmatprep.subr.bf16.mxu0 0
    %1506 = vmatpush1.bf16.xpose.msra.mxu0 %v1503
    %1507 = vmatprep.subr.bf16.mxu0 0
    %1508 = vmatpush1.bf16.xpose.msra.mxu0 0
    %1509 = vmatprep.subr.bf16.mxu0 0
    %1510 = vmatpush1.bf16.xpose.msra.mxu0 0
    %1511 = vmatprep.subr.bf16.mxu0 0
    %1512 = vmatpush1.bf16.xpose.msra.mxu0 0
    %1513 = vmatprep.subr.bf16.mxu0 0
    %1514 = vmatpush1.bf16.xpose.msra.mxu0 0
    %1515 = vmatprep.subr.bf16.mxu0 0
    %1516 = vmatpush1.bf16.xpose.msra.mxu0 0
    %1517 = vmatprep.subr.bf16.mxu0 0
    %1518 = vmatpush1.bf16.xpose.msra.mxu0 0
    %1519 = vmatprep.subr.bf16.mxu0 0
    %1520 = vmatpush1.bf16.xpose.msra.mxu0 0
    %1521 = vmatprep.subr.bf16.mxu0 0
    %1522 = vmatpush1.bf16.xpose.msra.mxu0 0
    %1523 = vmatprep.subr.bf16.mxu0 0
    %1524 = vmatpush1.bf16.xpose.msra.mxu0 0
    %1525 = vmatprep.subr.bf16.mxu0 0
    %1526 = vmatpush1.bf16.xpose.msra.mxu0 0
    %1527 = vmatprep.subr.bf16.mxu0 0
    %1528 = vmatpush1.bf16.xpose.msra.mxu0 0
    %1529 = vmatprep.subr.bf16.mxu0 0
    %1530 = vmatpush1.bf16.xpose.msra.mxu0 0
    %1531 = vmatprep.subr.bf16.mxu0 0
    %1532 = vmatpush1.bf16.xpose.msra.mxu0 0
    %1533 = vmatprep.subr.bf16.mxu0 0
    %1534 = vmatpush1.bf16.xpose.msra.mxu0 0
    %1535 = vmatprep.subr.bf16.mxu0 0
    %1536 = vmatpush1.bf16.xpose.msra.mxu0 0
    %1537 = vmatprep.mubr.bf16.mxu0 0
    %1538 = vmatmul.mubr.bf16.gmra.mrb[0].mxu0 %v1500
    %v1539 = vpop.f32.mrb[0].mxu0
    %v1540 = vadd.f32 %v307, %v1539
    %v1541 = vpop.f32.mrb[0].mxu0
    %v1542 = vpop.f32.mrb[0].mxu0
    %v1543 = vadd.f32 %v308, %v1542
    %v1544 = vpop.f32.mrb[0].mxu0
    %1545 = vdwg.mxu0
    %v1546 = vsel %vm520, %v1540, -inf
    %1547 = vmax.xlane.f32.xlu0 %v1546
    %v1548 = vpop.xlane.xlu0 %1547
    %v1549 = vsel %vm524, %v1543, -inf
    %1550 = vmax.xlane.f32.xlu0 %v1549
    %v1551 = vpop.xlane.xlu0 %1550
    %v1552 = vsub.f32 %v1540, %v1548
    %v1553 = vsub.f32 %v1543, %v1551
    %v1554 = vmul.f32 %v1552, 1.442695
    %v1555 = vpow.pop %v1554
    %v1556 = vmul.f32 %v1553, 1.442695
    %v1557 = vpow.pop %v1556
    %v1558 = vsel %vm520, %v1555, 0.0
    %1559 = vadd.xlane.f32.xlu0 %v1558
    %v1560 = vpop.xlane.xlu0 %1559
    %v1561 = vsel %vm524, %v1557, 0.0
    %1562 = vadd.xlane.f32.xlu0 %v1561
    %v1563 = vpop.xlane.xlu0 %1562
    %v1564 = vrcp.pop %v1560
    %v1565 = vrcp.pop %v1563
    %v1566 = vmul.f32 %v1555, %v1564
    %v1567 = vmul.f32 %v1557, %v1565
    %v1568 = vpack.c.bf16 %v1567, %v1566
    %1570 = vrot.lane.b32.xlu0 %v1446, 96
    %v1571 = vpop.permute.xlu0 %1570
    %v1573 = vsel %vm520, %v1568, 0
    %v1576 = vsel %vm549, %v1571, 0
    %1578 = vmatprep.subr.bf16.mxu0 0
    %1579 = vmatpush1.bf16.msra.mxu0 %v1576
    %1580 = vmatprep.subr.bf16.mxu0 0
    %1581 = vmatpush1.bf16.msra.mxu0 0
    %1582 = vmatprep.subr.bf16.mxu0 0
    %1583 = vmatpush1.bf16.msra.mxu0 0
    %1584 = vmatprep.subr.bf16.mxu0 0
    %1585 = vmatpush1.bf16.msra.mxu0 0
    %1586 = vmatprep.subr.bf16.mxu0 0
    %1587 = vmatpush1.bf16.msra.mxu0 0
    %1588 = vmatprep.subr.bf16.mxu0 0
    %1589 = vmatpush1.bf16.msra.mxu0 0
    %1590 = vmatprep.subr.bf16.mxu0 0
    %1591 = vmatpush1.bf16.msra.mxu0 0
    %1592 = vmatprep.subr.bf16.mxu0 0
    %1593 = vmatpush1.bf16.msra.mxu0 0
    %1594 = vmatprep.subr.bf16.mxu0 0
    %1595 = vmatpush1.bf16.msra.mxu0 0
    %1596 = vmatprep.subr.bf16.mxu0 0
    %1597 = vmatpush1.bf16.msra.mxu0 0
    %1598 = vmatprep.subr.bf16.mxu0 0
    %1599 = vmatpush1.bf16.msra.mxu0 0
    %1600 = vmatprep.subr.bf16.mxu0 0
    %1601 = vmatpush1.bf16.msra.mxu0 0
    %1602 = vmatprep.subr.bf16.mxu0 0
    %1603 = vmatpush1.bf16.msra.mxu0 0
    %1604 = vmatprep.subr.bf16.mxu0 0
    %1605 = vmatpush1.bf16.msra.mxu0 0
    %1606 = vmatprep.subr.bf16.mxu0 0
    %1607 = vmatpush1.bf16.msra.mxu0 0
    %1608 = vmatprep.subr.bf16.mxu0 0
    %1609 = vmatpush1.bf16.msra.mxu0 0
    %1610 = vmatprep.mubr.bf16.mxu0 0
    %1611 = vmatmul.mubr.bf16.gmra.mrb[0].mxu0 %v1573
    %v1612 = vpop.f32.mrb[0].mxu0
    %v1613 = vadd.f32 0.0, %v1612
    %v1614 = vpop.f32.mrb[0].mxu0
    %v1615 = vpop.f32.mrb[0].mxu0
    %v1616 = vadd.f32 0.0, %v1615
    %v1617 = vpop.f32.mrb[0].mxu0
    %1618 = vdwg.mxu0
    %v1619 = vpack.c.bf16 %v1616, %v1613
    %v1624 = vunpack.c.l.b16 %v1368
    %v1625 = vunpack.c.l.b16 %v1369
    %v1626 = vunpack.c.l.b16 %v1370
    %v1627 = vunpack.c.l.b16 %v1371
    %v1628 = vpack.c.b16 %v1625, %v1624
    %v1629 = vpack.c.b16 %v1627, %v1626
    %v1633 = vsel %vm472, %v1619, 0
    %1635 = vmatprep.subr.bf16.mxu0 0
    %1636 = vmatpush1.bf16.msra.mxu0 %v1628
    %1637 = vmatprep.subr.bf16.mxu0 0
    %1638 = vmatpush1.bf16.msra.mxu0 %v1629
    %1639 = vmatprep.subr.bf16.mxu0 0
    %1640 = vmatpush1.bf16.msra.mxu0 0
    %1641 = vmatprep.subr.bf16.mxu0 0
    %1642 = vmatpush1.bf16.msra.mxu0 0
    %1643 = vmatprep.subr.bf16.mxu0 0
    %1644 = vmatpush1.bf16.msra.mxu0 0
    %1645 = vmatprep.subr.bf16.mxu0 0
    %1646 = vmatpush1.bf16.msra.mxu0 0
    %1647 = vmatprep.subr.bf16.mxu0 0
    %1648 = vmatpush1.bf16.msra.mxu0 0
    %1649 = vmatprep.subr.bf16.mxu0 0
    %1650 = vmatpush1.bf16.msra.mxu0 0
    %1651 = vmatprep.subr.bf16.mxu0 0
    %1652 = vmatpush1.bf16.msra.mxu0 0
    %1653 = vmatprep.subr.bf16.mxu0 0
    %1654 = vmatpush1.bf16.msra.mxu0 0
    %1655 = vmatprep.subr.bf16.mxu0 0
    %1656 = vmatpush1.bf16.msra.mxu0 0
    %1657 = vmatprep.subr.bf16.mxu0 0
    %1658 = vmatpush1.bf16.msra.mxu0 0
    %1659 = vmatprep.subr.bf16.mxu0 0
    %1660 = vmatpush1.bf16.msra.mxu0 0
    %1661 = vmatprep.subr.bf16.mxu0 0
    %1662 = vmatpush1.bf16.msra.mxu0 0
    %1663 = vmatprep.subr.bf16.mxu0 0
    %1664 = vmatpush1.bf16.msra.mxu0 0
    %1665 = vmatprep.subr.bf16.mxu0 0
    %1666 = vmatpush1.bf16.msra.mxu0 0
    %1667 = vmatprep.mubr.bf16.mxu0 0
    %1668 = vmatmul.mubr.bf16.gmra.mrb[0].mxu0 %v1633
    %v1669 = vpop.f32.mrb[0].mxu0
    %v1670 = vadd.f32 0.0, %v1669
    %v1671 = vpop.f32.mrb[0].mxu0
    %v1672 = vpop.f32.mrb[0].mxu0
    %v1673 = vadd.f32 0.0, %v1672
    %v1674 = vpop.f32.mrb[0].mxu0
    %1675 = vdwg.mxu0
    %v1680 = vunpack.c.l.b16 %v1364
    %v1681 = vunpack.c.l.b16 %v1365
    %v1682 = vunpack.c.l.b16 %v1366
    %v1683 = vunpack.c.l.b16 %v1367
    %v1684 = vpack.c.b16 %v1681, %v1680
    %v1685 = vpack.c.b16 %v1683, %v1682
    %v1689 = vsel %vm472, %v1494, 0
    %1691 = vmatprep.subr.bf16.mxu0 0
    %1692 = vmatpush1.bf16.msra.mxu0 %v1684
    %1693 = vmatprep.subr.bf16.mxu0 0
    %1694 = vmatpush1.bf16.msra.mxu0 %v1685
    %1695 = vmatprep.subr.bf16.mxu0 0
    %1696 = vmatpush1.bf16.msra.mxu0 0
    %1697 = vmatprep.subr.bf16.mxu0 0
    %1698 = vmatpush1.bf16.msra.mxu0 0
    %1699 = vmatprep.subr.bf16.mxu0 0
    %1700 = vmatpush1.bf16.msra.mxu0 0
    %1701 = vmatprep.subr.bf16.mxu0 0
    %1702 = vmatpush1.bf16.msra.mxu0 0
    %1703 = vmatprep.subr.bf16.mxu0 0
    %1704 = vmatpush1.bf16.msra.mxu0 0
    %1705 = vmatprep.subr.bf16.mxu0 0
    %1706 = vmatpush1.bf16.msra.mxu0 0
    %1707 = vmatprep.subr.bf16.mxu0 0
    %1708 = vmatpush1.bf16.msra.mxu0 0
    %1709 = vmatprep.subr.bf16.mxu0 0
    %1710 = vmatpush1.bf16.msra.mxu0 0
    %1711 = vmatprep.subr.bf16.mxu0 0
    %1712 = vmatpush1.bf16.msra.mxu0 0
    %1713 = vmatprep.subr.bf16.mxu0 0
    %1714 = vmatpush1.bf16.msra.mxu0 0
    %1715 = vmatprep.subr.bf16.mxu0 0
    %1716 = vmatpush1.bf16.msra.mxu0 0
    %1717 = vmatprep.subr.bf16.mxu0 0
    %1718 = vmatpush1.bf16.msra.mxu0 0
    %1719 = vmatprep.subr.bf16.mxu0 0
    %1720 = vmatpush1.bf16.msra.mxu0 0
    %1721 = vmatprep.subr.bf16.mxu0 0
    %1722 = vmatpush1.bf16.msra.mxu0 0
    %1723 = vmatprep.mubr.bf16.mxu0 0
    %1724 = vmatmul.mubr.bf16.gmra.mrb[0].mxu0 %v1689
    %v1725 = vpop.f32.mrb[0].mxu0
    %v1726 = vadd.f32 %v1670, %v1725
    %v1727 = vpop.f32.mrb[0].mxu0
    %v1728 = vpop.f32.mrb[0].mxu0
    %v1729 = vadd.f32 %v1673, %v1728
    %v1730 = vpop.f32.mrb[0].mxu0
    %1731 = vdwg.mxu0
    %v1732 = vadd.f32 %v1206, %v1726
    %v1733 = vadd.f32 %v1207, %v1729
    %s1734 = scalar_lea.vmem %s11, 1
    %v1735 = vld [vmem:[%s1734] sm:$0x1]
    %v1737 = vlaneseq
    %v1738 = vshrl.u32 %v1737, 7
    %v1739 = vsub.s32 0, %v1738
    %v1740 = vrot.slane %v1735, %v1739
    %v1742 = vadd.f32 %v1732, %v1740
    %v1743 = vadd.f32 %v1733, %v1740
    %s1744 = scalar_lea.vmem %s12, 1
    %v1745 = vld [vmem:[%s1744] sm:$0x1]
    %s1746 = scalar_lea.vmem %s13, 1
    %v1747 = vld [vmem:[%s1746] sm:$0x1]
    %v1748 = vsel %vm174, %v1742, 0.0
    %1749 = vadd.xlane.f32.xlu0 %v1748
    %v1750 = vpop.xlane.xlu0 %1749
    %v1751 = vsel %vm224, %v1743, 0.0
    %1752 = vadd.xlane.f32.xlu0 %v1751
    %v1753 = vpop.xlane.xlu0 %1752
    %v1754 = vmul.f32 %v1750, %v228
    %v1755 = vmul.f32 %v1753, %v228
    %v1756 = vsub.f32 %v1742, %v1754
    %v1757 = vsub.f32 %v1743, %v1755
    %v1758 = vmul.f32 %v1756, %v1756
    %v1759 = vmul.f32 %v1757, %v1757
    %v1760 = vsel %vm174, %v1758, 0.0
    %1761 = vadd.xlane.f32.xlu0 %v1760
    %v1762 = vpop.xlane.xlu0 %1761
    %v1763 = vsel %vm224, %v1759, 0.0
    %1764 = vadd.xlane.f32.xlu0 %v1763
    %v1765 = vpop.xlane.xlu0 %1764
    %v1766 = vmul.f32 %v1762, %v228
    %v1767 = vmul.f32 %v1765, %v228
    %v1768 = vadd.f32 %v1766, 1e-05
    %v1769 = vadd.f32 %v1767, 1e-05
    %v1770 = vrsqrt.pop %v1768
    %v1771 = vrsqrt.pop %v1769
    %v1772 = vmul.f32 %v1756, %v1770
    %v1773 = vmul.f32 %v1757, %v1771
    %v1775 = vlaneseq
    %v1776 = vshrl.u32 %v1775, 7
    %v1777 = vsub.s32 0, %v1776
    %v1778 = vrot.slane %v1745, %v1777
    %v1780 = vmul.f32 %v1772, %v1778
    %v1781 = vmul.f32 %v1773, %v1778
    %v1783 = vlaneseq
    %v1784 = vshrl.u32 %v1783, 7
    %v1785 = vsub.s32 0, %v1784
    %v1786 = vrot.slane %v1747, %v1785
    %v1788 = vadd.f32 %v1780, %v1786
    %v1789 = vadd.f32 %v1781, %v1786
    %s1790 = scalar_lea.vmem %s14, 64
    %v1791 = vld [vmem:[%s1790] sm:$0xff]
    %v1792 = vld [vmem:[%s1790 + $0x8] sm:$0xff]
    %v1793 = vld [vmem:[%s1790 + $0x10] sm:$0xff]
    %v1794 = vld [vmem:[%s1790 + $0x18] sm:$0xff]
    %v1795 = vld [vmem:[%s1790 + $0x20] sm:$0xff]
    %v1796 = vld [vmem:[%s1790 + $0x28] sm:$0xff]
    %v1797 = vld [vmem:[%s1790 + $0x30] sm:$0xff]
    %v1798 = vld [vmem:[%s1790 + $0x38] sm:$0xff]
    %v1799 = vpack.c.bf16 %v1789, %v1788
    %s1800 = scalar_lea.vmem %s15, 2
    %v1801 = vld [vmem:[%s1800] sm:$0x3]
    %v1803 = vlaneseq
    %v1804 = vshrl.u32 %v1803, 7
    %v1805 = vsub.s32 0, %v1804
    %v1806 = vrot.slane %v1801, %v1805
    %v1807 = vlaneseq
    %v1808 = vshrl.u32 %v1807, 7
    %v1809 = vsub.s32 1, %v1808
    %v1810 = vrot.slane %v1801, %v1809
    %v1821 = vunpack.c.l.b16 %v1791
    %v1822 = vunpack.c.h.b16 %v1791
    %v1823 = vunpack.c.l.b16 %v1792
    %v1824 = vunpack.c.h.b16 %v1792
    %v1825 = vunpack.c.l.b16 %v1793
    %v1826 = vunpack.c.h.b16 %v1793
    %v1827 = vunpack.c.l.b16 %v1794
    %v1828 = vunpack.c.h.b16 %v1794
    %v1829 = vunpack.c.l.b16 %v1795
    %v1830 = vunpack.c.h.b16 %v1795
    %v1831 = vunpack.c.l.b16 %v1796
    %v1832 = vunpack.c.h.b16 %v1796
    %v1833 = vunpack.c.l.b16 %v1797
    %v1834 = vunpack.c.h.b16 %v1797
    %v1835 = vunpack.c.l.b16 %v1798
    %v1836 = vunpack.c.h.b16 %v1798
    %v1837 = vpack.c.b16 %v1823, %v1821
    %v1838 = vpack.c.b16 %v1824, %v1822
    %v1839 = vpack.c.b16 %v1827, %v1825
    %v1840 = vpack.c.b16 %v1828, %v1826
    %v1841 = vpack.c.b16 %v1831, %v1829
    %v1842 = vpack.c.b16 %v1832, %v1830
    %v1843 = vpack.c.b16 %v1835, %v1833
    %v1844 = vpack.c.b16 %v1836, %v1834
    %v1854 = vsel %vm174, %v1799, 0
    %1856 = vmatprep.subr.bf16.mxu0 %v1838
    %1857 = vmatpush1.bf16.msra.mxu0 %v1837
    %1858 = vmatprep.subr.bf16.mxu0 %v1840
    %1859 = vmatpush1.bf16.msra.mxu0 %v1839
    %1860 = vmatprep.subr.bf16.mxu0 %v1842
    %1861 = vmatpush1.bf16.msra.mxu0 %v1841
    %1862 = vmatprep.subr.bf16.mxu0 %v1844
    %1863 = vmatpush1.bf16.msra.mxu0 %v1843
    %1864 = vmatprep.subr.bf16.mxu0 0
    %1865 = vmatpush1.bf16.msra.mxu0 0
    %1866 = vmatprep.subr.bf16.mxu0 0
    %1867 = vmatpush1.bf16.msra.mxu0 0
    %1868 = vmatprep.subr.bf16.mxu0 0
    %1869 = vmatpush1.bf16.msra.mxu0 0
    %1870 = vmatprep.subr.bf16.mxu0 0
    %1871 = vmatpush1.bf16.msra.mxu0 0
    %1872 = vmatprep.subr.bf16.mxu0 0
    %1873 = vmatpush1.bf16.msra.mxu0 0
    %1874 = vmatprep.subr.bf16.mxu0 0
    %1875 = vmatpush1.bf16.msra.mxu0 0
    %1876 = vmatprep.subr.bf16.mxu0 0
    %1877 = vmatpush1.bf16.msra.mxu0 0
    %1878 = vmatprep.subr.bf16.mxu0 0
    %1879 = vmatpush1.bf16.msra.mxu0 0
    %1880 = vmatprep.subr.bf16.mxu0 0
    %1881 = vmatpush1.bf16.msra.mxu0 0
    %1882 = vmatprep.subr.bf16.mxu0 0
    %1883 = vmatpush1.bf16.msra.mxu0 0
    %1884 = vmatprep.subr.bf16.mxu0 0
    %1885 = vmatpush1.bf16.msra.mxu0 0
    %1886 = vmatprep.subr.bf16.mxu0 0
    %1887 = vmatpush1.bf16.msra.mxu0 0
    %1888 = vmatprep.mubr.bf16.mxu0 0
    %1889 = vmatmul.mubr.bf16.gmra.mrb[0].mxu0 %v1854
    %v1890 = vpop.f32.mrb[0].mxu0
    %v1891 = vadd.f32 %v1806, %v1890
    %v1892 = vpop.f32.mrb[0].mxu0
    %v1893 = vadd.f32 %v1810, %v1892
    %v1894 = vpop.f32.mrb[0].mxu0
    %v1895 = vadd.f32 %v1806, %v1894
    %v1896 = vpop.f32.mrb[0].mxu0
    %v1897 = vadd.f32 %v1810, %v1896
    %1898 = vdwg.mxu0
    %v1899 = vmul.f32 %v1891, 1.702
    %v1900 = vmul.f32 %v1893, 1.702
    %v1901 = vmul.f32 %v1895, 1.702
    %v1902 = vmul.f32 %v1897, 1.702
    %v1903 = vxor.u32 %v1899, 2147483648
    %v1904 = vxor.u32 %v1900, 2147483648
    %v1905 = vxor.u32 %v1901, 2147483648
    %v1906 = vxor.u32 %v1902, 2147483648
    %v1907 = vmul.f32 %v1903, 1.442695
    %v1908 = vpow.pop %v1907
    %v1909 = vmul.f32 %v1904, 1.442695
    %v1910 = vpow.pop %v1909
    %v1911 = vmul.f32 %v1905, 1.442695
    %v1912 = vpow.pop %v1911
    %v1913 = vmul.f32 %v1906, 1.442695
    %v1914 = vpow.pop %v1913
    %v1915 = vadd.f32 %v1908, 1.0
    %v1916 = vadd.f32 %v1910, 1.0
    %v1917 = vadd.f32 %v1912, 1.0
    %v1918 = vadd.f32 %v1914, 1.0
    %v1919 = vrcp.pop %v1915
    %v1920 = vmul.f32 1.0, %v1919
    %v1921 = vrcp.pop %v1916
    %v1922 = vmul.f32 1.0, %v1921
    %v1923 = vrcp.pop %v1917
    %v1924 = vmul.f32 1.0, %v1923
    %v1925 = vrcp.pop %v1918
    %v1926 = vmul.f32 1.0, %v1925
    %v1927 = vmul.f32 %v1891, %v1920
    %v1928 = vmul.f32 %v1893, %v1922
    %v1929 = vmul.f32 %v1895, %v1924
    %v1930 = vmul.f32 %v1897, %v1926
    %s1931 = scalar_lea.vmem %s16, 128
    %v1932 = vld [vmem:[%s1931] sm:$0xf]
    %v1933 = vld [vmem:[%s1931 + $0x4] sm:$0xf]
    %v1934 = vld [vmem:[%s1931 + $0x8] sm:$0xf]
    %v1935 = vld [vmem:[%s1931 + $0xc] sm:$0xf]
    %v1936 = vld [vmem:[%s1931 + $0x10] sm:$0xf]
    %v1937 = vld [vmem:[%s1931 + $0x14] sm:$0xf]
    %v1938 = vld [vmem:[%s1931 + $0x18] sm:$0xf]
    %v1939 = vld [vmem:[%s1931 + $0x1c] sm:$0xf]
    %v1940 = vld [vmem:[%s1931 + $0x20] sm:$0xf]
    %v1941 = vld [vmem:[%s1931 + $0x24] sm:$0xf]
    %v1942 = vld [vmem:[%s1931 + $0x28] sm:$0xf]
    %v1943 = vld [vmem:[%s1931 + $0x2c] sm:$0xf]
    %v1944 = vld [vmem:[%s1931 + $0x30] sm:$0xf]
    %v1945 = vld [vmem:[%s1931 + $0x34] sm:$0xf]
    %v1946 = vld [vmem:[%s1931 + $0x38] sm:$0xf]
    %v1947 = vld [vmem:[%s1931 + $0x3c] sm:$0xf]
    %v1948 = vld [vmem:[%s1931 + $0x40] sm:$0xf]
    %v1949 = vld [vmem:[%s1931 + $0x44] sm:$0xf]
    %v1950 = vld [vmem:[%s1931 + $0x48] sm:$0xf]
    %v1951 = vld [vmem:[%s1931 + $0x4c] sm:$0xf]
    %v1952 = vld [vmem:[%s1931 + $0x50] sm:$0xf]
    %v1953 = vld [vmem:[%s1931 + $0x54] sm:$0xf]
    %v1954 = vld [vmem:[%s1931 + $0x58] sm:$0xf]
    %v1955 = vld [vmem:[%s1931 + $0x5c] sm:$0xf]
    %v1956 = vld [vmem:[%s1931 + $0x60] sm:$0xf]
    %v1957 = vld [vmem:[%s1931 + $0x64] sm:$0xf]
    %v1958 = vld [vmem:[%s1931 + $0x68] sm:$0xf]
    %v1959 = vld [vmem:[%s1931 + $0x6c] sm:$0xf]
    %v1960 = vld [vmem:[%s1931 + $0x70] sm:$0xf]
    %v1961 = vld [vmem:[%s1931 + $0x74] sm:$0xf]
    %v1962 = vld [vmem:[%s1931 + $0x78] sm:$0xf]
    %v1963 = vld [vmem:[%s1931 + $0x7c] sm:$0xf]
    %v1964 = vpack.c.bf16 %v1929, %v1927
    %v1965 = vpack.c.bf16 %v1930, %v1928
    %v1998 = vunpack.c.l.b16 %v1932
    %v1999 = vunpack.c.l.b16 %v1933
    %v2000 = vunpack.c.l.b16 %v1934
    %v2001 = vunpack.c.l.b16 %v1935
    %v2002 = vunpack.c.l.b16 %v1936
    %v2003 = vunpack.c.l.b16 %v1937
    %v2004 = vunpack.c.l.b16 %v1938
    %v2005 = vunpack.c.l.b16 %v1939
    %v2006 = vunpack.c.l.b16 %v1940
    %v2007 = vunpack.c.l.b16 %v1941
    %v2008 = vunpack.c.l.b16 %v1942
    %v2009 = vunpack.c.l.b16 %v1943
    %v2010 = vunpack.c.l.b16 %v1944
    %v2011 = vunpack.c.l.b16 %v1945
    %v2012 = vunpack.c.l.b16 %v1946
    %v2013 = vunpack.c.l.b16 %v1947
    %v2014 = vunpack.c.l.b16 %v1948
    %v2015 = vunpack.c.l.b16 %v1949
    %v2016 = vunpack.c.l.b16 %v1950
    %v2017 = vunpack.c.l.b16 %v1951
    %v2018 = vunpack.c.l.b16 %v1952
    %v2019 = vunpack.c.l.b16 %v1953
    %v2020 = vunpack.c.l.b16 %v1954
    %v2021 = vunpack.c.l.b16 %v1955
    %v2022 = vunpack.c.l.b16 %v1956
    %v2023 = vunpack.c.l.b16 %v1957
    %v2024 = vunpack.c.l.b16 %v1958
    %v2025 = vunpack.c.l.b16 %v1959
    %v2026 = vunpack.c.l.b16 %v1960
    %v2027 = vunpack.c.l.b16 %v1961
    %v2028 = vunpack.c.l.b16 %v1962
    %v2029 = vunpack.c.l.b16 %v1963
    %v2030 = vpack.c.b16 %v1999, %v1998
    %v2031 = vpack.c.b16 %v2001, %v2000
    %v2032 = vpack.c.b16 %v2003, %v2002
    %v2033 = vpack.c.b16 %v2005, %v2004
    %v2034 = vpack.c.b16 %v2007, %v2006
    %v2035 = vpack.c.b16 %v2009, %v2008
    %v2036 = vpack.c.b16 %v2011, %v2010
    %v2037 = vpack.c.b16 %v2013, %v2012
    %v2038 = vpack.c.b16 %v2015, %v2014
    %v2039 = vpack.c.b16 %v2017, %v2016
    %v2040 = vpack.c.b16 %v2019, %v2018
    %v2041 = vpack.c.b16 %v2021, %v2020
    %v2042 = vpack.c.b16 %v2023, %v2022
    %v2043 = vpack.c.b16 %v2025, %v2024
    %v2044 = vpack.c.b16 %v2027, %v2026
    %v2045 = vpack.c.b16 %v2029, %v2028
    %2062 = vmatprep.subr.bf16.mxu0 0
    %2063 = vmatpush1.bf16.msra.mxu0 %v2030
    %2064 = vmatprep.subr.bf16.mxu0 0
    %2065 = vmatpush1.bf16.msra.mxu0 %v2031
    %2066 = vmatprep.subr.bf16.mxu0 0
    %2067 = vmatpush1.bf16.msra.mxu0 %v2032
    %2068 = vmatprep.subr.bf16.mxu0 0
    %2069 = vmatpush1.bf16.msra.mxu0 %v2033
    %2070 = vmatprep.subr.bf16.mxu0 0
    %2071 = vmatpush1.bf16.msra.mxu0 %v2034
    %2072 = vmatprep.subr.bf16.mxu0 0
    %2073 = vmatpush1.bf16.msra.mxu0 %v2035
    %2074 = vmatprep.subr.bf16.mxu0 0
    %2075 = vmatpush1.bf16.msra.mxu0 %v2036
    %2076 = vmatprep.subr.bf16.mxu0 0
    %2077 = vmatpush1.bf16.msra.mxu0 %v2037
    %2078 = vmatprep.subr.bf16.mxu0 0
    %2079 = vmatpush1.bf16.msra.mxu0 %v2038
    %2080 = vmatprep.subr.bf16.mxu0 0
    %2081 = vmatpush1.bf16.msra.mxu0 %v2039
    %2082 = vmatprep.subr.bf16.mxu0 0
    %2083 = vmatpush1.bf16.msra.mxu0 %v2040
    %2084 = vmatprep.subr.bf16.mxu0 0
    %2085 = vmatpush1.bf16.msra.mxu0 %v2041
    %2086 = vmatprep.subr.bf16.mxu0 0
    %2087 = vmatpush1.bf16.msra.mxu0 %v2042
    %2088 = vmatprep.subr.bf16.mxu0 0
    %2089 = vmatpush1.bf16.msra.mxu0 %v2043
    %2090 = vmatprep.subr.bf16.mxu0 0
    %2091 = vmatpush1.bf16.msra.mxu0 %v2044
    %2092 = vmatprep.subr.bf16.mxu0 0
    %2093 = vmatpush1.bf16.msra.mxu0 %v2045
    %2094 = vmatprep.mubr.bf16.mxu0 %v1965
    %2095 = vmatmul.mubr.bf16.gmra.mrb[0].mxu0 %v1964
    %v2096 = vpop.f32.mrb[0].mxu0
    %v2097 = vadd.f32 0.0, %v2096
    %v2098 = vpop.f32.mrb[0].mxu0
    %v2099 = vpop.f32.mrb[0].mxu0
    %v2100 = vadd.f32 0.0, %v2099
    %v2101 = vpop.f32.mrb[0].mxu0
    %2102 = vdwg.mxu0
    %v2103 = vadd.f32 %v1742, %v2097
    %v2104 = vadd.f32 %v1743, %v2100
    %s2105 = scalar_lea.vmem %s17, 1
    %v2106 = vld [vmem:[%s2105] sm:$0x1]
    %v2108 = vlaneseq
    %v2109 = vshrl.u32 %v2108, 7
    %v2110 = vsub.s32 0, %v2109
    %v2111 = vrot.slane %v2106, %v2110
    %v2113 = vadd.f32 %v2103, %v2111
    %v2114 = vadd.f32 %v2104, %v2111
    %v2116 = vsel %vm520, %v265, 0
    %vm2118 = vcmask 1041408
    %v2120 = vsel %vm2118, %v2114, 0
    %2122 = vmatprep.subr.mxu0 0.0
    %2123 = vmatpush1.msra.mxu0 %v2113
    %2124 = vmatprep.subr.mxu0 0.0
    %2125 = vmatpush1.msra.mxu0 %v2120
    %2126 = vmatprep.subr.mxu0 0.0
    %2127 = vmatpush1.msra.mxu0 0.0
    %2128 = vmatprep.subr.mxu0 0.0
    %2129 = vmatpush1.msra.mxu0 0.0
    %2130 = vmatprep.subr.mxu0 0.0
    %2131 = vmatpush1.msra.mxu0 0.0
    %2132 = vmatprep.subr.mxu0 0.0
    %2133 = vmatpush1.msra.mxu0 0.0
    %2134 = vmatprep.subr.mxu0 0.0
    %2135 = vmatpush1.msra.mxu0 0.0
    %2136 = vmatprep.subr.mxu0 0.0
    %2137 = vmatpush1.msra.mxu0 0.0
    %2138 = vmatprep.subr.mxu0 0.0
    %2139 = vmatpush1.msra.mxu0 0.0
    %2140 = vmatprep.subr.mxu0 0.0
    %2141 = vmatpush1.msra.mxu0 0.0
    %2142 = vmatprep.subr.mxu0 0.0
    %2143 = vmatpush1.msra.mxu0 0.0
    %2144 = vmatprep.subr.mxu0 0.0
    %2145 = vmatpush1.msra.mxu0 0.0
    %2146 = vmatprep.subr.mxu0 0.0
    %2147 = vmatpush1.msra.mxu0 0.0
    %2148 = vmatprep.subr.mxu0 0.0
    %2149 = vmatpush1.msra.mxu0 0.0
    %2150 = vmatprep.subr.mxu0 0.0
    %2151 = vmatpush1.msra.mxu0 0.0
    %2152 = vmatprep.subr.mxu0 0.0
    %2153 = vmatpush1.msra.mxu0 0.0
    %2154 = vmatprep.subr.mxu0 0.0
    %2155 = vmatpush1.msra.mxu0 0.0
    %2156 = vmatprep.subr.mxu0 0.0
    %2157 = vmatpush1.msra.mxu0 0.0
    %2158 = vmatprep.subr.mxu0 0.0
    %2159 = vmatpush1.msra.mxu0 0.0
    %2160 = vmatprep.subr.mxu0 0.0
    %2161 = vmatpush1.msra.mxu0 0.0
    %2162 = vmatprep.subr.mxu0 0.0
    %2163 = vmatpush1.msra.mxu0 0.0
    %2164 = vmatprep.subr.mxu0 0.0
    %2165 = vmatpush1.msra.mxu0 0.0
    %2166 = vmatprep.subr.mxu0 0.0
    %2167 = vmatpush1.msra.mxu0 0.0
    %2168 = vmatprep.subr.mxu0 0.0
    %2169 = vmatpush1.msra.mxu0 0.0
    %2170 = vmatprep.subr.mxu0 0.0
    %2171 = vmatpush1.msra.mxu0 0.0
    %2172 = vmatprep.subr.mxu0 0.0
    %2173 = vmatpush1.msra.mxu0 0.0
    %2174 = vmatprep.subr.mxu0 0.0
    %2175 = vmatpush1.msra.mxu0 0.0
    %2176 = vmatprep.subr.mxu0 0.0
    %2177 = vmatpush1.msra.mxu0 0.0
    %2178 = vmatprep.subr.mxu0 0.0
    %2179 = vmatpush1.msra.mxu0 0.0
    %2180 = vmatprep.subr.mxu0 0.0
    %2181 = vmatpush1.msra.mxu0 0.0
    %2182 = vmatprep.subr.mxu0 0.0
    %2183 = vmatpush1.msra.mxu0 0.0
    %2184 = vmatprep.subr.mxu0 0.0
    %2185 = vmatpush1.msra.mxu0 0.0
    %2186 = vmatprep.mubr.f32.mxu0 0.0
    %2187 = vmatmul.mubr.f32.gmra.mrb[0].mxu0 %v2116
    %v2188 = vpop.f32.mrb[0].mxu0
    %v2189 = vadd.f32 0.0, %v2188
    %v2190 = vpop.f32.mrb[0].mxu0
    %2191 = vdwg.mxu0
    %v2192 = vsel %vm224, %v2189, 0.0
    %2193 = vadd.xlane.f32.xlu0 %v2192
    %v2194 = vpop.xlane.xlu0 %2193
    %v2195 = vmul.f32 %v2194, %v228
    %v2196 = vsub.f32 %v2189, %v2195
    %v2197 = vmul.f32 %v2196, %v2196
    %v2198 = vsel %vm224, %v2197, 0.0
    %2199 = vadd.xlane.f32.xlu0 %v2198
    %v2200 = vpop.xlane.xlu0 %2199
    %v2201 = vmul.f32 %v2200, %v228
    %v2202 = vadd.f32 %v2201, 1e-05
    %v2203 = vrsqrt.pop %v2202
    %v2204 = vmul.f32 %v2196, %v2203
    %v2206 = vlaneseq
    %v2207 = vshrl.u32 %v2206, 7
    %v2208 = vsub.s32 0, %v2207
    %v2209 = vrot.slane %v266, %v2208
    %v2211 = vmul.f32 %v2204, %v2209
    %v2213 = vlaneseq
    %v2214 = vshrl.u32 %v2213, 7
    %v2215 = vsub.s32 0, %v2214
    %v2216 = vrot.slane %v267, %v2215
    %v2218 = vadd.f32 %v2211, %v2216
    %v2219 = vpack.c.bf16 %v2218, %v2218
    %v2228 = vunpack.c.l.b16 %v268
    %v2229 = vunpack.c.l.b16 %v269
    %v2230 = vunpack.c.l.b16 %v270
    %v2231 = vunpack.c.l.b16 %v271
    %v2232 = vunpack.c.l.b16 %v272
    %v2233 = vunpack.c.l.b16 %v273
    %v2234 = vunpack.c.l.b16 %v274
    %v2235 = vunpack.c.l.b16 %v275
    %v2236 = vpack.c.b16 %v2229, %v2228
    %v2237 = vpack.c.b16 %v2231, %v2230
    %v2238 = vpack.c.b16 %v2233, %v2232
    %v2239 = vpack.c.b16 %v2235, %v2234
    %v2245 = vsel %vm174, %v2219, 0
    %2247 = vmatprep.subr.bf16.mxu0 0
    %2248 = vmatpush1.bf16.msra.mxu0 %v2236
    %2249 = vmatprep.subr.bf16.mxu0 0
    %2250 = vmatpush1.bf16.msra.mxu0 %v2237
    %2251 = vmatprep.subr.bf16.mxu0 0
    %2252 = vmatpush1.bf16.msra.mxu0 %v2238
    %2253 = vmatprep.subr.bf16.mxu0 0
    %2254 = vmatpush1.bf16.msra.mxu0 %v2239
    %2255 = vmatprep.subr.bf16.mxu0 0
    %2256 = vmatpush1.bf16.msra.mxu0 0
    %2257 = vmatprep.subr.bf16.mxu0 0
    %2258 = vmatpush1.bf16.msra.mxu0 0
    %2259 = vmatprep.subr.bf16.mxu0 0
    %2260 = vmatpush1.bf16.msra.mxu0 0
    %2261 = vmatprep.subr.bf16.mxu0 0
    %2262 = vmatpush1.bf16.msra.mxu0 0
    %2263 = vmatprep.subr.bf16.mxu0 0
    %2264 = vmatpush1.bf16.msra.mxu0 0
    %2265 = vmatprep.subr.bf16.mxu0 0
    %2266 = vmatpush1.bf16.msra.mxu0 0
    %2267 = vmatprep.subr.bf16.mxu0 0
    %2268 = vmatpush1.bf16.msra.mxu0 0
    %2269 = vmatprep.subr.bf16.mxu0 0
    %2270 = vmatpush1.bf16.msra.mxu0 0
    %2271 = vmatprep.subr.bf16.mxu0 0
    %2272 = vmatpush1.bf16.msra.mxu0 0
    %2273 = vmatprep.subr.bf16.mxu0 0
    %2274 = vmatpush1.bf16.msra.mxu0 0
    %2275 = vmatprep.subr.bf16.mxu0 0
    %2276 = vmatpush1.bf16.msra.mxu0 0
    %2277 = vmatprep.subr.bf16.mxu0 0
    %2278 = vmatpush1.bf16.msra.mxu0 0
    %2279 = vmatprep.mubr.bf16.mxu0 0
    %2280 = vmatmul.mubr.bf16.gmra.mrb[0].mxu0 %v2245
    %v2281 = vpop.f32.mrb[0].mxu0
    %v2282 = vadd.f32 0.0, %v2281
    %v2283 = vpop.f32.mrb[0].mxu0
    %v2284 = vpop.f32.mrb[0].mxu0
    %v2285 = vpop.f32.mrb[0].mxu0
    %2286 = vdwg.mxu0
    %v2287 = vmul.f32 %v2282, %v2282
    %vm2288 = vcmask 254976
    %v2289 = vsel %vm2288, %v2287, 0.0
    %2290 = vadd.xlane.f32.xlu0 %v2289
    %v2291 = vpop.xlane.xlu0 %2290
    %v2292 = vadd.f32 %v2291, 1e-12
    %v2293 = vrsqrt.pop %v2292
    %v2294 = vmul.f32 %v2282, %v2293
    %2295 = vst.msk [vmem:[#allocation2] sm:$0x3] %vm2288, %v2294
    // Predicated region
    $region86: #{clip_extractor_forward.2} parent=1 // pred_check
      _
    $region87: #{clip_extractor_forward.2} parent=1 // pred_check_branch
      %2297 = sbr.rel (0) target = $region89
    $region88: #{clip_extractor_forward.2} parent=1 // pred_region
      %s2299 = ssub.s32 32, 32
      %2300 = vsyncadd [#allocation3], %s2299
      %s2302 = sshll.u32 [#allocation2], 4
      %s2303 = int_to_ptr.vmem [resolvable:$true] %s2302
      %2305 = dma.vmem_to_hbm [thread:$0]  %s2303, 32, %s21, [#allocation3]
    $region89: #{clip_extractor_forward.2} parent=1 // pred_fallthru
      _
    // Predicated region
    $region90: #{clip_extractor_forward.2} parent=1 // pred_check
      _
    $region91: #{clip_extractor_forward.2} parent=1 // pred_check_branch
      %2307 = sbr.rel (0) target = $region93
    $region92: #{clip_extractor_forward.2} parent=1 // pred_region
      %2308 = dma.done [#allocation3], 32
    $region93: #{clip_extractor_forward.2} parent=1 // pred_fallthru
      _
    %2309 = vsyncpa [#allocation3], 1

// kernel: clip_extractor_forward.3
$region0: #{clip_extractor_forward.3}
  #allocation0 [shape = 'u32[]', space=smem, size = 0x4, offset = 0x4, fixed_abs, tag = 'smem constant byte address 0x4 - core index']
  #allocation1 [shape = 'u32[144,128]{1,0:T(1,128)}', space=vmem, size = 0x12000, scoped, tag = 'internal scratch']
  %s0 = inlined_call_operand.vmem [shape: f32[16,64], index: 0, kind: input, shape index: {}]
  %s1 = inlined_call_operand.vmem [shape: f32[2,16], index: 1, kind: input, shape index: {}]
  %s2 = inlined_call_operand.vmem [shape: f32[2,1,64], index: 2, kind: input, shape index: {}]
  %s3 = inlined_call_operand.vmem [shape: f32[2,1,64], index: 3, kind: input, shape index: {}]
  %s4 = inlined_call_operand.vmem [shape: bf16[2,64,192], index: 4, kind: input, shape index: {}]
  %s5 = inlined_call_operand.vmem [shape: f32[2,1,192], index: 5, kind: input, shape index: {}]
  %s6 = inlined_call_operand.vmem [shape: bf16[2,64,64], index: 6, kind: input, shape index: {}]
  %s7 = inlined_call_operand.vmem [shape: f32[2,1,64], index: 7, kind: input, shape index: {}]
  %s8 = inlined_call_operand.vmem [shape: f32[2,1,64], index: 8, kind: input, shape index: {}]
  %s9 = inlined_call_operand.vmem [shape: f32[2,1,64], index: 9, kind: input, shape index: {}]
  %s10 = inlined_call_operand.vmem [shape: bf16[2,64,256], index: 10, kind: input, shape index: {}]
  %s11 = inlined_call_operand.vmem [shape: f32[2,1,256], index: 11, kind: input, shape index: {}]
  %s12 = inlined_call_operand.vmem [shape: bf16[2,256,64], index: 12, kind: input, shape index: {}]
  %s13 = inlined_call_operand.vmem [shape: f32[2,1,64], index: 13, kind: input, shape index: {}]
  %s14 = inlined_call_operand.vmem [shape: f32[1,64], index: 14, kind: input, shape index: {}]
  %s15 = inlined_call_operand.vmem [shape: f32[1,64], index: 15, kind: input, shape index: {}]
  %s16 = inlined_call_operand.vmem [shape: bf16[64,32], index: 16, kind: input, shape index: {}]
  %s17 = inlined_call_operand.hbm [shape: f32[2,32], index: 17, kind: output, shape index: {}]
  %s18 = sld [smem:[#allocation0]]
  $region78: #{clip_extractor_forward.3} parent=0
    _
  %s20 = ssub.s32 1, %s18
  %s21 = scalar_select 0, %s20, %s18
  $region1: #{clip_extractor_forward.3} parent=0
    #allocation2 [shape = 'u8[1024]{0}', space=vmem, size = 0x400, scoped, tag = 'output window, operand 0, single buffered']
    #allocation3 [shape = 's32[1]{0}', space=sflag, size = 0x4, scoped, tag = 'scoped memory for clip_extractor_forward.3']
    %22 = vsyncpa [#allocation3], 0
    // Predicated region
    $region2: #{clip_extractor_forward.3} parent=1 // pred_check
      _
    $region3: #{clip_extractor_forward.3} parent=1 // pred_check_branch
      %24 = sbr.rel (0) target = $region5
    $region4: #{clip_extractor_forward.3} parent=1 // pred_region
      _
    $region5: #{clip_extractor_forward.3} parent=1 // pred_fallthru
      _
    // Predicated region
    $region6: #{clip_extractor_forward.3} parent=1 // pred_check
      _
    $region7: #{clip_extractor_forward.3} parent=1 // pred_check_branch
      %26 = sbr.rel (0) target = $region9
    $region8: #{clip_extractor_forward.3} parent=1 // pred_region
      _
    $region9: #{clip_extractor_forward.3} parent=1 // pred_fallthru
      _
    // Predicated region
    $region10: #{clip_extractor_forward.3} parent=1 // pred_check
      _
    $region11: #{clip_extractor_forward.3} parent=1 // pred_check_branch
      %28 = sbr.rel (0) target = $region13
    $region12: #{clip_extractor_forward.3} parent=1 // pred_region
      _
    $region13: #{clip_extractor_forward.3} parent=1 // pred_fallthru
      _
    // Predicated region
    $region14: #{clip_extractor_forward.3} parent=1 // pred_check
      _
    $region15: #{clip_extractor_forward.3} parent=1 // pred_check_branch
      %30 = sbr.rel (0) target = $region17
    $region16: #{clip_extractor_forward.3} parent=1 // pred_region
      _
    $region17: #{clip_extractor_forward.3} parent=1 // pred_fallthru
      _
    // Predicated region
    $region18: #{clip_extractor_forward.3} parent=1 // pred_check
      _
    $region19: #{clip_extractor_forward.3} parent=1 // pred_check_branch
      %32 = sbr.rel (0) target = $region21
    $region20: #{clip_extractor_forward.3} parent=1 // pred_region
      _
    $region21: #{clip_extractor_forward.3} parent=1 // pred_fallthru
      _
    // Predicated region
    $region22: #{clip_extractor_forward.3} parent=1 // pred_check
      _
    $region23: #{clip_extractor_forward.3} parent=1 // pred_check_branch
      %34 = sbr.rel (0) target = $region25
    $region24: #{clip_extractor_forward.3} parent=1 // pred_region
      _
    $region25: #{clip_extractor_forward.3} parent=1 // pred_fallthru
      _
    // Predicated region
    $region26: #{clip_extractor_forward.3} parent=1 // pred_check
      _
    $region27: #{clip_extractor_forward.3} parent=1 // pred_check_branch
      %36 = sbr.rel (0) target = $region29
    $region28: #{clip_extractor_forward.3} parent=1 // pred_region
      _
    $region29: #{clip_extractor_forward.3} parent=1 // pred_fallthru
      _
    // Predicated region
    $region30: #{clip_extractor_forward.3} parent=1 // pred_check
      _
    $region31: #{clip_extractor_forward.3} parent=1 // pred_check_branch
      %38 = sbr.rel (0) target = $region33
    $region32: #{clip_extractor_forward.3} parent=1 // pred_region
      _
    $region33: #{clip_extractor_forward.3} parent=1 // pred_fallthru
      _
    // Predicated region
    $region34: #{clip_extractor_forward.3} parent=1 // pred_check
      _
    $region35: #{clip_extractor_forward.3} parent=1 // pred_check_branch
      %40 = sbr.rel (0) target = $region37
    $region36: #{clip_extractor_forward.3} parent=1 // pred_region
      _
    $region37: #{clip_extractor_forward.3} parent=1 // pred_fallthru
      _
    // Predicated region
    $region38: #{clip_extractor_forward.3} parent=1 // pred_check
      _
    $region39: #{clip_extractor_forward.3} parent=1 // pred_check_branch
      %42 = sbr.rel (0) target = $region41
    $region40: #{clip_extractor_forward.3} parent=1 // pred_region
      _
    $region41: #{clip_extractor_forward.3} parent=1 // pred_fallthru
      _
    // Predicated region
    $region42: #{clip_extractor_forward.3} parent=1 // pred_check
      _
    $region43: #{clip_extractor_forward.3} parent=1 // pred_check_branch
      %44 = sbr.rel (0) target = $region45
    $region44: #{clip_extractor_forward.3} parent=1 // pred_region
      _
    $region45: #{clip_extractor_forward.3} parent=1 // pred_fallthru
      _
    // Predicated region
    $region46: #{clip_extractor_forward.3} parent=1 // pred_check
      _
    $region47: #{clip_extractor_forward.3} parent=1 // pred_check_branch
      %46 = sbr.rel (0) target = $region49
    $region48: #{clip_extractor_forward.3} parent=1 // pred_region
      _
    $region49: #{clip_extractor_forward.3} parent=1 // pred_fallthru
      _
    // Predicated region
    $region50: #{clip_extractor_forward.3} parent=1 // pred_check
      _
    $region51: #{clip_extractor_forward.3} parent=1 // pred_check_branch
      %48 = sbr.rel (0) target = $region53
    $region52: #{clip_extractor_forward.3} parent=1 // pred_region
      _
    $region53: #{clip_extractor_forward.3} parent=1 // pred_fallthru
      _
    // Predicated region
    $region54: #{clip_extractor_forward.3} parent=1 // pred_check
      _
    $region55: #{clip_extractor_forward.3} parent=1 // pred_check_branch
      %50 = sbr.rel (0) target = $region57
    $region56: #{clip_extractor_forward.3} parent=1 // pred_region
      _
    $region57: #{clip_extractor_forward.3} parent=1 // pred_fallthru
      _
    // Predicated region
    $region58: #{clip_extractor_forward.3} parent=1 // pred_check
      _
    $region59: #{clip_extractor_forward.3} parent=1 // pred_check_branch
      %52 = sbr.rel (0) target = $region61
    $region60: #{clip_extractor_forward.3} parent=1 // pred_region
      _
    $region61: #{clip_extractor_forward.3} parent=1 // pred_fallthru
      _
    // Predicated region
    $region62: #{clip_extractor_forward.3} parent=1 // pred_check
      _
    $region63: #{clip_extractor_forward.3} parent=1 // pred_check_branch
      %54 = sbr.rel (0) target = $region65
    $region64: #{clip_extractor_forward.3} parent=1 // pred_region
      _
    $region65: #{clip_extractor_forward.3} parent=1 // pred_fallthru
      _
    // Predicated region
    $region66: #{clip_extractor_forward.3} parent=1 // pred_check
      _
    $region67: #{clip_extractor_forward.3} parent=1 // pred_check_branch
      %56 = sbr.rel (0) target = $region69
    $region68: #{clip_extractor_forward.3} parent=1 // pred_region
      _
    $region69: #{clip_extractor_forward.3} parent=1 // pred_fallthru
      _
    %v58 = vld [vmem:[%s0] sm:$0xff]
    %v59 = vld [vmem:[%s0 + $0x8] sm:$0xff]
    %v60 = vld [vmem:[%s1] sm:$0x3]
    %v61 = vld [vmem:[%s14] sm:$0x1]
    %v62 = vld [vmem:[%s15] sm:$0x1]
    %v63 = vld [vmem:[%s16] sm:$0xf]
    %v64 = vld [vmem:[%s16 + $0x4] sm:$0xf]
    %v65 = vld [vmem:[%s16 + $0x8] sm:$0xf]
    %v66 = vld [vmem:[%s16 + $0xc] sm:$0xf]
    %v67 = vld [vmem:[%s16 + $0x10] sm:$0xf]
    %v68 = vld [vmem:[%s16 + $0x14] sm:$0xf]
    %v69 = vld [vmem:[%s16 + $0x18] sm:$0xf]
    %v70 = vld [vmem:[%s16 + $0x1c] sm:$0xf]
    %v71 = vlaneseq
    %v72 = vshrl.u32 %v71, 7
    %v73 = vadd.s32 %v72, 8
    %v74 = vlaneseq
    %v75 = vand.u32 %v74, 127
    %vm76 = vcmp.ge.s32.totalorder %v72, 0
    %vm77 = vcmp.ge.s32.totalorder %v73, 0
    %vm78 = vcmp.lt.s32.totalorder %v72, 8
    %vm79 = vcmp.lt.s32.totalorder %v73, 8
    %vm80 = vmand %vm76, %vm78
    %vm81 = vmand %vm77, %vm79
    %vm82 = vcmp.ge.s32.totalorder %v75, 0
    %vm83 = vmand %vm80, %vm82
    %vm84 = vmand %vm81, %vm82
    %vm85 = vcmp.lt.s32.totalorder %v75, 8
    %vm86 = vmand %vm83, %vm85
    %vm87 = vmand %vm84, %vm85
    %vm88 = vcmp.ge.s32.totalorder %v72, 8
    %vm89 = vcmp.ge.s32.totalorder %v73, 8
    %vm90 = vcmp.lt.s32.totalorder %v72, 16
    %vm91 = vcmp.lt.s32.totalorder %v73, 16
    %vm92 = vmand %vm88, %vm90
    %vm93 = vmand %vm89, %vm91
    %vm94 = vcmp.ge.s32.totalorder %v75, 8
    %vm95 = vmand %vm92, %vm94
    %vm96 = vmand %vm93, %vm94
    %vm97 = vcmp.lt.s32.totalorder %v75, 16
    %vm98 = vmand %vm95, %vm97
    %vm99 = vmand %vm96, %vm97
    %vm100 = vmor %vm86, %vm98
    %vm101 = vmor %vm87, %vm99
    %vm102 = vcmp.le.s32.totalorder %v75, %v72
    %vm103 = vcmp.le.s32.totalorder %v75, %v73
    %vm104 = vmand %vm100, %vm102
    %vm105 = vmand %vm101, %vm103
    %v106 = vsel %vm104, 0.0, -1e+09
    %v107 = vsel %vm105, 0.0, -1e+09
    %v108 = vld [vmem:[%s2] sm:$0x1]
    %v109 = vld [vmem:[%s3] sm:$0x1]
    %vm110 = vcmask 523264
    %v111 = vsel %vm110, %v58, 0.0
    %112 = vadd.xlane.f32.xlu0 %v111
    %v113 = vpop.xlane.xlu0 %112
    %v114 = vsel %vm110, %v59, 0.0
    %115 = vadd.xlane.f32.xlu0 %v114
    %v116 = vpop.xlane.xlu0 %115
    %v117 = vrcp.pop 64.0
    %v118 = vmul.f32 %v113, %v117
    %v119 = vmul.f32 %v116, %v117
    %v120 = vsub.f32 %v58, %v118
    %v121 = vsub.f32 %v59, %v119
    %v122 = vmul.f32 %v120, %v120
    %v123 = vmul.f32 %v121, %v121
    %v124 = vsel %vm110, %v122, 0.0
    %125 = vadd.xlane.f32.xlu0 %v124
    %v126 = vpop.xlane.xlu0 %125
    %v127 = vsel %vm110, %v123, 0.0
    %128 = vadd.xlane.f32.xlu0 %v127
    %v129 = vpop.xlane.xlu0 %128
    %v130 = vmul.f32 %v126, %v117
    %v131 = vmul.f32 %v129, %v117
    %v132 = vadd.f32 %v130, 1e-05
    %v133 = vadd.f32 %v131, 1e-05
    %v134 = vrsqrt.pop %v132
    %v135 = vrsqrt.pop %v133
    %v136 = vmul.f32 %v120, %v134
    %v137 = vmul.f32 %v121, %v135
    %v139 = vlaneseq
    %v140 = vshrl.u32 %v139, 7
    %v141 = vsub.s32 0, %v140
    %v142 = vrot.slane %v108, %v141
    %v144 = vmul.f32 %v136, %v142
    %v145 = vmul.f32 %v137, %v142
    %v147 = vlaneseq
    %v148 = vshrl.u32 %v147, 7
    %v149 = vsub.s32 0, %v148
    %v150 = vrot.slane %v109, %v149
    %v152 = vadd.f32 %v144, %v150
    %v153 = vadd.f32 %v145, %v150
    %v154 = vld [vmem:[%s4] sm:$0xff]
    %v155 = vld [vmem:[%s4 + $0x8] sm:$0xff]
    %v156 = vld [vmem:[%s4 + $0x10] sm:$0xff]
    %v157 = vld [vmem:[%s4 + $0x18] sm:$0xff]
    %v158 = vld [vmem:[%s4 + $0x20] sm:$0xff]
    %v159 = vld [vmem:[%s4 + $0x28] sm:$0xff]
    %v160 = vld [vmem:[%s4 + $0x30] sm:$0xff]
    %v161 = vld [vmem:[%s4 + $0x38] sm:$0xff]
    %v162 = vpack.c.bf16 %v153, %v152
    %v163 = vld [vmem:[%s5] sm:$0x3]
    %v165 = vlaneseq
    %v166 = vshrl.u32 %v165, 7
    %v167 = vsub.s32 0, %v166
    %v168 = vrot.slane %v163, %v167
    %v169 = vlaneseq
    %v170 = vshrl.u32 %v169, 7
    %v171 = vsub.s32 1, %v170
    %v172 = vrot.slane %v163, %v171
    %v183 = vunpack.c.l.b16 %v154
    %v184 = vunpack.c.h.b16 %v154
    %v185 = vunpack.c.l.b16 %v155
    %v186 = vunpack.c.h.b16 %v155
    %v187 = vunpack.c.l.b16 %v156
    %v188 = vunpack.c.h.b16 %v156
    %v189 = vunpack.c.l.b16 %v157
    %v190 = vunpack.c.h.b16 %v157
    %v191 = vunpack.c.l.b16 %v158
    %v192 = vunpack.c.h.b16 %v158
    %v193 = vunpack.c.l.b16 %v159
    %v194 = vunpack.c.h.b16 %v159
    %v195 = vunpack.c.l.b16 %v160
    %v196 = vunpack.c.h.b16 %v160
    %v197 = vunpack.c.l.b16 %v161
    %v198 = vunpack.c.h.b16 %v161
    %v199 = vpack.c.b16 %v185, %v183
    %v200 = vpack.c.b16 %v186, %v184
    %v201 = vpack.c.b16 %v189, %v187
    %v202 = vpack.c.b16 %v190, %v188
    %v203 = vpack.c.b16 %v193, %v191
    %v204 = vpack.c.b16 %v194, %v192
    %v205 = vpack.c.b16 %v197, %v195
    %v206 = vpack.c.b16 %v198, %v196
    %v216 = vsel %vm110, %v162, 0
    %218 = vmatprep.subr.bf16.mxu0 %v200
    %219 = vmatpush1.bf16.msra.mxu0 %v199
    %220 = vmatprep.subr.bf16.mxu0 %v202
    %221 = vmatpush1.bf16.msra.mxu0 %v201
    %222 = vmatprep.subr.bf16.mxu0 %v204
    %223 = vmatpush1.bf16.msra.mxu0 %v203
    %224 = vmatprep.subr.bf16.mxu0 %v206
    %225 = vmatpush1.bf16.msra.mxu0 %v205
    %226 = vmatprep.subr.bf16.mxu0 0
    %227 = vmatpush1.bf16.msra.mxu0 0
    %228 = vmatprep.subr.bf16.mxu0 0
    %229 = vmatpush1.bf16.msra.mxu0 0
    %230 = vmatprep.subr.bf16.mxu0 0
    %231 = vmatpush1.bf16.msra.mxu0 0
    %232 = vmatprep.subr.bf16.mxu0 0
    %233 = vmatpush1.bf16.msra.mxu0 0
    %234 = vmatprep.subr.bf16.mxu0 0
    %235 = vmatpush1.bf16.msra.mxu0 0
    %236 = vmatprep.subr.bf16.mxu0 0
    %237 = vmatpush1.bf16.msra.mxu0 0
    %238 = vmatprep.subr.bf16.mxu0 0
    %239 = vmatpush1.bf16.msra.mxu0 0
    %240 = vmatprep.subr.bf16.mxu0 0
    %241 = vmatpush1.bf16.msra.mxu0 0
    %242 = vmatprep.subr.bf16.mxu0 0
    %243 = vmatpush1.bf16.msra.mxu0 0
    %244 = vmatprep.subr.bf16.mxu0 0
    %245 = vmatpush1.bf16.msra.mxu0 0
    %246 = vmatprep.subr.bf16.mxu0 0
    %247 = vmatpush1.bf16.msra.mxu0 0
    %248 = vmatprep.subr.bf16.mxu0 0
    %249 = vmatpush1.bf16.msra.mxu0 0
    %250 = vmatprep.mubr.bf16.mxu0 0
    %251 = vmatmul.mubr.bf16.gmra.mrb[0].mxu0 %v216
    %v252 = vpop.f32.mrb[0].mxu0
    %v253 = vadd.f32 %v168, %v252
    %v254 = vpop.f32.mrb[0].mxu0
    %v255 = vadd.f32 %v172, %v254
    %v256 = vpop.f32.mrb[0].mxu0
    %v257 = vadd.f32 %v168, %v256
    %v258 = vpop.f32.mrb[0].mxu0
    %v259 = vadd.f32 %v172, %v258
    %260 = vdwg.mxu0
    %v261 = vld [vmem:[%s6] sm:$0xf]
    %v262 = vld [vmem:[%s6 + $0x4] sm:$0xf]
    %v263 = vld [vmem:[%s6 + $0x8] sm:$0xf]
    %v264 = vld [vmem:[%s6 + $0xc] sm:$0xf]
    %v265 = vld [vmem:[%s6 + $0x10] sm:$0xf]
    %v266 = vld [vmem:[%s6 + $0x14] sm:$0xf]
    %v267 = vld [vmem:[%s6 + $0x18] sm:$0xf]
    %v268 = vld [vmem:[%s6 + $0x1c] sm:$0xf]
    %v269 = vpack.c.bf16 %v257, %v253
    %271 = vrot.lane.b32.xlu0 %v269, 64
    %v272 = vpop.permute.xlu0 %271
    %vm273 = vcmask 261120
    %v275 = vsel %vm273, %v269, 0
    %v278 = vsel %vm273, %v272, 0
    %280 = vmatprep.subr.bf16.mxu0 0
    %281 = vmatpush1.bf16.xpose.msra.mxu0 %v278
    %282 = vmatprep.subr.bf16.mxu0 0
    %283 = vmatpush1.bf16.xpose.msra.mxu0 0
    %284 = vmatprep.subr.bf16.mxu0 0
    %285 = vmatpush1.bf16.xpose.msra.mxu0 0
    %286 = vmatprep.subr.bf16.mxu0 0
    %287 = vmatpush1.bf16.xpose.msra.mxu0 0
    %288 = vmatprep.subr.bf16.mxu0 0
    %289 = vmatpush1.bf16.xpose.msra.mxu0 0
    %290 = vmatprep.subr.bf16.mxu0 0
    %291 = vmatpush1.bf16.xpose.msra.mxu0 0
    %292 = vmatprep.subr.bf16.mxu0 0
    %293 = vmatpush1.bf16.xpose.msra.mxu0 0
    %294 = vmatprep.subr.bf16.mxu0 0
    %295 = vmatpush1.bf16.xpose.msra.mxu0 0
    %296 = vmatprep.subr.bf16.mxu0 0
    %297 = vmatpush1.bf16.xpose.msra.mxu0 0
    %298 = vmatprep.subr.bf16.mxu0 0
    %299 = vmatpush1.bf16.xpose.msra.mxu0 0
    %300 = vmatprep.subr.bf16.mxu0 0
    %301 = vmatpush1.bf16.xpose.msra.mxu0 0
    %302 = vmatprep.subr.bf16.mxu0 0
    %303 = vmatpush1.bf16.xpose.msra.mxu0 0
    %304 = vmatprep.subr.bf16.mxu0 0
    %305 = vmatpush1.bf16.xpose.msra.mxu0 0
    %306 = vmatprep.subr.bf16.mxu0 0
    %307 = vmatpush1.bf16.xpose.msra.mxu0 0
    %308 = vmatprep.subr.bf16.mxu0 0
    %309 = vmatpush1.bf16.xpose.msra.mxu0 0
    %310 = vmatprep.subr.bf16.mxu0 0
    %311 = vmatpush1.bf16.xpose.msra.mxu0 0
    %312 = vmatprep.mubr.bf16.mxu0 0
    %313 = vmatmul.mubr.bf16.gmra.mrb[0].mxu0 %v275
    %v314 = vpop.f32.mrb[0].mxu0
    %v315 = vadd.f32 %v106, %v314
    %v316 = vpop.f32.mrb[0].mxu0
    %v317 = vpop.f32.mrb[0].mxu0
    %v318 = vadd.f32 %v107, %v317
    %v319 = vpop.f32.mrb[0].mxu0
    %320 = vdwg.mxu0
    %vm321 = vcmask 130048
    %v322 = vsel %vm321, %v315, -inf
    %323 = vmax.xlane.f32.xlu0 %v322
    %v324 = vpop.xlane.xlu0 %323
    %v325 = vsel %vm321, %v318, -inf
    %326 = vmax.xlane.f32.xlu0 %v325
    %v327 = vpop.xlane.xlu0 %326
    %v328 = vsub.f32 %v315, %v324
    %v329 = vsub.f32 %v318, %v327
    %v330 = vmul.f32 %v328, 1.442695
    %v331 = vpow.pop %v330
    %v332 = vmul.f32 %v329, 1.442695
    %v333 = vpow.pop %v332
    %v334 = vsel %vm321, %v331, 0.0
    %335 = vadd.xlane.f32.xlu0 %v334
    %v336 = vpop.xlane.xlu0 %335
    %v337 = vsel %vm321, %v333, 0.0
    %338 = vadd.xlane.f32.xlu0 %v337
    %v339 = vpop.xlane.xlu0 %338
    %v340 = vrcp.pop %v336
    %v341 = vrcp.pop %v339
    %v342 = vmul.f32 %v331, %v340
    %v343 = vmul.f32 %v333, %v341
    %v344 = vpack.c.bf16 %v343, %v342
    %v345 = vpack.c.bf16 %v259, %v255
    %v347 = vsel %vm321, %v344, 0
    %349 = vmatprep.subr.bf16.mxu0 0
    %350 = vmatpush1.bf16.msra.mxu0 %v345
    %351 = vmatprep.subr.bf16.mxu0 0
    %352 = vmatpush1.bf16.msra.mxu0 0
    %353 = vmatprep.subr.bf16.mxu0 0
    %354 = vmatpush1.bf16.msra.mxu0 0
    %355 = vmatprep.subr.bf16.mxu0 0
    %356 = vmatpush1.bf16.msra.mxu0 0
    %357 = vmatprep.subr.bf16.mxu0 0
    %358 = vmatpush1.bf16.msra.mxu0 0
    %359 = vmatprep.subr.bf16.mxu0 0
    %360 = vmatpush1.bf16.msra.mxu0 0
    %361 = vmatprep.subr.bf16.mxu0 0
    %362 = vmatpush1.bf16.msra.mxu0 0
    %363 = vmatprep.subr.bf16.mxu0 0
    %364 = vmatpush1.bf16.msra.mxu0 0
    %365 = vmatprep.subr.bf16.mxu0 0
    %366 = vmatpush1.bf16.msra.mxu0 0
    %367 = vmatprep.subr.bf16.mxu0 0
    %368 = vmatpush1.bf16.msra.mxu0 0
    %369 = vmatprep.subr.bf16.mxu0 0
    %370 = vmatpush1.bf16.msra.mxu0 0
    %371 = vmatprep.subr.bf16.mxu0 0
    %372 = vmatpush1.bf16.msra.mxu0 0
    %373 = vmatprep.subr.bf16.mxu0 0
    %374 = vmatpush1.bf16.msra.mxu0 0
    %375 = vmatprep.subr.bf16.mxu0 0
    %376 = vmatpush1.bf16.msra.mxu0 0
    %377 = vmatprep.subr.bf16.mxu0 0
    %378 = vmatpush1.bf16.msra.mxu0 0
    %379 = vmatprep.subr.bf16.mxu0 0
    %380 = vmatpush1.bf16.msra.mxu0 0
    %381 = vmatprep.mubr.bf16.mxu0 0
    %382 = vmatmul.mubr.bf16.gmra.mrb[0].mxu0 %v347
    %v383 = vpop.f32.mrb[0].mxu0
    %v384 = vadd.f32 0.0, %v383
    %v385 = vpop.f32.mrb[0].mxu0
    %v386 = vpop.f32.mrb[0].mxu0
    %v387 = vadd.f32 0.0, %v386
    %v388 = vpop.f32.mrb[0].mxu0
    %389 = vdwg.mxu0
    %v390 = vpack.c.bf16 %v387, %v384
    %391 = vrot.lane.b32.xlu0 %v269, 96
    %v392 = vpop.permute.xlu0 %391
    %393 = vrot.lane.b32.xlu0 %v269, 32
    %v394 = vpop.permute.xlu0 %393
    %v396 = vsel %vm273, %v392, 0
    %v399 = vsel %vm273, %v394, 0
    %401 = vmatprep.subr.bf16.mxu0 0
    %402 = vmatpush1.bf16.xpose.msra.mxu0 %v399
    %403 = vmatprep.subr.bf16.mxu0 0
    %404 = vmatpush1.bf16.xpose.msra.mxu0 0
    %405 = vmatprep.subr.bf16.mxu0 0
    %406 = vmatpush1.bf16.xpose.msra.mxu0 0
    %407 = vmatprep.subr.bf16.mxu0 0
    %408 = vmatpush1.bf16.xpose.msra.mxu0 0
    %409 = vmatprep.subr.bf16.mxu0 0
    %410 = vmatpush1.bf16.xpose.msra.mxu0 0
    %411 = vmatprep.subr.bf16.mxu0 0
    %412 = vmatpush1.bf16.xpose.msra.mxu0 0
    %413 = vmatprep.subr.bf16.mxu0 0
    %414 = vmatpush1.bf16.xpose.msra.mxu0 0
    %415 = vmatprep.subr.bf16.mxu0 0
    %416 = vmatpush1.bf16.xpose.msra.mxu0 0
    %417 = vmatprep.subr.bf16.mxu0 0
    %418 = vmatpush1.bf16.xpose.msra.mxu0 0
    %419 = vmatprep.subr.bf16.mxu0 0
    %420 = vmatpush1.bf16.xpose.msra.mxu0 0
    %421 = vmatprep.subr.bf16.mxu0 0
    %422 = vmatpush1.bf16.xpose.msra.mxu0 0
    %423 = vmatprep.subr.bf16.mxu0 0
    %424 = vmatpush1.bf16.xpose.msra.mxu0 0
    %425 = vmatprep.subr.bf16.mxu0 0
    %426 = vmatpush1.bf16.xpose.msra.mxu0 0
    %427 = vmatprep.subr.bf16.mxu0 0
    %428 = vmatpush1.bf16.xpose.msra.mxu0 0
    %429 = vmatprep.subr.bf16.mxu0 0
    %430 = vmatpush1.bf16.xpose.msra.mxu0 0
    %431 = vmatprep.subr.bf16.mxu0 0
    %432 = vmatpush1.bf16.xpose.msra.mxu0 0
    %433 = vmatprep.mubr.bf16.mxu0 0
    %434 = vmatmul.mubr.bf16.gmra.mrb[0].mxu0 %v396
    %v435 = vpop.f32.mrb[0].mxu0
    %v436 = vadd.f32 %v106, %v435
    %v437 = vpop.f32.mrb[0].mxu0
    %v438 = vpop.f32.mrb[0].mxu0
    %v439 = vadd.f32 %v107, %v438
    %v440 = vpop.f32.mrb[0].mxu0
    %441 = vdwg.mxu0
    %v442 = vsel %vm321, %v436, -inf
    %443 = vmax.xlane.f32.xlu0 %v442
    %v444 = vpop.xlane.xlu0 %443
    %v445 = vsel %vm321, %v439, -inf
    %446 = vmax.xlane.f32.xlu0 %v445
    %v447 = vpop.xlane.xlu0 %446
    %v448 = vsub.f32 %v436, %v444
    %v449 = vsub.f32 %v439, %v447
    %v450 = vmul.f32 %v448, 1.442695
    %v451 = vpow.pop %v450
    %v452 = vmul.f32 %v449, 1.442695
    %v453 = vpow.pop %v452
    %v454 = vsel %vm321, %v451, 0.0
    %455 = vadd.xlane.f32.xlu0 %v454
    %v456 = vpop.xlane.xlu0 %455
    %v457 = vsel %vm321, %v453, 0.0
    %458 = vadd.xlane.f32.xlu0 %v457
    %v459 = vpop.xlane.xlu0 %458
    %v460 = vrcp.pop %v456
    %v461 = vrcp.pop %v459
    %v462 = vmul.f32 %v451, %v460
    %v463 = vmul.f32 %v453, %v461
    %v464 = vpack.c.bf16 %v463, %v462
    %466 = vrot.lane.b32.xlu0 %v345, 96
    %v467 = vpop.permute.xlu0 %466
    %v470 = vsel %vm321, %v464, 0
    %472 = vmatprep.subr.bf16.mxu0 0
    %473 = vmatpush1.bf16.msra.mxu0 %v467
    %474 = vmatprep.subr.bf16.mxu0 0
    %475 = vmatpush1.bf16.msra.mxu0 0
    %476 = vmatprep.subr.bf16.mxu0 0
    %477 = vmatpush1.bf16.msra.mxu0 0
    %478 = vmatprep.subr.bf16.mxu0 0
    %479 = vmatpush1.bf16.msra.mxu0 0
    %480 = vmatprep.subr.bf16.mxu0 0
    %481 = vmatpush1.bf16.msra.mxu0 0
    %482 = vmatprep.subr.bf16.mxu0 0
    %483 = vmatpush1.bf16.msra.mxu0 0
    %484 = vmatprep.subr.bf16.mxu0 0
    %485 = vmatpush1.bf16.msra.mxu0 0
    %486 = vmatprep.subr.bf16.mxu0 0
    %487 = vmatpush1.bf16.msra.mxu0 0
    %488 = vmatprep.subr.bf16.mxu0 0
    %489 = vmatpush1.bf16.msra.mxu0 0
    %490 = vmatprep.subr.bf16.mxu0 0
    %491 = vmatpush1.bf16.msra.mxu0 0
    %492 = vmatprep.subr.bf16.mxu0 0
    %493 = vmatpush1.bf16.msra.mxu0 0
    %494 = vmatprep.subr.bf16.mxu0 0
    %495 = vmatpush1.bf16.msra.mxu0 0
    %496 = vmatprep.subr.bf16.mxu0 0
    %497 = vmatpush1.bf16.msra.mxu0 0
    %498 = vmatprep.subr.bf16.mxu0 0
    %499 = vmatpush1.bf16.msra.mxu0 0
    %500 = vmatprep.subr.bf16.mxu0 0
    %501 = vmatpush1.bf16.msra.mxu0 0
    %502 = vmatprep.subr.bf16.mxu0 0
    %503 = vmatpush1.bf16.msra.mxu0 0
    %504 = vmatprep.mubr.bf16.mxu0 0
    %505 = vmatmul.mubr.bf16.gmra.mrb[0].mxu0 %v470
    %v506 = vpop.f32.mrb[0].mxu0
    %v507 = vadd.f32 0.0, %v506
    %v508 = vpop.f32.mrb[0].mxu0
    %v509 = vpop.f32.mrb[0].mxu0
    %v510 = vadd.f32 0.0, %v509
    %v511 = vpop.f32.mrb[0].mxu0
    %512 = vdwg.mxu0
    %v513 = vpack.c.bf16 %v510, %v507
    %v518 = vunpack.c.l.b16 %v265
    %v519 = vunpack.c.l.b16 %v266
    %v520 = vunpack.c.l.b16 %v267
    %v521 = vunpack.c.l.b16 %v268
    %v522 = vpack.c.b16 %v519, %v518
    %v523 = vpack.c.b16 %v521, %v520
    %v527 = vsel %vm273, %v513, 0
    %529 = vmatprep.subr.bf16.mxu0 0
    %530 = vmatpush1.bf16.msra.mxu0 %v522
    %531 = vmatprep.subr.bf16.mxu0 0
    %532 = vmatpush1.bf16.msra.mxu0 %v523
    %533 = vmatprep.subr.bf16.mxu0 0
    %534 = vmatpush1.bf16.msra.mxu0 0
    %535 = vmatprep.subr.bf16.mxu0 0
    %536 = vmatpush1.bf16.msra.mxu0 0
    %537 = vmatprep.subr.bf16.mxu0 0
    %538 = vmatpush1.bf16.msra.mxu0 0
    %539 = vmatprep.subr.bf16.mxu0 0
    %540 = vmatpush1.bf16.msra.mxu0 0
    %541 = vmatprep.subr.bf16.mxu0 0
    %542 = vmatpush1.bf16.msra.mxu0 0
    %543 = vmatprep.subr.bf16.mxu0 0
    %544 = vmatpush1.bf16.msra.mxu0 0
    %545 = vmatprep.subr.bf16.mxu0 0
    %546 = vmatpush1.bf16.msra.mxu0 0
    %547 = vmatprep.subr.bf16.mxu0 0
    %548 = vmatpush1.bf16.msra.mxu0 0
    %549 = vmatprep.subr.bf16.mxu0 0
    %550 = vmatpush1.bf16.msra.mxu0 0
    %551 = vmatprep.subr.bf16.mxu0 0
    %552 = vmatpush1.bf16.msra.mxu0 0
    %553 = vmatprep.subr.bf16.mxu0 0
    %554 = vmatpush1.bf16.msra.mxu0 0
    %555 = vmatprep.subr.bf16.mxu0 0
    %556 = vmatpush1.bf16.msra.mxu0 0
    %557 = vmatprep.subr.bf16.mxu0 0
    %558 = vmatpush1.bf16.msra.mxu0 0
    %559 = vmatprep.subr.bf16.mxu0 0
    %560 = vmatpush1.bf16.msra.mxu0 0
    %561 = vmatprep.mubr.bf16.mxu0 0
    %562 = vmatmul.mubr.bf16.gmra.mrb[0].mxu0 %v527
    %v563 = vpop.f32.mrb[0].mxu0
    %v564 = vadd.f32 0.0, %v563
    %v565 = vpop.f32.mrb[0].mxu0
    %v566 = vpop.f32.mrb[0].mxu0
    %v567 = vadd.f32 0.0, %v566
    %v568 = vpop.f32.mrb[0].mxu0
    %569 = vdwg.mxu0
    %v574 = vunpack.c.l.b16 %v261
    %v575 = vunpack.c.l.b16 %v262
    %v576 = vunpack.c.l.b16 %v263
    %v577 = vunpack.c.l.b16 %v264
    %v578 = vpack.c.b16 %v575, %v574
    %v579 = vpack.c.b16 %v577, %v576
    %v583 = vsel %vm273, %v390, 0
    %585 = vmatprep.subr.bf16.mxu0 0
    %586 = vmatpush1.bf16.msra.mxu0 %v578
    %587 = vmatprep.subr.bf16.mxu0 0
    %588 = vmatpush1.bf16.msra.mxu0 %v579
    %589 = vmatprep.subr.bf16.mxu0 0
    %590 = vmatpush1.bf16.msra.mxu0 0
    %591 = vmatprep.subr.bf16.mxu0 0
    %592 = vmatpush1.bf16.msra.mxu0 0
    %593 = vmatprep.subr.bf16.mxu0 0
    %594 = vmatpush1.bf16.msra.mxu0 0
    %595 = vmatprep.subr.bf16.mxu0 0
    %596 = vmatpush1.bf16.msra.mxu0 0
    %597 = vmatprep.subr.bf16.mxu0 0
    %598 = vmatpush1.bf16.msra.mxu0 0
    %599 = vmatprep.subr.bf16.mxu0 0
    %600 = vmatpush1.bf16.msra.mxu0 0
    %601 = vmatprep.subr.bf16.mxu0 0
    %602 = vmatpush1.bf16.msra.mxu0 0
    %603 = vmatprep.subr.bf16.mxu0 0
    %604 = vmatpush1.bf16.msra.mxu0 0
    %605 = vmatprep.subr.bf16.mxu0 0
    %606 = vmatpush1.bf16.msra.mxu0 0
    %607 = vmatprep.subr.bf16.mxu0 0
    %608 = vmatpush1.bf16.msra.mxu0 0
    %609 = vmatprep.subr.bf16.mxu0 0
    %610 = vmatpush1.bf16.msra.mxu0 0
    %611 = vmatprep.subr.bf16.mxu0 0
    %612 = vmatpush1.bf16.msra.mxu0 0
    %613 = vmatprep.subr.bf16.mxu0 0
    %614 = vmatpush1.bf16.msra.mxu0 0
    %615 = vmatprep.subr.bf16.mxu0 0
    %616 = vmatpush1.bf16.msra.mxu0 0
    %617 = vmatprep.mubr.bf16.mxu0 0
    %618 = vmatmul.mubr.bf16.gmra.mrb[0].mxu0 %v583
    %v619 = vpop.f32.mrb[0].mxu0
    %v620 = vadd.f32 %v564, %v619
    %v621 = vpop.f32.mrb[0].mxu0
    %v622 = vpop.f32.mrb[0].mxu0
    %v623 = vadd.f32 %v567, %v622
    %v624 = vpop.f32.mrb[0].mxu0
    %625 = vdwg.mxu0
    %v626 = vadd.f32 %v58, %v620
    %v627 = vadd.f32 %v59, %v623
    %v628 = vld [vmem:[%s7] sm:$0x1]
    %v630 = vlaneseq
    %v631 = vshrl.u32 %v630, 7
    %v632 = vsub.s32 0, %v631
    %v633 = vrot.slane %v628, %v632
    %v635 = vadd.f32 %v626, %v633
    %v636 = vadd.f32 %v627, %v633
    %v637 = vld [vmem:[%s8] sm:$0x1]
    %v638 = vld [vmem:[%s9] sm:$0x1]
    %v639 = vsel %vm110, %v635, 0.0
    %640 = vadd.xlane.f32.xlu0 %v639
    %v641 = vpop.xlane.xlu0 %640
    %v642 = vsel %vm110, %v636, 0.0
    %643 = vadd.xlane.f32.xlu0 %v642
    %v644 = vpop.xlane.xlu0 %643
    %v645 = vmul.f32 %v641, %v117
    %v646 = vmul.f32 %v644, %v117
    %v647 = vsub.f32 %v635, %v645
    %v648 = vsub.f32 %v636, %v646
    %v649 = vmul.f32 %v647, %v647
    %v650 = vmul.f32 %v648, %v648
    %v651 = vsel %vm110, %v649, 0.0
    %652 = vadd.xlane.f32.xlu0 %v651
    %v653 = vpop.xlane.xlu0 %652
    %v654 = vsel %vm110, %v650, 0.0
    %655 = vadd.xlane.f32.xlu0 %v654
    %v656 = vpop.xlane.xlu0 %655
    %v657 = vmul.f32 %v653, %v117
    %v658 = vmul.f32 %v656, %v117
    %v659 = vadd.f32 %v657, 1e-05
    %v660 = vadd.f32 %v658, 1e-05
    %v661 = vrsqrt.pop %v659
    %v662 = vrsqrt.pop %v660
    %v663 = vmul.f32 %v647, %v661
    %v664 = vmul.f32 %v648, %v662
    %v666 = vlaneseq
    %v667 = vshrl.u32 %v666, 7
    %v668 = vsub.s32 0, %v667
    %v669 = vrot.slane %v637, %v668
    %v671 = vmul.f32 %v663, %v669
    %v672 = vmul.f32 %v664, %v669
    %v674 = vlaneseq
    %v675 = vshrl.u32 %v674, 7
    %v676 = vsub.s32 0, %v675
    %v677 = vrot.slane %v638, %v676
    %v679 = vadd.f32 %v671, %v677
    %v680 = vadd.f32 %v672, %v677
    %v681 = vld [vmem:[%s10] sm:$0xff]
    %v682 = vld [vmem:[%s10 + $0x8] sm:$0xff]
    %v683 = vld [vmem:[%s10 + $0x10] sm:$0xff]
    %v684 = vld [vmem:[%s10 + $0x18] sm:$0xff]
    %v685 = vld [vmem:[%s10 + $0x20] sm:$0xff]
    %v686 = vld [vmem:[%s10 + $0x28] sm:$0xff]
    %v687 = vld [vmem:[%s10 + $0x30] sm:$0xff]
    %v688 = vld [vmem:[%s10 + $0x38] sm:$0xff]
    %v689 = vpack.c.bf16 %v680, %v679
    %v690 = vld [vmem:[%s11] sm:$0x3]
    %v692 = vlaneseq
    %v693 = vshrl.u32 %v692, 7
    %v694 = vsub.s32 0, %v693
    %v695 = vrot.slane %v690, %v694
    %v696 = vlaneseq
    %v697 = vshrl.u32 %v696, 7
    %v698 = vsub.s32 1, %v697
    %v699 = vrot.slane %v690, %v698
    %v710 = vunpack.c.l.b16 %v681
    %v711 = vunpack.c.h.b16 %v681
    %v712 = vunpack.c.l.b16 %v682
    %v713 = vunpack.c.h.b16 %v682
    %v714 = vunpack.c.l.b16 %v683
    %v715 = vunpack.c.h.b16 %v683
    %v716 = vunpack.c.l.b16 %v684
    %v717 = vunpack.c.h.b16 %v684
    %v718 = vunpack.c.l.b16 %v685
    %v719 = vunpack.c.h.b16 %v685
    %v720 = vunpack.c.l.b16 %v686
    %v721 = vunpack.c.h.b16 %v686
    %v722 = vunpack.c.l.b16 %v687
    %v723 = vunpack.c.h.b16 %v687
    %v724 = vunpack.c.l.b16 %v688
    %v725 = vunpack.c.h.b16 %v688
    %v726 = vpack.c.b16 %v712, %v710
    %v727 = vpack.c.b16 %v713, %v711
    %v728 = vpack.c.b16 %v716, %v714
    %v729 = vpack.c.b16 %v717, %v715
    %v730 = vpack.c.b16 %v720, %v718
    %v731 = vpack.c.b16 %v721, %v719
    %v732 = vpack.c.b16 %v724, %v722
    %v733 = vpack.c.b16 %v725, %v723
    %v743 = vsel %vm110, %v689, 0
    %745 = vmatprep.subr.bf16.mxu0 %v727
    %746 = vmatpush1.bf16.msra.mxu0 %v726
    %747 = vmatprep.subr.bf16.mxu0 %v729
    %748 = vmatpush1.bf16.msra.mxu0 %v728
    %749 = vmatprep.subr.bf16.mxu0 %v731
    %750 = vmatpush1.bf16.msra.mxu0 %v730
    %751 = vmatprep.subr.bf16.mxu0 %v733
    %752 = vmatpush1.bf16.msra.mxu0 %v732
    %753 = vmatprep.subr.bf16.mxu0 0
    %754 = vmatpush1.bf16.msra.mxu0 0
    %755 = vmatprep.subr.bf16.mxu0 0
    %756 = vmatpush1.bf16.msra.mxu0 0
    %757 = vmatprep.subr.bf16.mxu0 0
    %758 = vmatpush1.bf16.msra.mxu0 0
    %759 = vmatprep.subr.bf16.mxu0 0
    %760 = vmatpush1.bf16.msra.mxu0 0
    %761 = vmatprep.subr.bf16.mxu0 0
    %762 = vmatpush1.bf16.msra.mxu0 0
    %763 = vmatprep.subr.bf16.mxu0 0
    %764 = vmatpush1.bf16.msra.mxu0 0
    %765 = vmatprep.subr.bf16.mxu0 0
    %766 = vmatpush1.bf16.msra.mxu0 0
    %767 = vmatprep.subr.bf16.mxu0 0
    %768 = vmatpush1.bf16.msra.mxu0 0
    %769 = vmatprep.subr.bf16.mxu0 0
    %770 = vmatpush1.bf16.msra.mxu0 0
    %771 = vmatprep.subr.bf16.mxu0 0
    %772 = vmatpush1.bf16.msra.mxu0 0
    %773 = vmatprep.subr.bf16.mxu0 0
    %774 = vmatpush1.bf16.msra.mxu0 0
    %775 = vmatprep.subr.bf16.mxu0 0
    %776 = vmatpush1.bf16.msra.mxu0 0
    %777 = vmatprep.mubr.bf16.mxu0 0
    %778 = vmatmul.mubr.bf16.gmra.mrb[0].mxu0 %v743
    %v779 = vpop.f32.mrb[0].mxu0
    %v780 = vadd.f32 %v695, %v779
    %v781 = vpop.f32.mrb[0].mxu0
    %v782 = vadd.f32 %v699, %v781
    %v783 = vpop.f32.mrb[0].mxu0
    %v784 = vadd.f32 %v695, %v783
    %v785 = vpop.f32.mrb[0].mxu0
    %v786 = vadd.f32 %v699, %v785
    %787 = vdwg.mxu0
    %v788 = vmul.f32 %v780, 1.702
    %v789 = vmul.f32 %v782, 1.702
    %v790 = vmul.f32 %v784, 1.702
    %v791 = vmul.f32 %v786, 1.702
    %v792 = vxor.u32 %v788, 2147483648
    %v793 = vxor.u32 %v789, 2147483648
    %v794 = vxor.u32 %v790, 2147483648
    %v795 = vxor.u32 %v791, 2147483648
    %v796 = vmul.f32 %v792, 1.442695
    %v797 = vpow.pop %v796
    %v798 = vmul.f32 %v793, 1.442695
    %v799 = vpow.pop %v798
    %v800 = vmul.f32 %v794, 1.442695
    %v801 = vpow.pop %v800
    %v802 = vmul.f32 %v795, 1.442695
    %v803 = vpow.pop %v802
    %v804 = vadd.f32 %v797, 1.0
    %v805 = vadd.f32 %v799, 1.0
    %v806 = vadd.f32 %v801, 1.0
    %v807 = vadd.f32 %v803, 1.0
    %v808 = vrcp.pop %v804
    %v809 = vmul.f32 1.0, %v808
    %v810 = vrcp.pop %v805
    %v811 = vmul.f32 1.0, %v810
    %v812 = vrcp.pop %v806
    %v813 = vmul.f32 1.0, %v812
    %v814 = vrcp.pop %v807
    %v815 = vmul.f32 1.0, %v814
    %v816 = vmul.f32 %v780, %v809
    %v817 = vmul.f32 %v782, %v811
    %v818 = vmul.f32 %v784, %v813
    %v819 = vmul.f32 %v786, %v815
    %v820 = vld [vmem:[%s12] sm:$0xf]
    %v821 = vld [vmem:[%s12 + $0x4] sm:$0xf]
    %v822 = vld [vmem:[%s12 + $0x8] sm:$0xf]
    %v823 = vld [vmem:[%s12 + $0xc] sm:$0xf]
    %v824 = vld [vmem:[%s12 + $0x10] sm:$0xf]
    %v825 = vld [vmem:[%s12 + $0x14] sm:$0xf]
    %v826 = vld [vmem:[%s12 + $0x18] sm:$0xf]
    %v827 = vld [vmem:[%s12 + $0x1c] sm:$0xf]
    %v828 = vld [vmem:[%s12 + $0x20] sm:$0xf]
    %v829 = vld [vmem:[%s12 + $0x24] sm:$0xf]
    %v830 = vld [vmem:[%s12 + $0x28] sm:$0xf]
    %v831 = vld [vmem:[%s12 + $0x2c] sm:$0xf]
    %v832 = vld [vmem:[%s12 + $0x30] sm:$0xf]
    %v833 = vld [vmem:[%s12 + $0x34] sm:$0xf]
    %v834 = vld [vmem:[%s12 + $0x38] sm:$0xf]
    %v835 = vld [vmem:[%s12 + $0x3c] sm:$0xf]
    %v836 = vld [vmem:[%s12 + $0x40] sm:$0xf]
    %v837 = vld [vmem:[%s12 + $0x44] sm:$0xf]
    %v838 = vld [vmem:[%s12 + $0x48] sm:$0xf]
    %v839 = vld [vmem:[%s12 + $0x4c] sm:$0xf]
    %v840 = vld [vmem:[%s12 + $0x50] sm:$0xf]
    %v841 = vld [vmem:[%s12 + $0x54] sm:$0xf]
    %v842 = vld [vmem:[%s12 + $0x58] sm:$0xf]
    %v843 = vld [vmem:[%s12 + $0x5c] sm:$0xf]
    %v844 = vld [vmem:[%s12 + $0x60] sm:$0xf]
    %v845 = vld [vmem:[%s12 + $0x64] sm:$0xf]
    %v846 = vld [vmem:[%s12 + $0x68] sm:$0xf]
    %v847 = vld [vmem:[%s12 + $0x6c] sm:$0xf]
    %v848 = vld [vmem:[%s12 + $0x70] sm:$0xf]
    %v849 = vld [vmem:[%s12 + $0x74] sm:$0xf]
    %v850 = vld [vmem:[%s12 + $0x78] sm:$0xf]
    %v851 = vld [vmem:[%s12 + $0x7c] sm:$0xf]
    %v852 = vpack.c.bf16 %v818, %v816
    %v853 = vpack.c.bf16 %v819, %v817
    %v886 = vunpack.c.l.b16 %v820
    %v887 = vunpack.c.l.b16 %v821
    %v888 = vunpack.c.l.b16 %v822
    %v889 = vunpack.c.l.b16 %v823
    %v890 = vunpack.c.l.b16 %v824
    %v891 = vunpack.c.l.b16 %v825
    %v892 = vunpack.c.l.b16 %v826
    %v893 = vunpack.c.l.b16 %v827
    %v894 = vunpack.c.l.b16 %v828
    %v895 = vunpack.c.l.b16 %v829
    %v896 = vunpack.c.l.b16 %v830
    %v897 = vunpack.c.l.b16 %v831
    %v898 = vunpack.c.l.b16 %v832
    %v899 = vunpack.c.l.b16 %v833
    %v900 = vunpack.c.l.b16 %v834
    %v901 = vunpack.c.l.b16 %v835
    %v902 = vunpack.c.l.b16 %v836
    %v903 = vunpack.c.l.b16 %v837
    %v904 = vunpack.c.l.b16 %v838
    %v905 = vunpack.c.l.b16 %v839
    %v906 = vunpack.c.l.b16 %v840
    %v907 = vunpack.c.l.b16 %v841
    %v908 = vunpack.c.l.b16 %v842
    %v909 = vunpack.c.l.b16 %v843
    %v910 = vunpack.c.l.b16 %v844
    %v911 = vunpack.c.l.b16 %v845
    %v912 = vunpack.c.l.b16 %v846
    %v913 = vunpack.c.l.b16 %v847
    %v914 = vunpack.c.l.b16 %v848
    %v915 = vunpack.c.l.b16 %v849
    %v916 = vunpack.c.l.b16 %v850
    %v917 = vunpack.c.l.b16 %v851
    %v918 = vpack.c.b16 %v887, %v886
    %v919 = vpack.c.b16 %v889, %v888
    %v920 = vpack.c.b16 %v891, %v890
    %v921 = vpack.c.b16 %v893, %v892
    %v922 = vpack.c.b16 %v895, %v894
    %v923 = vpack.c.b16 %v897, %v896
    %v924 = vpack.c.b16 %v899, %v898
    %v925 = vpack.c.b16 %v901, %v900
    %v926 = vpack.c.b16 %v903, %v902
    %v927 = vpack.c.b16 %v905, %v904
    %v928 = vpack.c.b16 %v907, %v906
    %v929 = vpack.c.b16 %v909, %v908
    %v930 = vpack.c.b16 %v911, %v910
    %v931 = vpack.c.b16 %v913, %v912
    %v932 = vpack.c.b16 %v915, %v914
    %v933 = vpack.c.b16 %v917, %v916
    %950 = vmatprep.subr.bf16.mxu0 0
    %951 = vmatpush1.bf16.msra.mxu0 %v918
    %952 = vmatprep.subr.bf16.mxu0 0
    %953 = vmatpush1.bf16.msra.mxu0 %v919
    %954 = vmatprep.subr.bf16.mxu0 0
    %955 = vmatpush1.bf16.msra.mxu0 %v920
    %956 = vmatprep.subr.bf16.mxu0 0
    %957 = vmatpush1.bf16.msra.mxu0 %v921
    %958 = vmatprep.subr.bf16.mxu0 0
    %959 = vmatpush1.bf16.msra.mxu0 %v922
    %960 = vmatprep.subr.bf16.mxu0 0
    %961 = vmatpush1.bf16.msra.mxu0 %v923
    %962 = vmatprep.subr.bf16.mxu0 0
    %963 = vmatpush1.bf16.msra.mxu0 %v924
    %964 = vmatprep.subr.bf16.mxu0 0
    %965 = vmatpush1.bf16.msra.mxu0 %v925
    %966 = vmatprep.subr.bf16.mxu0 0
    %967 = vmatpush1.bf16.msra.mxu0 %v926
    %968 = vmatprep.subr.bf16.mxu0 0
    %969 = vmatpush1.bf16.msra.mxu0 %v927
    %970 = vmatprep.subr.bf16.mxu0 0
    %971 = vmatpush1.bf16.msra.mxu0 %v928
    %972 = vmatprep.subr.bf16.mxu0 0
    %973 = vmatpush1.bf16.msra.mxu0 %v929
    %974 = vmatprep.subr.bf16.mxu0 0
    %975 = vmatpush1.bf16.msra.mxu0 %v930
    %976 = vmatprep.subr.bf16.mxu0 0
    %977 = vmatpush1.bf16.msra.mxu0 %v931
    %978 = vmatprep.subr.bf16.mxu0 0
    %979 = vmatpush1.bf16.msra.mxu0 %v932
    %980 = vmatprep.subr.bf16.mxu0 0
    %981 = vmatpush1.bf16.msra.mxu0 %v933
    %982 = vmatprep.mubr.bf16.mxu0 %v853
    %983 = vmatmul.mubr.bf16.gmra.mrb[0].mxu0 %v852
    %v984 = vpop.f32.mrb[0].mxu0
    %v985 = vadd.f32 0.0, %v984
    %v986 = vpop.f32.mrb[0].mxu0
    %v987 = vpop.f32.mrb[0].mxu0
    %v988 = vadd.f32 0.0, %v987
    %v989 = vpop.f32.mrb[0].mxu0
    %990 = vdwg.mxu0
    %v991 = vadd.f32 %v635, %v985
    %v992 = vadd.f32 %v636, %v988
    %v993 = vld [vmem:[%s13] sm:$0x1]
    %v995 = vlaneseq
    %v996 = vshrl.u32 %v995, 7
    %v997 = vsub.s32 0, %v996
    %v998 = vrot.slane %v993, %v997
    %v1000 = vadd.f32 %v991, %v998
    %v1001 = vadd.f32 %v992, %v998
    %s1002 = scalar_lea.vmem %s2, 1
    %v1003 = vld [vmem:[%s1002] sm:$0x1]
    %s1004 = scalar_lea.vmem %s3, 1
    %v1005 = vld [vmem:[%s1004] sm:$0x1]
    %v1006 = vsel %vm110, %v1000, 0.0
    %1007 = vadd.xlane.f32.xlu0 %v1006
    %v1008 = vpop.xlane.xlu0 %1007
    %v1009 = vsel %vm110, %v1001, 0.0
    %1010 = vadd.xlane.f32.xlu0 %v1009
    %v1011 = vpop.xlane.xlu0 %1010
    %v1012 = vmul.f32 %v1008, %v117
    %v1013 = vmul.f32 %v1011, %v117
    %v1014 = vsub.f32 %v1000, %v1012
    %v1015 = vsub.f32 %v1001, %v1013
    %v1016 = vmul.f32 %v1014, %v1014
    %v1017 = vmul.f32 %v1015, %v1015
    %v1018 = vsel %vm110, %v1016, 0.0
    %1019 = vadd.xlane.f32.xlu0 %v1018
    %v1020 = vpop.xlane.xlu0 %1019
    %v1021 = vsel %vm110, %v1017, 0.0
    %1022 = vadd.xlane.f32.xlu0 %v1021
    %v1023 = vpop.xlane.xlu0 %1022
    %v1024 = vmul.f32 %v1020, %v117
    %v1025 = vmul.f32 %v1023, %v117
    %v1026 = vadd.f32 %v1024, 1e-05
    %v1027 = vadd.f32 %v1025, 1e-05
    %v1028 = vrsqrt.pop %v1026
    %v1029 = vrsqrt.pop %v1027
    %v1030 = vmul.f32 %v1014, %v1028
    %v1031 = vmul.f32 %v1015, %v1029
    %v1033 = vlaneseq
    %v1034 = vshrl.u32 %v1033, 7
    %v1035 = vsub.s32 0, %v1034
    %v1036 = vrot.slane %v1003, %v1035
    %v1038 = vmul.f32 %v1030, %v1036
    %v1039 = vmul.f32 %v1031, %v1036
    %v1041 = vlaneseq
    %v1042 = vshrl.u32 %v1041, 7
    %v1043 = vsub.s32 0, %v1042
    %v1044 = vrot.slane %v1005, %v1043
    %v1046 = vadd.f32 %v1038, %v1044
    %v1047 = vadd.f32 %v1039, %v1044
    %s1048 = scalar_lea.vmem %s4, 64
    %v1049 = vld [vmem:[%s1048] sm:$0xff]
    %v1050 = vld [vmem:[%s1048 + $0x8] sm:$0xff]
    %v1051 = vld [vmem:[%s1048 + $0x10] sm:$0xff]
    %v1052 = vld [vmem:[%s1048 + $0x18] sm:$0xff]
    %v1053 = vld [vmem:[%s1048 + $0x20] sm:$0xff]
    %v1054 = vld [vmem:[%s1048 + $0x28] sm:$0xff]
    %v1055 = vld [vmem:[%s1048 + $0x30] sm:$0xff]
    %v1056 = vld [vmem:[%s1048 + $0x38] sm:$0xff]
    %v1057 = vpack.c.bf16 %v1047, %v1046
    %s1058 = scalar_lea.vmem %s5, 2
    %v1059 = vld [vmem:[%s1058] sm:$0x3]
    %v1061 = vlaneseq
    %v1062 = vshrl.u32 %v1061, 7
    %v1063 = vsub.s32 0, %v1062
    %v1064 = vrot.slane %v1059, %v1063
    %v1065 = vlaneseq
    %v1066 = vshrl.u32 %v1065, 7
    %v1067 = vsub.s32 1, %v1066
    %v1068 = vrot.slane %v1059, %v1067
    %v1079 = vunpack.c.l.b16 %v1049
    %v1080 = vunpack.c.h.b16 %v1049
    %v1081 = vunpack.c.l.b16 %v1050
    %v1082 = vunpack.c.h.b16 %v1050
    %v1083 = vunpack.c.l.b16 %v1051
    %v1084 = vunpack.c.h.b16 %v1051
    %v1085 = vunpack.c.l.b16 %v1052
    %v1086 = vunpack.c.h.b16 %v1052
    %v1087 = vunpack.c.l.b16 %v1053
    %v1088 = vunpack.c.h.b16 %v1053
    %v1089 = vunpack.c.l.b16 %v1054
    %v1090 = vunpack.c.h.b16 %v1054
    %v1091 = vunpack.c.l.b16 %v1055
    %v1092 = vunpack.c.h.b16 %v1055
    %v1093 = vunpack.c.l.b16 %v1056
    %v1094 = vunpack.c.h.b16 %v1056
    %v1095 = vpack.c.b16 %v1081, %v1079
    %v1096 = vpack.c.b16 %v1082, %v1080
    %v1097 = vpack.c.b16 %v1085, %v1083
    %v1098 = vpack.c.b16 %v1086, %v1084
    %v1099 = vpack.c.b16 %v1089, %v1087
    %v1100 = vpack.c.b16 %v1090, %v1088
    %v1101 = vpack.c.b16 %v1093, %v1091
    %v1102 = vpack.c.b16 %v1094, %v1092
    %v1112 = vsel %vm110, %v1057, 0
    %1114 = vmatprep.subr.bf16.mxu0 %v1096
    %1115 = vmatpush1.bf16.msra.mxu0 %v1095
    %1116 = vmatprep.subr.bf16.mxu0 %v1098
    %1117 = vmatpush1.bf16.msra.mxu0 %v1097
    %1118 = vmatprep.subr.bf16.mxu0 %v1100
    %1119 = vmatpush1.bf16.msra.mxu0 %v1099
    %1120 = vmatprep.subr.bf16.mxu0 %v1102
    %1121 = vmatpush1.bf16.msra.mxu0 %v1101
    %1122 = vmatprep.subr.bf16.mxu0 0
    %1123 = vmatpush1.bf16.msra.mxu0 0
    %1124 = vmatprep.subr.bf16.mxu0 0
    %1125 = vmatpush1.bf16.msra.mxu0 0
    %1126 = vmatprep.subr.bf16.mxu0 0
    %1127 = vmatpush1.bf16.msra.mxu0 0
    %1128 = vmatprep.subr.bf16.mxu0 0
    %1129 = vmatpush1.bf16.msra.mxu0 0
    %1130 = vmatprep.subr.bf16.mxu0 0
    %1131 = vmatpush1.bf16.msra.mxu0 0
    %1132 = vmatprep.subr.bf16.mxu0 0
    %1133 = vmatpush1.bf16.msra.mxu0 0
    %1134 = vmatprep.subr.bf16.mxu0 0
    %1135 = vmatpush1.bf16.msra.mxu0 0
    %1136 = vmatprep.subr.bf16.mxu0 0
    %1137 = vmatpush1.bf16.msra.mxu0 0
    %1138 = vmatprep.subr.bf16.mxu0 0
    %1139 = vmatpush1.bf16.msra.mxu0 0
    %1140 = vmatprep.subr.bf16.mxu0 0
    %1141 = vmatpush1.bf16.msra.mxu0 0
    %1142 = vmatprep.subr.bf16.mxu0 0
    %1143 = vmatpush1.bf16.msra.mxu0 0
    %1144 = vmatprep.subr.bf16.mxu0 0
    %1145 = vmatpush1.bf16.msra.mxu0 0
    %1146 = vmatprep.mubr.bf16.mxu0 0
    %1147 = vmatmul.mubr.bf16.gmra.mrb[0].mxu0 %v1112
    %v1148 = vpop.f32.mrb[0].mxu0
    %v1149 = vadd.f32 %v1064, %v1148
    %v1150 = vpop.f32.mrb[0].mxu0
    %v1151 = vadd.f32 %v1068, %v1150
    %v1152 = vpop.f32.mrb[0].mxu0
    %v1153 = vadd.f32 %v1064, %v1152
    %v1154 = vpop.f32.mrb[0].mxu0
    %v1155 = vadd.f32 %v1068, %v1154
    %1156 = vdwg.mxu0
    %s1157 = scalar_lea.vmem %s6, 32
    %v1158 = vld [vmem:[%s1157] sm:$0xf]
    %v1159 = vld [vmem:[%s1157 + $0x4] sm:$0xf]
    %v1160 = vld [vmem:[%s1157 + $0x8] sm:$0xf]
    %v1161 = vld [vmem:[%s1157 + $0xc] sm:$0xf]
    %v1162 = vld [vmem:[%s1157 + $0x10] sm:$0xf]
    %v1163 = vld [vmem:[%s1157 + $0x14] sm:$0xf]
    %v1164 = vld [vmem:[%s1157 + $0x18] sm:$0xf]
    %v1165 = vld [vmem:[%s1157 + $0x1c] sm:$0xf]
    %v1166 = vpack.c.bf16 %v1153, %v1149
    %1168 = vrot.lane.b32.xlu0 %v1166, 64
    %v1169 = vpop.permute.xlu0 %1168
    %v1171 = vsel %vm273, %v1166, 0
    %v1174 = vsel %vm273, %v1169, 0
    %1176 = vmatprep.subr.bf16.mxu0 0
    %1177 = vmatpush1.bf16.xpose.msra.mxu0 %v1174
    %1178 = vmatprep.subr.bf16.mxu0 0
    %1179 = vmatpush1.bf16.xpose.msra.mxu0 0
    %1180 = vmatprep.subr.bf16.mxu0 0
    %1181 = vmatpush1.bf16.xpose.msra.mxu0 0
    %1182 = vmatprep.subr.bf16.mxu0 0
    %1183 = vmatpush1.bf16.xpose.msra.mxu0 0
    %1184 = vmatprep.subr.bf16.mxu0 0
    %1185 = vmatpush1.bf16.xpose.msra.mxu0 0
    %1186 = vmatprep.subr.bf16.mxu0 0
    %1187 = vmatpush1.bf16.xpose.msra.mxu0 0
    %1188 = vmatprep.subr.bf16.mxu0 0
    %1189 = vmatpush1.bf16.xpose.msra.mxu0 0
    %1190 = vmatprep.subr.bf16.mxu0 0
    %1191 = vmatpush1.bf16.xpose.msra.mxu0 0
    %1192 = vmatprep.subr.bf16.mxu0 0
    %1193 = vmatpush1.bf16.xpose.msra.mxu0 0
    %1194 = vmatprep.subr.bf16.mxu0 0
    %1195 = vmatpush1.bf16.xpose.msra.mxu0 0
    %1196 = vmatprep.subr.bf16.mxu0 0
    %1197 = vmatpush1.bf16.xpose.msra.mxu0 0
    %1198 = vmatprep.subr.bf16.mxu0 0
    %1199 = vmatpush1.bf16.xpose.msra.mxu0 0
    %1200 = vmatprep.subr.bf16.mxu0 0
    %1201 = vmatpush1.bf16.xpose.msra.mxu0 0
    %1202 = vmatprep.subr.bf16.mxu0 0
    %1203 = vmatpush1.bf16.xpose.msra.mxu0 0
    %1204 = vmatprep.subr.bf16.mxu0 0
    %1205 = vmatpush1.bf16.xpose.msra.mxu0 0
    %1206 = vmatprep.subr.bf16.mxu0 0
    %1207 = vmatpush1.bf16.xpose.msra.mxu0 0
    %1208 = vmatprep.mubr.bf16.mxu0 0
    %1209 = vmatmul.mubr.bf16.gmra.mrb[0].mxu0 %v1171
    %v1210 = vpop.f32.mrb[0].mxu0
    %v1211 = vadd.f32 %v106, %v1210
    %v1212 = vpop.f32.mrb[0].mxu0
    %v1213 = vpop.f32.mrb[0].mxu0
    %v1214 = vadd.f32 %v107, %v1213
    %v1215 = vpop.f32.mrb[0].mxu0
    %1216 = vdwg.mxu0
    %v1217 = vsel %vm321, %v1211, -inf
    %1218 = vmax.xlane.f32.xlu0 %v1217
    %v1219 = vpop.xlane.xlu0 %1218
    %v1220 = vsel %vm321, %v1214, -inf
    %1221 = vmax.xlane.f32.xlu0 %v1220
    %v1222 = vpop.xlane.xlu0 %1221
    %v1223 = vsub.f32 %v1211, %v1219
    %v1224 = vsub.f32 %v1214, %v1222
    %v1225 = vmul.f32 %v1223, 1.442695
    %v1226 = vpow.pop %v1225
    %v1227 = vmul.f32 %v1224, 1.442695
    %v1228 = vpow.pop %v1227
    %v1229 = vsel %vm321, %v1226, 0.0
    %1230 = vadd.xlane.f32.xlu0 %v1229
    %v1231 = vpop.xlane.xlu0 %1230
    %v1232 = vsel %vm321, %v1228, 0.0
    %1233 = vadd.xlane.f32.xlu0 %v1232
    %v1234 = vpop.xlane.xlu0 %1233
    %v1235 = vrcp.pop %v1231
    %v1236 = vrcp.pop %v1234
    %v1237 = vmul.f32 %v1226, %v1235
    %v1238 = vmul.f32 %v1228, %v1236
    %v1239 = vpack.c.bf16 %v1238, %v1237
    %v1240 = vpack.c.bf16 %v1155, %v1151
    %v1242 = vsel %vm321, %v1239, 0
    %1244 = vmatprep.subr.bf16.mxu0 0
    %1245 = vmatpush1.bf16.msra.mxu0 %v1240
    %1246 = vmatprep.subr.bf16.mxu0 0
    %1247 = vmatpush1.bf16.msra.mxu0 0
    %1248 = vmatprep.subr.bf16.mxu0 0
    %1249 = vmatpush1.bf16.msra.mxu0 0
    %1250 = vmatprep.subr.bf16.mxu0 0
    %1251 = vmatpush1.bf16.msra.mxu0 0
    %1252 = vmatprep.subr.bf16.mxu0 0
    %1253 = vmatpush1.bf16.msra.mxu0 0
    %1254 = vmatprep.subr.bf16.mxu0 0
    %1255 = vmatpush1.bf16.msra.mxu0 0
    %1256 = vmatprep.subr.bf16.mxu0 0
    %1257 = vmatpush1.bf16.msra.mxu0 0
    %1258 = vmatprep.subr.bf16.mxu0 0
    %1259 = vmatpush1.bf16.msra.mxu0 0
    %1260 = vmatprep.subr.bf16.mxu0 0
    %1261 = vmatpush1.bf16.msra.mxu0 0
    %1262 = vmatprep.subr.bf16.mxu0 0
    %1263 = vmatpush1.bf16.msra.mxu0 0
    %1264 = vmatprep.subr.bf16.mxu0 0
    %1265 = vmatpush1.bf16.msra.mxu0 0
    %1266 = vmatprep.subr.bf16.mxu0 0
    %1267 = vmatpush1.bf16.msra.mxu0 0
    %1268 = vmatprep.subr.bf16.mxu0 0
    %1269 = vmatpush1.bf16.msra.mxu0 0
    %1270 = vmatprep.subr.bf16.mxu0 0
    %1271 = vmatpush1.bf16.msra.mxu0 0
    %1272 = vmatprep.subr.bf16.mxu0 0
    %1273 = vmatpush1.bf16.msra.mxu0 0
    %1274 = vmatprep.subr.bf16.mxu0 0
    %1275 = vmatpush1.bf16.msra.mxu0 0
    %1276 = vmatprep.mubr.bf16.mxu0 0
    %1277 = vmatmul.mubr.bf16.gmra.mrb[0].mxu0 %v1242
    %v1278 = vpop.f32.mrb[0].mxu0
    %v1279 = vadd.f32 0.0, %v1278
    %v1280 = vpop.f32.mrb[0].mxu0
    %v1281 = vpop.f32.mrb[0].mxu0
    %v1282 = vadd.f32 0.0, %v1281
    %v1283 = vpop.f32.mrb[0].mxu0
    %1284 = vdwg.mxu0
    %v1285 = vpack.c.bf16 %v1282, %v1279
    %1286 = vrot.lane.b32.xlu0 %v1166, 96
    %v1287 = vpop.permute.xlu0 %1286
    %1288 = vrot.lane.b32.xlu0 %v1166, 32
    %v1289 = vpop.permute.xlu0 %1288
    %v1291 = vsel %vm273, %v1287, 0
    %v1294 = vsel %vm273, %v1289, 0
    %1296 = vmatprep.subr.bf16.mxu0 0
    %1297 = vmatpush1.bf16.xpose.msra.mxu0 %v1294
    %1298 = vmatprep.subr.bf16.mxu0 0
    %1299 = vmatpush1.bf16.xpose.msra.mxu0 0
    %1300 = vmatprep.subr.bf16.mxu0 0
    %1301 = vmatpush1.bf16.xpose.msra.mxu0 0
    %1302 = vmatprep.subr.bf16.mxu0 0
    %1303 = vmatpush1.bf16.xpose.msra.mxu0 0
    %1304 = vmatprep.subr.bf16.mxu0 0
    %1305 = vmatpush1.bf16.xpose.msra.mxu0 0
    %1306 = vmatprep.subr.bf16.mxu0 0
    %1307 = vmatpush1.bf16.xpose.msra.mxu0 0
    %1308 = vmatprep.subr.bf16.mxu0 0
    %1309 = vmatpush1.bf16.xpose.msra.mxu0 0
    %1310 = vmatprep.subr.bf16.mxu0 0
    %1311 = vmatpush1.bf16.xpose.msra.mxu0 0
    %1312 = vmatprep.subr.bf16.mxu0 0
    %1313 = vmatpush1.bf16.xpose.msra.mxu0 0
    %1314 = vmatprep.subr.bf16.mxu0 0
    %1315 = vmatpush1.bf16.xpose.msra.mxu0 0
    %1316 = vmatprep.subr.bf16.mxu0 0
    %1317 = vmatpush1.bf16.xpose.msra.mxu0 0
    %1318 = vmatprep.subr.bf16.mxu0 0
    %1319 = vmatpush1.bf16.xpose.msra.mxu0 0
    %1320 = vmatprep.subr.bf16.mxu0 0
    %1321 = vmatpush1.bf16.xpose.msra.mxu0 0
    %1322 = vmatprep.subr.bf16.mxu0 0
    %1323 = vmatpush1.bf16.xpose.msra.mxu0 0
    %1324 = vmatprep.subr.bf16.mxu0 0
    %1325 = vmatpush1.bf16.xpose.msra.mxu0 0
    %1326 = vmatprep.subr.bf16.mxu0 0
    %1327 = vmatpush1.bf16.xpose.msra.mxu0 0
    %1328 = vmatprep.mubr.bf16.mxu0 0
    %1329 = vmatmul.mubr.bf16.gmra.mrb[0].mxu0 %v1291
    %v1330 = vpop.f32.mrb[0].mxu0
    %v1331 = vadd.f32 %v106, %v1330
    %v1332 = vpop.f32.mrb[0].mxu0
    %v1333 = vpop.f32.mrb[0].mxu0
    %v1334 = vadd.f32 %v107, %v1333
    %v1335 = vpop.f32.mrb[0].mxu0
    %1336 = vdwg.mxu0
    %v1337 = vsel %vm321, %v1331, -inf
    %1338 = vmax.xlane.f32.xlu0 %v1337
    %v1339 = vpop.xlane.xlu0 %1338
    %v1340 = vsel %vm321, %v1334, -inf
    %1341 = vmax.xlane.f32.xlu0 %v1340
    %v1342 = vpop.xlane.xlu0 %1341
    %v1343 = vsub.f32 %v1331, %v1339
    %v1344 = vsub.f32 %v1334, %v1342
    %v1345 = vmul.f32 %v1343, 1.442695
    %v1346 = vpow.pop %v1345
    %v1347 = vmul.f32 %v1344, 1.442695
    %v1348 = vpow.pop %v1347
    %v1349 = vsel %vm321, %v1346, 0.0
    %1350 = vadd.xlane.f32.xlu0 %v1349
    %v1351 = vpop.xlane.xlu0 %1350
    %v1352 = vsel %vm321, %v1348, 0.0
    %1353 = vadd.xlane.f32.xlu0 %v1352
    %v1354 = vpop.xlane.xlu0 %1353
    %v1355 = vrcp.pop %v1351
    %v1356 = vrcp.pop %v1354
    %v1357 = vmul.f32 %v1346, %v1355
    %v1358 = vmul.f32 %v1348, %v1356
    %v1359 = vpack.c.bf16 %v1358, %v1357
    %1361 = vrot.lane.b32.xlu0 %v1240, 96
    %v1362 = vpop.permute.xlu0 %1361
    %v1365 = vsel %vm321, %v1359, 0
    %1367 = vmatprep.subr.bf16.mxu0 0
    %1368 = vmatpush1.bf16.msra.mxu0 %v1362
    %1369 = vmatprep.subr.bf16.mxu0 0
    %1370 = vmatpush1.bf16.msra.mxu0 0
    %1371 = vmatprep.subr.bf16.mxu0 0
    %1372 = vmatpush1.bf16.msra.mxu0 0
    %1373 = vmatprep.subr.bf16.mxu0 0
    %1374 = vmatpush1.bf16.msra.mxu0 0
    %1375 = vmatprep.subr.bf16.mxu0 0
    %1376 = vmatpush1.bf16.msra.mxu0 0
    %1377 = vmatprep.subr.bf16.mxu0 0
    %1378 = vmatpush1.bf16.msra.mxu0 0
    %1379 = vmatprep.subr.bf16.mxu0 0
    %1380 = vmatpush1.bf16.msra.mxu0 0
    %1381 = vmatprep.subr.bf16.mxu0 0
    %1382 = vmatpush1.bf16.msra.mxu0 0
    %1383 = vmatprep.subr.bf16.mxu0 0
    %1384 = vmatpush1.bf16.msra.mxu0 0
    %1385 = vmatprep.subr.bf16.mxu0 0
    %1386 = vmatpush1.bf16.msra.mxu0 0
    %1387 = vmatprep.subr.bf16.mxu0 0
    %1388 = vmatpush1.bf16.msra.mxu0 0
    %1389 = vmatprep.subr.bf16.mxu0 0
    %1390 = vmatpush1.bf16.msra.mxu0 0
    %1391 = vmatprep.subr.bf16.mxu0 0
    %1392 = vmatpush1.bf16.msra.mxu0 0
    %1393 = vmatprep.subr.bf16.mxu0 0
    %1394 = vmatpush1.bf16.msra.mxu0 0
    %1395 = vmatprep.subr.bf16.mxu0 0
    %1396 = vmatpush1.bf16.msra.mxu0 0
    %1397 = vmatprep.subr.bf16.mxu0 0
    %1398 = vmatpush1.bf16.msra.mxu0 0
    %1399 = vmatprep.mubr.bf16.mxu0 0
    %1400 = vmatmul.mubr.bf16.gmra.mrb[0].mxu0 %v1365
    %v1401 = vpop.f32.mrb[0].mxu0
    %v1402 = vadd.f32 0.0, %v1401
    %v1403 = vpop.f32.mrb[0].mxu0
    %v1404 = vpop.f32.mrb[0].mxu0
    %v1405 = vadd.f32 0.0, %v1404
    %v1406 = vpop.f32.mrb[0].mxu0
    %1407 = vdwg.mxu0
    %v1408 = vpack.c.bf16 %v1405, %v1402
    %v1413 = vunpack.c.l.b16 %v1162
    %v1414 = vunpack.c.l.b16 %v1163
    %v1415 = vunpack.c.l.b16 %v1164
    %v1416 = vunpack.c.l.b16 %v1165
    %v1417 = vpack.c.b16 %v1414, %v1413
    %v1418 = vpack.c.b16 %v1416, %v1415
    %v1422 = vsel %vm273, %v1408, 0
    %1424 = vmatprep.subr.bf16.mxu0 0
    %1425 = vmatpush1.bf16.msra.mxu0 %v1417
    %1426 = vmatprep.subr.bf16.mxu0 0
    %1427 = vmatpush1.bf16.msra.mxu0 %v1418
    %1428 = vmatprep.subr.bf16.mxu0 0
    %1429 = vmatpush1.bf16.msra.mxu0 0
    %1430 = vmatprep.subr.bf16.mxu0 0
    %1431 = vmatpush1.bf16.msra.mxu0 0
    %1432 = vmatprep.subr.bf16.mxu0 0
    %1433 = vmatpush1.bf16.msra.mxu0 0
    %1434 = vmatprep.subr.bf16.mxu0 0
    %1435 = vmatpush1.bf16.msra.mxu0 0
    %1436 = vmatprep.subr.bf16.mxu0 0
    %1437 = vmatpush1.bf16.msra.mxu0 0
    %1438 = vmatprep.subr.bf16.mxu0 0
    %1439 = vmatpush1.bf16.msra.mxu0 0
    %1440 = vmatprep.subr.bf16.mxu0 0
    %1441 = vmatpush1.bf16.msra.mxu0 0
    %1442 = vmatprep.subr.bf16.mxu0 0
    %1443 = vmatpush1.bf16.msra.mxu0 0
    %1444 = vmatprep.subr.bf16.mxu0 0
    %1445 = vmatpush1.bf16.msra.mxu0 0
    %1446 = vmatprep.subr.bf16.mxu0 0
    %1447 = vmatpush1.bf16.msra.mxu0 0
    %1448 = vmatprep.subr.bf16.mxu0 0
    %1449 = vmatpush1.bf16.msra.mxu0 0
    %1450 = vmatprep.subr.bf16.mxu0 0
    %1451 = vmatpush1.bf16.msra.mxu0 0
    %1452 = vmatprep.subr.bf16.mxu0 0
    %1453 = vmatpush1.bf16.msra.mxu0 0
    %1454 = vmatprep.subr.bf16.mxu0 0
    %1455 = vmatpush1.bf16.msra.mxu0 0
    %1456 = vmatprep.mubr.bf16.mxu0 0
    %1457 = vmatmul.mubr.bf16.gmra.mrb[0].mxu0 %v1422
    %v1458 = vpop.f32.mrb[0].mxu0
    %v1459 = vadd.f32 0.0, %v1458
    %v1460 = vpop.f32.mrb[0].mxu0
    %v1461 = vpop.f32.mrb[0].mxu0
    %v1462 = vadd.f32 0.0, %v1461
    %v1463 = vpop.f32.mrb[0].mxu0
    %1464 = vdwg.mxu0
    %v1469 = vunpack.c.l.b16 %v1158
    %v1470 = vunpack.c.l.b16 %v1159
    %v1471 = vunpack.c.l.b16 %v1160
    %v1472 = vunpack.c.l.b16 %v1161
    %v1473 = vpack.c.b16 %v1470, %v1469
    %v1474 = vpack.c.b16 %v1472, %v1471
    %v1478 = vsel %vm273, %v1285, 0
    %1480 = vmatprep.subr.bf16.mxu0 0
    %1481 = vmatpush1.bf16.msra.mxu0 %v1473
    %1482 = vmatprep.subr.bf16.mxu0 0
    %1483 = vmatpush1.bf16.msra.mxu0 %v1474
    %1484 = vmatprep.subr.bf16.mxu0 0
    %1485 = vmatpush1.bf16.msra.mxu0 0
    %1486 = vmatprep.subr.bf16.mxu0 0
    %1487 = vmatpush1.bf16.msra.mxu0 0
    %1488 = vmatprep.subr.bf16.mxu0 0
    %1489 = vmatpush1.bf16.msra.mxu0 0
    %1490 = vmatprep.subr.bf16.mxu0 0
    %1491 = vmatpush1.bf16.msra.mxu0 0
    %1492 = vmatprep.subr.bf16.mxu0 0
    %1493 = vmatpush1.bf16.msra.mxu0 0
    %1494 = vmatprep.subr.bf16.mxu0 0
    %1495 = vmatpush1.bf16.msra.mxu0 0
    %1496 = vmatprep.subr.bf16.mxu0 0
    %1497 = vmatpush1.bf16.msra.mxu0 0
    %1498 = vmatprep.subr.bf16.mxu0 0
    %1499 = vmatpush1.bf16.msra.mxu0 0
    %1500 = vmatprep.subr.bf16.mxu0 0
    %1501 = vmatpush1.bf16.msra.mxu0 0
    %1502 = vmatprep.subr.bf16.mxu0 0
    %1503 = vmatpush1.bf16.msra.mxu0 0
    %1504 = vmatprep.subr.bf16.mxu0 0
    %1505 = vmatpush1.bf16.msra.mxu0 0
    %1506 = vmatprep.subr.bf16.mxu0 0
    %1507 = vmatpush1.bf16.msra.mxu0 0
    %1508 = vmatprep.subr.bf16.mxu0 0
    %1509 = vmatpush1.bf16.msra.mxu0 0
    %1510 = vmatprep.subr.bf16.mxu0 0
    %1511 = vmatpush1.bf16.msra.mxu0 0
    %1512 = vmatprep.mubr.bf16.mxu0 0
    %1513 = vmatmul.mubr.bf16.gmra.mrb[0].mxu0 %v1478
    %v1514 = vpop.f32.mrb[0].mxu0
    %v1515 = vadd.f32 %v1459, %v1514
    %v1516 = vpop.f32.mrb[0].mxu0
    %v1517 = vpop.f32.mrb[0].mxu0
    %v1518 = vadd.f32 %v1462, %v1517
    %v1519 = vpop.f32.mrb[0].mxu0
    %1520 = vdwg.mxu0
    %v1521 = vadd.f32 %v1000, %v1515
    %v1522 = vadd.f32 %v1001, %v1518
    %s1523 = scalar_lea.vmem %s7, 1
    %v1524 = vld [vmem:[%s1523] sm:$0x1]
    %v1526 = vlaneseq
    %v1527 = vshrl.u32 %v1526, 7
    %v1528 = vsub.s32 0, %v1527
    %v1529 = vrot.slane %v1524, %v1528
    %v1531 = vadd.f32 %v1521, %v1529
    %v1532 = vadd.f32 %v1522, %v1529
    %s1533 = scalar_lea.vmem %s8, 1
    %v1534 = vld [vmem:[%s1533] sm:$0x1]
    %s1535 = scalar_lea.vmem %s9, 1
    %v1536 = vld [vmem:[%s1535] sm:$0x1]
    %v1537 = vsel %vm110, %v1531, 0.0
    %1538 = vadd.xlane.f32.xlu0 %v1537
    %v1539 = vpop.xlane.xlu0 %1538
    %v1540 = vsel %vm110, %v1532, 0.0
    %1541 = vadd.xlane.f32.xlu0 %v1540
    %v1542 = vpop.xlane.xlu0 %1541
    %v1543 = vmul.f32 %v1539, %v117
    %v1544 = vmul.f32 %v1542, %v117
    %v1545 = vsub.f32 %v1531, %v1543
    %v1546 = vsub.f32 %v1532, %v1544
    %v1547 = vmul.f32 %v1545, %v1545
    %v1548 = vmul.f32 %v1546, %v1546
    %v1549 = vsel %vm110, %v1547, 0.0
    %1550 = vadd.xlane.f32.xlu0 %v1549
    %v1551 = vpop.xlane.xlu0 %1550
    %v1552 = vsel %vm110, %v1548, 0.0
    %1553 = vadd.xlane.f32.xlu0 %v1552
    %v1554 = vpop.xlane.xlu0 %1553
    %v1555 = vmul.f32 %v1551, %v117
    %v1556 = vmul.f32 %v1554, %v117
    %v1557 = vadd.f32 %v1555, 1e-05
    %v1558 = vadd.f32 %v1556, 1e-05
    %v1559 = vrsqrt.pop %v1557
    %v1560 = vrsqrt.pop %v1558
    %v1561 = vmul.f32 %v1545, %v1559
    %v1562 = vmul.f32 %v1546, %v1560
    %v1564 = vlaneseq
    %v1565 = vshrl.u32 %v1564, 7
    %v1566 = vsub.s32 0, %v1565
    %v1567 = vrot.slane %v1534, %v1566
    %v1569 = vmul.f32 %v1561, %v1567
    %v1570 = vmul.f32 %v1562, %v1567
    %v1572 = vlaneseq
    %v1573 = vshrl.u32 %v1572, 7
    %v1574 = vsub.s32 0, %v1573
    %v1575 = vrot.slane %v1536, %v1574
    %v1577 = vadd.f32 %v1569, %v1575
    %v1578 = vadd.f32 %v1570, %v1575
    %s1579 = scalar_lea.vmem %s10, 64
    %v1580 = vld [vmem:[%s1579] sm:$0xff]
    %v1581 = vld [vmem:[%s1579 + $0x8] sm:$0xff]
    %v1582 = vld [vmem:[%s1579 + $0x10] sm:$0xff]
    %v1583 = vld [vmem:[%s1579 + $0x18] sm:$0xff]
    %v1584 = vld [vmem:[%s1579 + $0x20] sm:$0xff]
    %v1585 = vld [vmem:[%s1579 + $0x28] sm:$0xff]
    %v1586 = vld [vmem:[%s1579 + $0x30] sm:$0xff]
    %v1587 = vld [vmem:[%s1579 + $0x38] sm:$0xff]
    %v1588 = vpack.c.bf16 %v1578, %v1577
    %s1589 = scalar_lea.vmem %s11, 2
    %v1590 = vld [vmem:[%s1589] sm:$0x3]
    %v1592 = vlaneseq
    %v1593 = vshrl.u32 %v1592, 7
    %v1594 = vsub.s32 0, %v1593
    %v1595 = vrot.slane %v1590, %v1594
    %v1596 = vlaneseq
    %v1597 = vshrl.u32 %v1596, 7
    %v1598 = vsub.s32 1, %v1597
    %v1599 = vrot.slane %v1590, %v1598
    %v1610 = vunpack.c.l.b16 %v1580
    %v1611 = vunpack.c.h.b16 %v1580
    %v1612 = vunpack.c.l.b16 %v1581
    %v1613 = vunpack.c.h.b16 %v1581
    %v1614 = vunpack.c.l.b16 %v1582
    %v1615 = vunpack.c.h.b16 %v1582
    %v1616 = vunpack.c.l.b16 %v1583
    %v1617 = vunpack.c.h.b16 %v1583
    %v1618 = vunpack.c.l.b16 %v1584
    %v1619 = vunpack.c.h.b16 %v1584
    %v1620 = vunpack.c.l.b16 %v1585
    %v1621 = vunpack.c.h.b16 %v1585
    %v1622 = vunpack.c.l.b16 %v1586
    %v1623 = vunpack.c.h.b16 %v1586
    %v1624 = vunpack.c.l.b16 %v1587
    %v1625 = vunpack.c.h.b16 %v1587
    %v1626 = vpack.c.b16 %v1612, %v1610
    %v1627 = vpack.c.b16 %v1613, %v1611
    %v1628 = vpack.c.b16 %v1616, %v1614
    %v1629 = vpack.c.b16 %v1617, %v1615
    %v1630 = vpack.c.b16 %v1620, %v1618
    %v1631 = vpack.c.b16 %v1621, %v1619
    %v1632 = vpack.c.b16 %v1624, %v1622
    %v1633 = vpack.c.b16 %v1625, %v1623
    %v1643 = vsel %vm110, %v1588, 0
    %1645 = vmatprep.subr.bf16.mxu0 %v1627
    %1646 = vmatpush1.bf16.msra.mxu0 %v1626
    %1647 = vmatprep.subr.bf16.mxu0 %v1629
    %1648 = vmatpush1.bf16.msra.mxu0 %v1628
    %1649 = vmatprep.subr.bf16.mxu0 %v1631
    %1650 = vmatpush1.bf16.msra.mxu0 %v1630
    %1651 = vmatprep.subr.bf16.mxu0 %v1633
    %1652 = vmatpush1.bf16.msra.mxu0 %v1632
    %1653 = vmatprep.subr.bf16.mxu0 0
    %1654 = vmatpush1.bf16.msra.mxu0 0
    %1655 = vmatprep.subr.bf16.mxu0 0
    %1656 = vmatpush1.bf16.msra.mxu0 0
    %1657 = vmatprep.subr.bf16.mxu0 0
    %1658 = vmatpush1.bf16.msra.mxu0 0
    %1659 = vmatprep.subr.bf16.mxu0 0
    %1660 = vmatpush1.bf16.msra.mxu0 0
    %1661 = vmatprep.subr.bf16.mxu0 0
    %1662 = vmatpush1.bf16.msra.mxu0 0
    %1663 = vmatprep.subr.bf16.mxu0 0
    %1664 = vmatpush1.bf16.msra.mxu0 0
    %1665 = vmatprep.subr.bf16.mxu0 0
    %1666 = vmatpush1.bf16.msra.mxu0 0
    %1667 = vmatprep.subr.bf16.mxu0 0
    %1668 = vmatpush1.bf16.msra.mxu0 0
    %1669 = vmatprep.subr.bf16.mxu0 0
    %1670 = vmatpush1.bf16.msra.mxu0 0
    %1671 = vmatprep.subr.bf16.mxu0 0
    %1672 = vmatpush1.bf16.msra.mxu0 0
    %1673 = vmatprep.subr.bf16.mxu0 0
    %1674 = vmatpush1.bf16.msra.mxu0 0
    %1675 = vmatprep.subr.bf16.mxu0 0
    %1676 = vmatpush1.bf16.msra.mxu0 0
    %1677 = vmatprep.mubr.bf16.mxu0 0
    %1678 = vmatmul.mubr.bf16.gmra.mrb[0].mxu0 %v1643
    %v1679 = vpop.f32.mrb[0].mxu0
    %v1680 = vadd.f32 %v1595, %v1679
    %v1681 = vpop.f32.mrb[0].mxu0
    %v1682 = vadd.f32 %v1599, %v1681
    %v1683 = vpop.f32.mrb[0].mxu0
    %v1684 = vadd.f32 %v1595, %v1683
    %v1685 = vpop.f32.mrb[0].mxu0
    %v1686 = vadd.f32 %v1599, %v1685
    %1687 = vdwg.mxu0
    %v1688 = vmul.f32 %v1680, 1.702
    %v1689 = vmul.f32 %v1682, 1.702
    %v1690 = vmul.f32 %v1684, 1.702
    %v1691 = vmul.f32 %v1686, 1.702
    %v1692 = vxor.u32 %v1688, 2147483648
    %v1693 = vxor.u32 %v1689, 2147483648
    %v1694 = vxor.u32 %v1690, 2147483648
    %v1695 = vxor.u32 %v1691, 2147483648
    %v1696 = vmul.f32 %v1692, 1.442695
    %v1697 = vpow.pop %v1696
    %v1698 = vmul.f32 %v1693, 1.442695
    %v1699 = vpow.pop %v1698
    %v1700 = vmul.f32 %v1694, 1.442695
    %v1701 = vpow.pop %v1700
    %v1702 = vmul.f32 %v1695, 1.442695
    %v1703 = vpow.pop %v1702
    %v1704 = vadd.f32 %v1697, 1.0
    %v1705 = vadd.f32 %v1699, 1.0
    %v1706 = vadd.f32 %v1701, 1.0
    %v1707 = vadd.f32 %v1703, 1.0
    %v1708 = vrcp.pop %v1704
    %v1709 = vmul.f32 1.0, %v1708
    %v1710 = vrcp.pop %v1705
    %v1711 = vmul.f32 1.0, %v1710
    %v1712 = vrcp.pop %v1706
    %v1713 = vmul.f32 1.0, %v1712
    %v1714 = vrcp.pop %v1707
    %v1715 = vmul.f32 1.0, %v1714
    %v1716 = vmul.f32 %v1680, %v1709
    %v1717 = vmul.f32 %v1682, %v1711
    %v1718 = vmul.f32 %v1684, %v1713
    %v1719 = vmul.f32 %v1686, %v1715
    %s1720 = scalar_lea.vmem %s12, 128
    %v1721 = vld [vmem:[%s1720] sm:$0xf]
    %v1722 = vld [vmem:[%s1720 + $0x4] sm:$0xf]
    %v1723 = vld [vmem:[%s1720 + $0x8] sm:$0xf]
    %v1724 = vld [vmem:[%s1720 + $0xc] sm:$0xf]
    %v1725 = vld [vmem:[%s1720 + $0x10] sm:$0xf]
    %v1726 = vld [vmem:[%s1720 + $0x14] sm:$0xf]
    %v1727 = vld [vmem:[%s1720 + $0x18] sm:$0xf]
    %v1728 = vld [vmem:[%s1720 + $0x1c] sm:$0xf]
    %v1729 = vld [vmem:[%s1720 + $0x20] sm:$0xf]
    %v1730 = vld [vmem:[%s1720 + $0x24] sm:$0xf]
    %v1731 = vld [vmem:[%s1720 + $0x28] sm:$0xf]
    %v1732 = vld [vmem:[%s1720 + $0x2c] sm:$0xf]
    %v1733 = vld [vmem:[%s1720 + $0x30] sm:$0xf]
    %v1734 = vld [vmem:[%s1720 + $0x34] sm:$0xf]
    %v1735 = vld [vmem:[%s1720 + $0x38] sm:$0xf]
    %v1736 = vld [vmem:[%s1720 + $0x3c] sm:$0xf]
    %v1737 = vld [vmem:[%s1720 + $0x40] sm:$0xf]
    %v1738 = vld [vmem:[%s1720 + $0x44] sm:$0xf]
    %v1739 = vld [vmem:[%s1720 + $0x48] sm:$0xf]
    %v1740 = vld [vmem:[%s1720 + $0x4c] sm:$0xf]
    %v1741 = vld [vmem:[%s1720 + $0x50] sm:$0xf]
    %v1742 = vld [vmem:[%s1720 + $0x54] sm:$0xf]
    %v1743 = vld [vmem:[%s1720 + $0x58] sm:$0xf]
    %v1744 = vld [vmem:[%s1720 + $0x5c] sm:$0xf]
    %v1745 = vld [vmem:[%s1720 + $0x60] sm:$0xf]
    %v1746 = vld [vmem:[%s1720 + $0x64] sm:$0xf]
    %v1747 = vld [vmem:[%s1720 + $0x68] sm:$0xf]
    %v1748 = vld [vmem:[%s1720 + $0x6c] sm:$0xf]
    %v1749 = vld [vmem:[%s1720 + $0x70] sm:$0xf]
    %v1750 = vld [vmem:[%s1720 + $0x74] sm:$0xf]
    %v1751 = vld [vmem:[%s1720 + $0x78] sm:$0xf]
    %v1752 = vld [vmem:[%s1720 + $0x7c] sm:$0xf]
    %v1753 = vpack.c.bf16 %v1718, %v1716
    %v1754 = vpack.c.bf16 %v1719, %v1717
    %v1787 = vunpack.c.l.b16 %v1721
    %v1788 = vunpack.c.l.b16 %v1722
    %v1789 = vunpack.c.l.b16 %v1723
    %v1790 = vunpack.c.l.b16 %v1724
    %v1791 = vunpack.c.l.b16 %v1725
    %v1792 = vunpack.c.l.b16 %v1726
    %v1793 = vunpack.c.l.b16 %v1727
    %v1794 = vunpack.c.l.b16 %v1728
    %v1795 = vunpack.c.l.b16 %v1729
    %v1796 = vunpack.c.l.b16 %v1730
    %v1797 = vunpack.c.l.b16 %v1731
    %v1798 = vunpack.c.l.b16 %v1732
    %v1799 = vunpack.c.l.b16 %v1733
    %v1800 = vunpack.c.l.b16 %v1734
    %v1801 = vunpack.c.l.b16 %v1735
    %v1802 = vunpack.c.l.b16 %v1736
    %v1803 = vunpack.c.l.b16 %v1737
    %v1804 = vunpack.c.l.b16 %v1738
    %v1805 = vunpack.c.l.b16 %v1739
    %v1806 = vunpack.c.l.b16 %v1740
    %v1807 = vunpack.c.l.b16 %v1741
    %v1808 = vunpack.c.l.b16 %v1742
    %v1809 = vunpack.c.l.b16 %v1743
    %v1810 = vunpack.c.l.b16 %v1744
    %v1811 = vunpack.c.l.b16 %v1745
    %v1812 = vunpack.c.l.b16 %v1746
    %v1813 = vunpack.c.l.b16 %v1747
    %v1814 = vunpack.c.l.b16 %v1748
    %v1815 = vunpack.c.l.b16 %v1749
    %v1816 = vunpack.c.l.b16 %v1750
    %v1817 = vunpack.c.l.b16 %v1751
    %v1818 = vunpack.c.l.b16 %v1752
    %v1819 = vpack.c.b16 %v1788, %v1787
    %v1820 = vpack.c.b16 %v1790, %v1789
    %v1821 = vpack.c.b16 %v1792, %v1791
    %v1822 = vpack.c.b16 %v1794, %v1793
    %v1823 = vpack.c.b16 %v1796, %v1795
    %v1824 = vpack.c.b16 %v1798, %v1797
    %v1825 = vpack.c.b16 %v1800, %v1799
    %v1826 = vpack.c.b16 %v1802, %v1801
    %v1827 = vpack.c.b16 %v1804, %v1803
    %v1828 = vpack.c.b16 %v1806, %v1805
    %v1829 = vpack.c.b16 %v1808, %v1807
    %v1830 = vpack.c.b16 %v1810, %v1809
    %v1831 = vpack.c.b16 %v1812, %v1811
    %v1832 = vpack.c.b16 %v1814, %v1813
    %v1833 = vpack.c.b16 %v1816, %v1815
    %v1834 = vpack.c.b16 %v1818, %v1817
    %1851 = vmatprep.subr.bf16.mxu0 0
    %1852 = vmatpush1.bf16.msra.mxu0 %v1819
    %1853 = vmatprep.subr.bf16.mxu0 0
    %1854 = vmatpush1.bf16.msra.mxu0 %v1820
    %1855 = vmatprep.subr.bf16.mxu0 0
    %1856 = vmatpush1.bf16.msra.mxu0 %v1821
    %1857 = vmatprep.subr.bf16.mxu0 0
    %1858 = vmatpush1.bf16.msra.mxu0 %v1822
    %1859 = vmatprep.subr.bf16.mxu0 0
    %1860 = vmatpush1.bf16.msra.mxu0 %v1823
    %1861 = vmatprep.subr.bf16.mxu0 0
    %1862 = vmatpush1.bf16.msra.mxu0 %v1824
    %1863 = vmatprep.subr.bf16.mxu0 0
    %1864 = vmatpush1.bf16.msra.mxu0 %v1825
    %1865 = vmatprep.subr.bf16.mxu0 0
    %1866 = vmatpush1.bf16.msra.mxu0 %v1826
    %1867 = vmatprep.subr.bf16.mxu0 0
    %1868 = vmatpush1.bf16.msra.mxu0 %v1827
    %1869 = vmatprep.subr.bf16.mxu0 0
    %1870 = vmatpush1.bf16.msra.mxu0 %v1828
    %1871 = vmatprep.subr.bf16.mxu0 0
    %1872 = vmatpush1.bf16.msra.mxu0 %v1829
    %1873 = vmatprep.subr.bf16.mxu0 0
    %1874 = vmatpush1.bf16.msra.mxu0 %v1830
    %1875 = vmatprep.subr.bf16.mxu0 0
    %1876 = vmatpush1.bf16.msra.mxu0 %v1831
    %1877 = vmatprep.subr.bf16.mxu0 0
    %1878 = vmatpush1.bf16.msra.mxu0 %v1832
    %1879 = vmatprep.subr.bf16.mxu0 0
    %1880 = vmatpush1.bf16.msra.mxu0 %v1833
    %1881 = vmatprep.subr.bf16.mxu0 0
    %1882 = vmatpush1.bf16.msra.mxu0 %v1834
    %1883 = vmatprep.mubr.bf16.mxu0 %v1754
    %1884 = vmatmul.mubr.bf16.gmra.mrb[0].mxu0 %v1753
    %v1885 = vpop.f32.mrb[0].mxu0
    %v1886 = vadd.f32 0.0, %v1885
    %v1887 = vpop.f32.mrb[0].mxu0
    %v1888 = vpop.f32.mrb[0].mxu0
    %v1889 = vadd.f32 0.0, %v1888
    %v1890 = vpop.f32.mrb[0].mxu0
    %1891 = vdwg.mxu0
    %v1892 = vadd.f32 %v1531, %v1886
    %v1893 = vadd.f32 %v1532, %v1889
    %s1894 = scalar_lea.vmem %s13, 1
    %v1895 = vld [vmem:[%s1894] sm:$0x1]
    %v1897 = vlaneseq
    %v1898 = vshrl.u32 %v1897, 7
    %v1899 = vsub.s32 0, %v1898
    %v1900 = vrot.slane %v1895, %v1899
    %v1902 = vadd.f32 %v1892, %v1900
    %v1903 = vadd.f32 %v1893, %v1900
    %v1905 = vsel %vm321, %v60, 0
    %1907 = vmatprep.subr.mxu0 0.0
    %1908 = vmatpush1.msra.mxu0 %v1902
    %1909 = vmatprep.subr.mxu0 0.0
    %1910 = vmatpush1.msra.mxu0 %v1903
    %1911 = vmatprep.subr.mxu0 0.0
    %1912 = vmatpush1.msra.mxu0 0.0
    %1913 = vmatprep.subr.mxu0 0.0
    %1914 = vmatpush1.msra.mxu0 0.0
    %1915 = vmatprep.subr.mxu0 0.0
    %1916 = vmatpush1.msra.mxu0 0.0
    %1917 = vmatprep.subr.mxu0 0.0
    %1918 = vmatpush1.msra.mxu0 0.0
    %1919 = vmatprep.subr.mxu0 0.0
    %1920 = vmatpush1.msra.mxu0 0.0
    %1921 = vmatprep.subr.mxu0 0.0
    %1922 = vmatpush1.msra.mxu0 0.0
    %1923 = vmatprep.subr.mxu0 0.0
    %1924 = vmatpush1.msra.mxu0 0.0
    %1925 = vmatprep.subr.mxu0 0.0
    %1926 = vmatpush1.msra.mxu0 0.0
    %1927 = vmatprep.subr.mxu0 0.0
    %1928 = vmatpush1.msra.mxu0 0.0
    %1929 = vmatprep.subr.mxu0 0.0
    %1930 = vmatpush1.msra.mxu0 0.0
    %1931 = vmatprep.subr.mxu0 0.0
    %1932 = vmatpush1.msra.mxu0 0.0
    %1933 = vmatprep.subr.mxu0 0.0
    %1934 = vmatpush1.msra.mxu0 0.0
    %1935 = vmatprep.subr.mxu0 0.0
    %1936 = vmatpush1.msra.mxu0 0.0
    %1937 = vmatprep.subr.mxu0 0.0
    %1938 = vmatpush1.msra.mxu0 0.0
    %1939 = vmatprep.subr.mxu0 0.0
    %1940 = vmatpush1.msra.mxu0 0.0
    %1941 = vmatprep.subr.mxu0 0.0
    %1942 = vmatpush1.msra.mxu0 0.0
    %1943 = vmatprep.subr.mxu0 0.0
    %1944 = vmatpush1.msra.mxu0 0.0
    %1945 = vmatprep.subr.mxu0 0.0
    %1946 = vmatpush1.msra.mxu0 0.0
    %1947 = vmatprep.subr.mxu0 0.0
    %1948 = vmatpush1.msra.mxu0 0.0
    %1949 = vmatprep.subr.mxu0 0.0
    %1950 = vmatpush1.msra.mxu0 0.0
    %1951 = vmatprep.subr.mxu0 0.0
    %1952 = vmatpush1.msra.mxu0 0.0
    %1953 = vmatprep.subr.mxu0 0.0
    %1954 = vmatpush1.msra.mxu0 0.0
    %1955 = vmatprep.subr.mxu0 0.0
    %1956 = vmatpush1.msra.mxu0 0.0
    %1957 = vmatprep.subr.mxu0 0.0
    %1958 = vmatpush1.msra.mxu0 0.0
    %1959 = vmatprep.subr.mxu0 0.0
    %1960 = vmatpush1.msra.mxu0 0.0
    %1961 = vmatprep.subr.mxu0 0.0
    %1962 = vmatpush1.msra.mxu0 0.0
    %1963 = vmatprep.subr.mxu0 0.0
    %1964 = vmatpush1.msra.mxu0 0.0
    %1965 = vmatprep.subr.mxu0 0.0
    %1966 = vmatpush1.msra.mxu0 0.0
    %1967 = vmatprep.subr.mxu0 0.0
    %1968 = vmatpush1.msra.mxu0 0.0
    %1969 = vmatprep.subr.mxu0 0.0
    %1970 = vmatpush1.msra.mxu0 0.0
    %1971 = vmatprep.mubr.f32.mxu0 0.0
    %1972 = vmatmul.mubr.f32.gmra.mrb[0].mxu0 %v1905
    %v1973 = vpop.f32.mrb[0].mxu0
    %v1974 = vadd.f32 0.0, %v1973
    %v1975 = vpop.f32.mrb[0].mxu0
    %1976 = vdwg.mxu0
    %vm1977 = vcmask 517120
    %v1978 = vsel %vm1977, %v1974, 0.0
    %1979 = vadd.xlane.f32.xlu0 %v1978
    %v1980 = vpop.xlane.xlu0 %1979
    %v1981 = vmul.f32 %v1980, %v117
    %v1982 = vsub.f32 %v1974, %v1981
    %v1983 = vmul.f32 %v1982, %v1982
    %v1984 = vsel %vm1977, %v1983, 0.0
    %1985 = vadd.xlane.f32.xlu0 %v1984
    %v1986 = vpop.xlane.xlu0 %1985
    %v1987 = vmul.f32 %v1986, %v117
    %v1988 = vadd.f32 %v1987, 1e-05
    %v1989 = vrsqrt.pop %v1988
    %v1990 = vmul.f32 %v1982, %v1989
    %v1992 = vlaneseq
    %v1993 = vshrl.u32 %v1992, 7
    %v1994 = vsub.s32 0, %v1993
    %v1995 = vrot.slane %v61, %v1994
    %v1997 = vmul.f32 %v1990, %v1995
    %v1999 = vlaneseq
    %v2000 = vshrl.u32 %v1999, 7
    %v2001 = vsub.s32 0, %v2000
    %v2002 = vrot.slane %v62, %v2001
    %v2004 = vadd.f32 %v1997, %v2002
    %v2005 = vpack.c.bf16 %v2004, %v2004
    %v2014 = vunpack.c.l.b16 %v63
    %v2015 = vunpack.c.l.b16 %v64
    %v2016 = vunpack.c.l.b16 %v65
    %v2017 = vunpack.c.l.b16 %v66
    %v2018 = vunpack.c.l.b16 %v67
    %v2019 = vunpack.c.l.b16 %v68
    %v2020 = vunpack.c.l.b16 %v69
    %v2021 = vunpack.c.l.b16 %v70
    %v2022 = vpack.c.b16 %v2015, %v2014
    %v2023 = vpack.c.b16 %v2017, %v2016
    %v2024 = vpack.c.b16 %v2019, %v2018
    %v2025 = vpack.c.b16 %v2021, %v2020
    %v2031 = vsel %vm110, %v2005, 0
    %2033 = vmatprep.subr.bf16.mxu0 0
    %2034 = vmatpush1.bf16.msra.mxu0 %v2022
    %2035 = vmatprep.subr.bf16.mxu0 0
    %2036 = vmatpush1.bf16.msra.mxu0 %v2023
    %2037 = vmatprep.subr.bf16.mxu0 0
    %2038 = vmatpush1.bf16.msra.mxu0 %v2024
    %2039 = vmatprep.subr.bf16.mxu0 0
    %2040 = vmatpush1.bf16.msra.mxu0 %v2025
    %2041 = vmatprep.subr.bf16.mxu0 0
    %2042 = vmatpush1.bf16.msra.mxu0 0
    %2043 = vmatprep.subr.bf16.mxu0 0
    %2044 = vmatpush1.bf16.msra.mxu0 0
    %2045 = vmatprep.subr.bf16.mxu0 0
    %2046 = vmatpush1.bf16.msra.mxu0 0
    %2047 = vmatprep.subr.bf16.mxu0 0
    %2048 = vmatpush1.bf16.msra.mxu0 0
    %2049 = vmatprep.subr.bf16.mxu0 0
    %2050 = vmatpush1.bf16.msra.mxu0 0
    %2051 = vmatprep.subr.bf16.mxu0 0
    %2052 = vmatpush1.bf16.msra.mxu0 0
    %2053 = vmatprep.subr.bf16.mxu0 0
    %2054 = vmatpush1.bf16.msra.mxu0 0
    %2055 = vmatprep.subr.bf16.mxu0 0
    %2056 = vmatpush1.bf16.msra.mxu0 0
    %2057 = vmatprep.subr.bf16.mxu0 0
    %2058 = vmatpush1.bf16.msra.mxu0 0
    %2059 = vmatprep.subr.bf16.mxu0 0
    %2060 = vmatpush1.bf16.msra.mxu0 0
    %2061 = vmatprep.subr.bf16.mxu0 0
    %2062 = vmatpush1.bf16.msra.mxu0 0
    %2063 = vmatprep.subr.bf16.mxu0 0
    %2064 = vmatpush1.bf16.msra.mxu0 0
    %2065 = vmatprep.mubr.bf16.mxu0 0
    %2066 = vmatmul.mubr.bf16.gmra.mrb[0].mxu0 %v2031
    %v2067 = vpop.f32.mrb[0].mxu0
    %v2068 = vadd.f32 0.0, %v2067
    %v2069 = vpop.f32.mrb[0].mxu0
    %v2070 = vpop.f32.mrb[0].mxu0
    %v2071 = vpop.f32.mrb[0].mxu0
    %2072 = vdwg.mxu0
    %v2073 = vmul.f32 %v2068, %v2068
    %vm2074 = vcmask 254976
    %v2075 = vsel %vm2074, %v2073, 0.0
    %2076 = vadd.xlane.f32.xlu0 %v2075
    %v2077 = vpop.xlane.xlu0 %2076
    %v2078 = vadd.f32 %v2077, 1e-12
    %v2079 = vrsqrt.pop %v2078
    %v2080 = vmul.f32 %v2068, %v2079
    %2081 = vst.msk [vmem:[#allocation2] sm:$0x3] %vm2074, %v2080
    // Predicated region
    $region70: #{clip_extractor_forward.3} parent=1 // pred_check
      _
    $region71: #{clip_extractor_forward.3} parent=1 // pred_check_branch
      %2083 = sbr.rel (0) target = $region73
    $region72: #{clip_extractor_forward.3} parent=1 // pred_region
      %s2085 = ssub.s32 32, 32
      %2086 = vsyncadd [#allocation3], %s2085
      %s2088 = sshll.u32 [#allocation2], 4
      %s2089 = int_to_ptr.vmem [resolvable:$true] %s2088
      %2091 = dma.vmem_to_hbm [thread:$0]  %s2089, 32, %s17, [#allocation3]
    $region73: #{clip_extractor_forward.3} parent=1 // pred_fallthru
      _
    // Predicated region
    $region74: #{clip_extractor_forward.3} parent=1 // pred_check
      _
    $region75: #{clip_extractor_forward.3} parent=1 // pred_check_branch
      %2093 = sbr.rel (0) target = $region77
    $region76: #{clip_extractor_forward.3} parent=1 // pred_region
      %2094 = dma.done [#allocation3], 32
    $region77: #{clip_extractor_forward.3} parent=1 // pred_fallthru
      _
    %2095 = vsyncpa [#allocation3], 1

</llo_original>
